<compile_context>
chip_gen: v7x
topology: tpu7x:2x2x1
jax: 0.10.0
libtpu: 0.0.40
codegen_flags: <defaults>
</compile_context>

<pallas_src>
import math

import numpy as np
import jax
import jax.numpy as jnp
from jax.experimental import pallas as pl
from jax.experimental.pallas import tpu as pltpu


# ----------------------------------------------------------------------------
# Deterministic parameter construction (mirrors GaborFilter.__init__)
# ----------------------------------------------------------------------------
def create_gabor_filters(in_channels=3, out_channels=16, kernel_size=15,
                         num_scales=2):
    filters = np.zeros((out_channels, in_channels, kernel_size, kernel_size),
                       dtype=np.float32)
    filters_per_input = out_channels // in_channels
    orientations_per_scale = filters_per_input // num_scales
    center = kernel_size // 2
    yy, xx = np.meshgrid(np.arange(kernel_size) - center,
                         np.arange(kernel_size) - center, indexing="ij")
    sigmas = [3.0 + i * 2.0 for i in range(num_scales)]
    lambdas = [4.0 + i * 4.0 for i in range(num_scales)]
    gamma, psi = 0.5, 0.0
    for in_channel in range(in_channels):
        for scale_idx in range(num_scales):
            sigma = sigmas[scale_idx]
            lam = lambdas[scale_idx]
            for ori_idx in range(orientations_per_scale):
                theta = ori_idx * math.pi / orientations_per_scale
                x_theta = xx * math.cos(theta) + yy * math.sin(theta)
                y_theta = -xx * math.sin(theta) + yy * math.cos(theta)
                gb = (np.exp(-0.5 * (x_theta ** 2 + gamma ** 2 * y_theta ** 2)
                             / sigma ** 2)
                      * np.cos(2.0 * math.pi * x_theta / lam + psi))
                gb = gb / np.abs(gb).sum()
                oc = (in_channel * filters_per_input
                      + scale_idx * orientations_per_scale + ori_idx)
                if oc < out_channels:
                    filters[oc, in_channel] = gb.astype(np.float32)
    return jnp.asarray(filters)


# ----------------------------------------------------------------------------
# Host glue: bilinear resize (PyTorch align_corners=False semantics)
# ----------------------------------------------------------------------------
def bilinear_resize_nchw(x, out_h, out_w):
    B, C, H, W = x.shape
    scale_h = H / out_h
    scale_w = W / out_w
    ys = (jnp.arange(out_h, dtype=jnp.float32) + 0.5) * scale_h - 0.5
    xs = (jnp.arange(out_w, dtype=jnp.float32) + 0.5) * scale_w - 0.5
    ys = jnp.maximum(ys, 0.0)
    xs = jnp.maximum(xs, 0.0)
    y0 = jnp.clip(jnp.floor(ys).astype(jnp.int32), 0, H - 1)
    x0 = jnp.clip(jnp.floor(xs).astype(jnp.int32), 0, W - 1)
    y1 = jnp.minimum(y0 + 1, H - 1)
    x1 = jnp.minimum(x0 + 1, W - 1)
    wy = ys - y0.astype(jnp.float32)
    wx = xs - x0.astype(jnp.float32)
    top = (x[:, :, y0, :] * (1.0 - wy)[None, None, :, None]
           + x[:, :, y1, :] * wy[None, None, :, None])
    out = (top[:, :, :, x0] * (1.0 - wx)[None, None, None, :]
           + top[:, :, :, x1] * wx[None, None, None, :])
    return out


# ----------------------------------------------------------------------------
# Host-side operand construction (clipped window indicators + Gabor x W1 fold)
# ----------------------------------------------------------------------------
def _column_window(wd, k, qp):
    """(wd, qp) exact-0/1 indicator; column kh*k+kw is the clipped kw window."""
    pad = k // 2
    q = np.arange(wd)[:, None]
    kw = np.arange(k)[None, :]
    lo = np.maximum(0, kw - pad)
    hi = np.minimum(wd, kw + wd - pad)
    cwin = ((q >= lo) & (q < hi)).astype(np.float32)          # (wd, k)
    cw = np.zeros((wd, qp), np.float32)
    cw[:, :k * k] = np.tile(cwin, (1, k))                     # col kh*k+kw -> cwin[:, kw]
    return cw


def _row_window(h, h8, k, qp):
    """(h8, qp) 0/1 indicator; column kh*k+kw is the clipped kh row window."""
    pad = k // 2
    r = np.arange(h8)[:, None]
    kh = np.arange(k)[None, :]
    lo = np.maximum(0, kh - pad)
    hi = np.minimum(h, kh + h - pad)
    rwin = ((r >= lo) & (r < hi)).astype(np.float32)          # (h8, k); rows >= h are 0
    rm = np.zeros((h8, qp), np.float32)
    rm[:, :k * k] = np.repeat(rwin, k, axis=1)                # col kh*k+kw -> rwin[:, kh]
    return rm


def _fold_gabor_w1(gabor_np, w1_np, scale_idx, hw, qp, hidden_p):
    """A[c, kh*K+kw, n] = (1/(H*W)) * sum_o G[o,c,kh,kw] * W1_block_s[o, n]."""
    O, C, K, _ = gabor_np.shape
    hidden = w1_np.shape[1]
    g = gabor_np.astype(np.float64).reshape(O, C, K * K)
    w1s = w1_np.astype(np.float64)[scale_idx * O:(scale_idx + 1) * O, :]
    a = np.zeros((C, qp, hidden_p), np.float32)
    for c in range(C):
        a[c, :K * K, :hidden] = (g[:, c, :].T @ w1s) / float(hw)
    return a


def _pack_rows_bf16(x, h8):
    """(B, C, H, W) -> (B, C*h8, W) bf16, zero-padding H up to a multiple of 8."""
    B, C, H, W = x.shape
    if h8 != H:
        x = jnp.pad(x, ((0, 0), (0, 0), (0, h8 - H), (0, 0)))
    return x.reshape(B, C * h8, W).astype(jnp.bfloat16)


# ----------------------------------------------------------------------------
# Pallas kernel: TB samples per grid step.  Per scale: one lane-dense bf16 MXU
# matmul (column-window sums), row-window mask + sublane reduction, and one
# matmul per channel against the host-folded Gabor x W1 operand.  Then the
# second MLP layer, both ReLUs, lane-dense store.
# ----------------------------------------------------------------------------
def _msct_kernel(x1_ref, x2_ref, x3_ref,
                 cw1_ref, cw2_ref, cw3_ref,
                 rm1_ref, rm2_ref, rm3_ref,
                 a1_ref, a2_ref, a3_ref,
                 b1_ref, w2_ref, b2_ref,
                 o_ref):
    hidden_p = b1_ref.shape[-1]

    def scale_contrib(x_ref, cw_ref, rm_ref, a_ref):
        c_dim = a_ref.shape[0]
        tb, ch8, wd = x_ref.shape
        h8 = ch8 // c_dim
        qp = cw_ref.shape[-1]
        # One read of the image block; all K*K column-window sums per row via a
        # single lane-dense bf16 matmul, f32 accumulation.
        x2d = x_ref[...].reshape(tb * ch8, wd)
        t = jnp.dot(x2d, cw_ref[...], preferred_element_type=jnp.float32)
        t3 = t.reshape(tb, ch8, qp)
        rm = rm_ref[...]                                      # (h8, qp) f32
        acc = jnp.zeros((tb, hidden_p), jnp.float32)
        for c in range(c_dim):                                # C == 3, static
            blk = t3[:, c * h8:(c + 1) * h8, :]               # (tb, h8, qp)
            s_c = jnp.sum(blk * rm[None, :, :], axis=1)       # (tb, qp)
            acc = acc + jnp.dot(s_c, a_ref[c],
                                preferred_element_type=jnp.float32)
        return acc

    h = (scale_contrib(x1_ref, cw1_ref, rm1_ref, a1_ref)
         + scale_contrib(x2_ref, cw2_ref, rm2_ref, a2_ref)
         + scale_contrib(x3_ref, cw3_ref, rm3_ref, a3_ref)
         + b1_ref[...])
    h = jnp.maximum(h, 0.0)
    out = jnp.maximum(
        jnp.dot(h, w2_ref[...], preferred_element_type=jnp.float32)
        + b2_ref[...], 0.0)
    o_ref[0] = out


def multiscale_color_texture_gabor(x, gabor_w, w1, b1, w2, b2, *, tb=8,
                                   vmem_limit_bytes=48 * 1024 * 1024):
    """Forward pass of MultiScaleColorTextureGabor.

    w1: (3*gabor_channels, hidden), w2: (hidden, out_dim) stored (in, out);
    transpose PyTorch nn.Linear weights (stored (out, in)) before calling.
    """
    B, C, H, W = x.shape
    O, _, K, _ = gabor_w.shape
    qp = ((K * K + 127) // 128) * 128             # 225 -> 256, lane aligned
    hidden = w1.shape[1]
    out_dim = w2.shape[1]
    hidden_p = ((hidden + 127) // 128) * 128      # 64  -> 128
    out_p = ((out_dim + 127) // 128) * 128        # 32  -> 128

    tb = max(1, min(int(tb), B))
    n_blk = -(-B // tb)
    b_pad = n_blk * tb
    if b_pad != B:
        x = jnp.pad(x, ((0, b_pad - B), (0, 0), (0, 0), (0, 0)))

    # TODO(synk): bilinear resize (align_corners=False) stays in XLA.
    scales = [x,
              bilinear_resize_nchw(x, H // 2, W // 2),
              bilinear_resize_nchw(x, H // 4, W // 4)]

    gw_np = np.asarray(gabor_w, np.float32)
    w1_np = np.asarray(w1, np.float32)

    xs, cws, rms, aas, h8s, wds = [], [], [], [], [], []
    for s, xi in enumerate(scales):
        hs, ws = int(xi.shape[2]), int(xi.shape[3])
        h8 = ((hs + 7) // 8) * 8
        xs.append(_pack_rows_bf16(xi, h8))
        cws.append(jnp.asarray(_column_window(ws, K, qp), jnp.bfloat16))
        rms.append(jnp.asarray(_row_window(hs, h8, K, qp), jnp.float32))
        aas.append(jnp.asarray(_fold_gabor_w1(gw_np, w1_np, s, hs * ws, qp,
                                              hidden_p)))
        h8s.append(h8)
        wds.append(ws)

    b1p = jnp.zeros((1, hidden_p), jnp.float32
                    ).at[0, :hidden].set(jnp.asarray(b1).reshape(-1))
    w2p = jnp.zeros((hidden_p, out_p), jnp.float32
                    ).at[:hidden, :out_dim].set(jnp.asarray(w2))
    b2p = jnp.zeros((1, out_p), jnp.float32
                    ).at[0, :out_dim].set(jnp.asarray(b2).reshape(-1))

    def x_spec(i):
        return pl.BlockSpec((tb, C * h8s[i], wds[i]), lambda b: (b, 0, 0))

    def const_spec(shape):
        # Grid-invariant block: single-buffered, DMA'd once.
        return pl.BlockSpec(shape, lambda b: (0,) * len(shape),
                            pipeline_mode=pl.Buffered(1))

    in_specs = (
        [x_spec(i) for i in range(3)]
        + [const_spec((wds[i], qp)) for i in range(3)]
        + [const_spec((h8s[i], qp)) for i in range(3)]
        + [const_spec((C, qp, hidden_p)) for _ in range(3)]
        + [const_spec((1, hidden_p)),
           const_spec((hidden_p, out_p)),
           const_spec((1, out_p))]
    )
    out_spec = pl.BlockSpec((1, tb, out_p), lambda b: (b, 0, 0))

    flops = 0
    bytes_accessed = 0
    for i in range(3):
        flops += 2 * b_pad * C * h8s[i] * wds[i] * qp          # window matmul
        flops += 2 * b_pad * C * qp * hidden_p                 # Gabor x W1 fold
        bytes_accessed += b_pad * C * h8s[i] * wds[i] * 2      # bf16 image read
        bytes_accessed += (wds[i] * qp * 2 + h8s[i] * qp * 4
                           + C * qp * hidden_p * 4)
    flops += 2 * b_pad * hidden_p * out_p
    bytes_accessed += (hidden_p * out_p + hidden_p + out_p + b_pad * out_p) * 4

    out3 = pl.pallas_call(
        _msct_kernel,
        out_shape=jax.ShapeDtypeStruct((n_blk, tb, out_p), jnp.float32),
        grid=(n_blk,),
        in_specs=in_specs,
        out_specs=out_spec,
        compiler_params=pltpu.CompilerParams(
            dimension_semantics=("parallel",),
            vmem_limit_bytes=vmem_limit_bytes),
        cost_estimate=pl.CostEstimate(flops=int(flops), transcendentals=0,
                                      bytes_accessed=int(bytes_accessed)),
    )(xs[0], xs[1], xs[2], cws[0], cws[1], cws[2], rms[0], rms[1], rms[2],
      aas[0], aas[1], aas[2], b1p, w2p, b2p)

    return out3.reshape(b_pad, out_p)[:B, :out_dim]


# ----------------------------------------------------------------------------
# Pure-JAX reference (independent conv path) for a sanity check
# ----------------------------------------------------------------------------
def ref_forward(x, gabor_w, w1, b1, w2, b2):
    pad = gabor_w.shape[-1] // 2
    hp = jax.lax.Precision.HIGHEST

    def gabor_pool(xi):
        y = jax.lax.conv_general_dilated(
            xi, gabor_w, window_strides=(1, 1),
            padding=((pad, pad), (pad, pad)),
            dimension_numbers=("NCHW", "OIHW", "NCHW"),
            precision=hp)
        return jnp.mean(y, axis=(2, 3))

    B, C, H, W = x.shape
    x2 = bilinear_resize_nchw(x, H // 2, W // 2)
    x3 = bilinear_resize_nchw(x, H // 4, W // 4)
    v = jnp.concatenate([gabor_pool(x), gabor_pool(x2), gabor_pool(x3)],
                        axis=1)
    h = jnp.maximum(jnp.dot(v, w1, precision=hp) + b1.reshape(1, -1), 0.0)
    return jnp.maximum(jnp.dot(h, w2, precision=hp) + b2.reshape(1, -1), 0.0)


# ----------------------------------------------------------------------------
if __name__ == "__main__":
    B, C, H, W = 6, 3, 16, 16
    gabor_channels, hidden, out_dim = 16, 64, 32

    gabor_w = create_gabor_filters(in_channels=C, out_channels=gabor_channels,
                                   kernel_size=15, num_scales=2)

    key = jax.random.PRNGKey(0)
    k1, k2, k3, k4, kx = jax.random.split(key, 5)
    # Linear(48, 64) and Linear(64, 32) stored as (in, out) so both the kernel
    # and the reference compute x @ W.  (PyTorch nn.Linear stores (out, in) —
    # transpose when importing real checkpoints.)
    w1 = (jax.random.normal(k1, (3 * gabor_channels, hidden), jnp.float32)
          * (1.0 / np.sqrt(3 * gabor_channels)))
    b1 = jax.random.normal(k2, (hidden,), jnp.float32) * 0.01
    w2 = (jax.random.normal(k3, (hidden, out_dim), jnp.float32)
          * (1.0 / np.sqrt(hidden)))
    b2 = jax.random.normal(k4, (out_dim,), jnp.float32) * 0.01

    x = jax.random.uniform(kx, (B, C, H, W), jnp.float32)

    # TB=4 -> batch padded 6->8, grid of 2 batch-blocks.
    out = multiscale_color_texture_gabor(x, gabor_w, w1, b1, w2, b2, tb=4)
    out = jax.block_until_ready(out)
    assert out.shape == (B, out_dim)

    ref = jax.block_until_ready(ref_forward(x, gabor_w, w1, b1, w2, b2))
    np.testing.assert_allclose(np.asarray(out), np.asarray(ref),
                               rtol=2e-2, atol=2e-2)

    print("KERNEL_OK")
</pallas_src>

<mosaic_0001>
module attributes {stable_mosaic.version = 11 : i64} {
  func.func @_msct_kernel(%arg0: i32, %arg1: memref<4x48x16xbf16, #tpu.memory_space<vmem>>, %arg2: memref<4x24x8xbf16, #tpu.memory_space<vmem>>, %arg3: memref<4x24x4xbf16, #tpu.memory_space<vmem>>, %arg4: memref<16x256xbf16, #tpu.memory_space<vmem>>, %arg5: memref<8x256xbf16, #tpu.memory_space<vmem>>, %arg6: memref<4x256xbf16, #tpu.memory_space<vmem>>, %arg7: memref<16x256xf32, #tpu.memory_space<vmem>>, %arg8: memref<8x256xf32, #tpu.memory_space<vmem>>, %arg9: memref<8x256xf32, #tpu.memory_space<vmem>>, %arg10: memref<3x256x128xf32, #tpu.memory_space<vmem>>, %arg11: memref<3x256x128xf32, #tpu.memory_space<vmem>>, %arg12: memref<3x256x128xf32, #tpu.memory_space<vmem>>, %arg13: memref<1x128xf32, #tpu.memory_space<vmem>>, %arg14: memref<128x128xf32, #tpu.memory_space<vmem>>, %arg15: memref<1x128xf32, #tpu.memory_space<vmem>>, %arg16: memref<1x4x128xf32, #tpu.memory_space<vmem>>) attributes {dimension_semantics = [#tpu.dimension_semantics<parallel>], iteration_bounds = array<i64: 2>, scalar_prefetch = 0 : i64, scratch_operands = 0 : i64, tpu.core_type = #tpu.core_type<tc>, window_params = [{transform_indices = @transform_0, window_bounds = array<i64: 4, 48, 16>}, {transform_indices = @transform_1, window_bounds = array<i64: 4, 24, 8>}, {transform_indices = @transform_2, window_bounds = array<i64: 4, 24, 4>}, {pipeline_mode = #tpu.pipeline_mode<synchronous>, transform_indices = @transform_3, window_bounds = array<i64: 16, 256>}, {pipeline_mode = #tpu.pipeline_mode<synchronous>, transform_indices = @transform_4, window_bounds = array<i64: 8, 256>}, {pipeline_mode = #tpu.pipeline_mode<synchronous>, transform_indices = @transform_5, window_bounds = array<i64: 4, 256>}, {pipeline_mode = #tpu.pipeline_mode<synchronous>, transform_indices = @transform_6, window_bounds = array<i64: 16, 256>}, {pipeline_mode = #tpu.pipeline_mode<synchronous>, transform_indices = @transform_7, window_bounds = array<i64: 8, 256>}, {pipeline_mode = #tpu.pipeline_mode<synchronous>, transform_indices = @transform_8, window_bounds = array<i64: 8, 256>}, {pipeline_mode = #tpu.pipeline_mode<synchronous>, transform_indices = @transform_9, window_bounds = array<i64: 3, 256, 128>}, {pipeline_mode = #tpu.pipeline_mode<synchronous>, transform_indices = @transform_10, window_bounds = array<i64: 3, 256, 128>}, {pipeline_mode = #tpu.pipeline_mode<synchronous>, transform_indices = @transform_11, window_bounds = array<i64: 3, 256, 128>}, {pipeline_mode = #tpu.pipeline_mode<synchronous>, transform_indices = @transform_12, window_bounds = array<i64: 1, 128>}, {pipeline_mode = #tpu.pipeline_mode<synchronous>, transform_indices = @transform_13, window_bounds = array<i64: 128, 128>}, {pipeline_mode = #tpu.pipeline_mode<synchronous>, transform_indices = @transform_14, window_bounds = array<i64: 1, 128>}, {transform_indices = @transform_15, window_bounds = array<i64: 1, 4, 128>}]} {
    %c0 = arith.constant 0 : index
    %c0_0 = arith.constant 0 : index
    %c0_1 = arith.constant 0 : index
    %0 = vector.load %arg1[%c0, %c0_0, %c0_1] : memref<4x48x16xbf16, #tpu.memory_space<vmem>>, vector<4x48x16xbf16>
    %1 = vector.shape_cast %0 : vector<4x48x16xbf16> to vector<192x16xbf16>
    %c0_2 = arith.constant 0 : index
    %c0_3 = arith.constant 0 : index
    %2 = vector.load %arg4[%c0_2, %c0_3] : memref<16x256xbf16, #tpu.memory_space<vmem>>, vector<16x256xbf16>
    %cst = arith.constant dense<0.000000e+00> : vector<192x256xf32>
    %3 = tpu.matmul %1, %2, %cst {dimension_numbers = #tpu.dot_dimension_numbers<[1], [0], [0], [1], [0, 0, 1, 1], [], []>} : vector<192x16xbf16>, vector<16x256xbf16>, vector<192x256xf32> -> vector<192x256xf32>
    %4 = vector.shape_cast %3 : vector<192x256xf32> to vector<4x48x256xf32>
    %c0_4 = arith.constant 0 : index
    %c0_5 = arith.constant 0 : index
    %5 = vector.load %arg7[%c0_4, %c0_5] : memref<16x256xf32, #tpu.memory_space<vmem>>, vector<16x256xf32>
    %cst_6 = arith.constant 0.000000e+00 : f32
    %6 = vector.broadcast %cst_6 : f32 to vector<4x128xf32>
    %7 = vector.extract_strided_slice %4 {offsets = [0, 0, 0], sizes = [4, 16, 256], strides = [1, 1, 1]} : vector<4x48x256xf32> to vector<4x16x256xf32>
    %8 = vector.shape_cast %5 : vector<16x256xf32> to vector<1x16x256xf32>
    %9 = vector.broadcast %8 : vector<1x16x256xf32> to vector<4x16x256xf32>
    %10 = arith.mulf %7, %9 : vector<4x16x256xf32>
    %cst_7 = arith.constant dense<0.000000e+00> : vector<4x256xf32>
    %11 = vector.multi_reduction <add>, %10, %cst_7 [1] : vector<4x16x256xf32> to vector<4x256xf32>
    %c0_8 = arith.constant 0 : index
    %c0_9 = arith.constant 0 : index
    %c0_10 = arith.constant 0 : index
    %12 = vector.load %arg10[%c0_8, %c0_9, %c0_10] : memref<3x256x128xf32, #tpu.memory_space<vmem>>, vector<1x256x128xf32>
    %13 = vector.shape_cast %12 : vector<1x256x128xf32> to vector<256x128xf32>
    %cst_11 = arith.constant dense<0.000000e+00> : vector<4x128xf32>
    %14 = tpu.matmul %11, %13, %cst_11 {dimension_numbers = #tpu.dot_dimension_numbers<[1], [0], [0], [1], [0, 0, 1, 1], [], []>} : vector<4x256xf32>, vector<256x128xf32>, vector<4x128xf32> -> vector<4x128xf32>
    %15 = arith.addf %6, %14 : vector<4x128xf32>
    %16 = vector.extract_strided_slice %4 {offsets = [0, 16, 0], sizes = [4, 16, 256], strides = [1, 1, 1]} : vector<4x48x256xf32> to vector<4x16x256xf32>
    %17 = vector.shape_cast %5 : vector<16x256xf32> to vector<1x16x256xf32>
    %18 = vector.broadcast %17 : vector<1x16x256xf32> to vector<4x16x256xf32>
    %19 = arith.mulf %16, %18 : vector<4x16x256xf32>
    %cst_12 = arith.constant dense<0.000000e+00> : vector<4x256xf32>
    %20 = vector.multi_reduction <add>, %19, %cst_12 [1] : vector<4x16x256xf32> to vector<4x256xf32>
    %c1 = arith.constant 1 : index
    %c0_13 = arith.constant 0 : index
    %c0_14 = arith.constant 0 : index
    %21 = vector.load %arg10[%c1, %c0_13, %c0_14] : memref<3x256x128xf32, #tpu.memory_space<vmem>>, vector<1x256x128xf32>
    %22 = vector.shape_cast %21 : vector<1x256x128xf32> to vector<256x128xf32>
    %cst_15 = arith.constant dense<0.000000e+00> : vector<4x128xf32>
    %23 = tpu.matmul %20, %22, %cst_15 {dimension_numbers = #tpu.dot_dimension_numbers<[1], [0], [0], [1], [0, 0, 1, 1], [], []>} : vector<4x256xf32>, vector<256x128xf32>, vector<4x128xf32> -> vector<4x128xf32>
    %24 = arith.addf %15, %23 : vector<4x128xf32>
    %25 = vector.extract_strided_slice %4 {offsets = [0, 32, 0], sizes = [4, 16, 256], strides = [1, 1, 1]} : vector<4x48x256xf32> to vector<4x16x256xf32>
    %26 = vector.shape_cast %5 : vector<16x256xf32> to vector<1x16x256xf32>
    %27 = vector.broadcast %26 : vector<1x16x256xf32> to vector<4x16x256xf32>
    %28 = arith.mulf %25, %27 : vector<4x16x256xf32>
    %cst_16 = arith.constant dense<0.000000e+00> : vector<4x256xf32>
    %29 = vector.multi_reduction <add>, %28, %cst_16 [1] : vector<4x16x256xf32> to vector<4x256xf32>
    %c2 = arith.constant 2 : index
    %c0_17 = arith.constant 0 : index
    %c0_18 = arith.constant 0 : index
    %30 = vector.load %arg10[%c2, %c0_17, %c0_18] : memref<3x256x128xf32, #tpu.memory_space<vmem>>, vector<1x256x128xf32>
    %31 = vector.shape_cast %30 : vector<1x256x128xf32> to vector<256x128xf32>
    %cst_19 = arith.constant dense<0.000000e+00> : vector<4x128xf32>
    %32 = tpu.matmul %29, %31, %cst_19 {dimension_numbers = #tpu.dot_dimension_numbers<[1], [0], [0], [1], [0, 0, 1, 1], [], []>} : vector<4x256xf32>, vector<256x128xf32>, vector<4x128xf32> -> vector<4x128xf32>
    %33 = arith.addf %24, %32 : vector<4x128xf32>
    %c0_20 = arith.constant 0 : index
    %c0_21 = arith.constant 0 : index
    %c0_22 = arith.constant 0 : index
    %34 = vector.load %arg2[%c0_20, %c0_21, %c0_22] : memref<4x24x8xbf16, #tpu.memory_space<vmem>>, vector<4x24x8xbf16>
    %35 = vector.shape_cast %34 : vector<4x24x8xbf16> to vector<96x8xbf16>
    %c0_23 = arith.constant 0 : index
    %c0_24 = arith.constant 0 : index
    %36 = vector.load %arg5[%c0_23, %c0_24] : memref<8x256xbf16, #tpu.memory_space<vmem>>, vector<8x256xbf16>
    %cst_25 = arith.constant dense<0.000000e+00> : vector<96x256xf32>
    %37 = tpu.matmul %35, %36, %cst_25 {dimension_numbers = #tpu.dot_dimension_numbers<[1], [0], [0], [1], [0, 0, 1, 1], [], []>} : vector<96x8xbf16>, vector<8x256xbf16>, vector<96x256xf32> -> vector<96x256xf32>
    %38 = vector.shape_cast %37 : vector<96x256xf32> to vector<4x24x256xf32>
    %c0_26 = arith.constant 0 : index
    %c0_27 = arith.constant 0 : index
    %39 = vector.load %arg8[%c0_26, %c0_27] : memref<8x256xf32, #tpu.memory_space<vmem>>, vector<8x256xf32>
    %cst_28 = arith.constant 0.000000e+00 : f32
    %40 = vector.broadcast %cst_28 : f32 to vector<4x128xf32>
    %41 = vector.extract_strided_slice %38 {offsets = [0, 0, 0], sizes = [4, 8, 256], strides = [1, 1, 1]} : vector<4x24x256xf32> to vector<4x8x256xf32>
    %42 = vector.shape_cast %39 : vector<8x256xf32> to vector<1x8x256xf32>
    %43 = vector.broadcast %42 : vector<1x8x256xf32> to vector<4x8x256xf32>
    %44 = arith.mulf %41, %43 : vector<4x8x256xf32>
    %cst_29 = arith.constant dense<0.000000e+00> : vector<4x256xf32>
    %45 = vector.multi_reduction <add>, %44, %cst_29 [1] : vector<4x8x256xf32> to vector<4x256xf32>
    %c0_30 = arith.constant 0 : index
    %c0_31 = arith.constant 0 : index
    %c0_32 = arith.constant 0 : index
    %46 = vector.load %arg11[%c0_30, %c0_31, %c0_32] : memref<3x256x128xf32, #tpu.memory_space<vmem>>, vector<1x256x128xf32>
    %47 = vector.shape_cast %46 : vector<1x256x128xf32> to vector<256x128xf32>
    %cst_33 = arith.constant dense<0.000000e+00> : vector<4x128xf32>
    %48 = tpu.matmul %45, %47, %cst_33 {dimension_numbers = #tpu.dot_dimension_numbers<[1], [0], [0], [1], [0, 0, 1, 1], [], []>} : vector<4x256xf32>, vector<256x128xf32>, vector<4x128xf32> -> vector<4x128xf32>
    %49 = arith.addf %40, %48 : vector<4x128xf32>
    %50 = vector.extract_strided_slice %38 {offsets = [0, 8, 0], sizes = [4, 8, 256], strides = [1, 1, 1]} : vector<4x24x256xf32> to vector<4x8x256xf32>
    %51 = vector.shape_cast %39 : vector<8x256xf32> to vector<1x8x256xf32>
    %52 = vector.broadcast %51 : vector<1x8x256xf32> to vector<4x8x256xf32>
    %53 = arith.mulf %50, %52 : vector<4x8x256xf32>
    %cst_34 = arith.constant dense<0.000000e+00> : vector<4x256xf32>
    %54 = vector.multi_reduction <add>, %53, %cst_34 [1] : vector<4x8x256xf32> to vector<4x256xf32>
    %c1_35 = arith.constant 1 : index
    %c0_36 = arith.constant 0 : index
    %c0_37 = arith.constant 0 : index
    %55 = vector.load %arg11[%c1_35, %c0_36, %c0_37] : memref<3x256x128xf32, #tpu.memory_space<vmem>>, vector<1x256x128xf32>
    %56 = vector.shape_cast %55 : vector<1x256x128xf32> to vector<256x128xf32>
    %cst_38 = arith.constant dense<0.000000e+00> : vector<4x128xf32>
    %57 = tpu.matmul %54, %56, %cst_38 {dimension_numbers = #tpu.dot_dimension_numbers<[1], [0], [0], [1], [0, 0, 1, 1], [], []>} : vector<4x256xf32>, vector<256x128xf32>, vector<4x128xf32> -> vector<4x128xf32>
    %58 = arith.addf %49, %57 : vector<4x128xf32>
    %59 = vector.extract_strided_slice %38 {offsets = [0, 16, 0], sizes = [4, 8, 256], strides = [1, 1, 1]} : vector<4x24x256xf32> to vector<4x8x256xf32>
    %60 = vector.shape_cast %39 : vector<8x256xf32> to vector<1x8x256xf32>
    %61 = vector.broadcast %60 : vector<1x8x256xf32> to vector<4x8x256xf32>
    %62 = arith.mulf %59, %61 : vector<4x8x256xf32>
    %cst_39 = arith.constant dense<0.000000e+00> : vector<4x256xf32>
    %63 = vector.multi_reduction <add>, %62, %cst_39 [1] : vector<4x8x256xf32> to vector<4x256xf32>
    %c2_40 = arith.constant 2 : index
    %c0_41 = arith.constant 0 : index
    %c0_42 = arith.constant 0 : index
    %64 = vector.load %arg11[%c2_40, %c0_41, %c0_42] : memref<3x256x128xf32, #tpu.memory_space<vmem>>, vector<1x256x128xf32>
    %65 = vector.shape_cast %64 : vector<1x256x128xf32> to vector<256x128xf32>
    %cst_43 = arith.constant dense<0.000000e+00> : vector<4x128xf32>
    %66 = tpu.matmul %63, %65, %cst_43 {dimension_numbers = #tpu.dot_dimension_numbers<[1], [0], [0], [1], [0, 0, 1, 1], [], []>} : vector<4x256xf32>, vector<256x128xf32>, vector<4x128xf32> -> vector<4x128xf32>
    %67 = arith.addf %58, %66 : vector<4x128xf32>
    %68 = arith.addf %33, %67 : vector<4x128xf32>
    %c0_44 = arith.constant 0 : index
    %c0_45 = arith.constant 0 : index
    %c0_46 = arith.constant 0 : index
    %69 = vector.load %arg3[%c0_44, %c0_45, %c0_46] : memref<4x24x4xbf16, #tpu.memory_space<vmem>>, vector<4x24x4xbf16>
    %70 = vector.shape_cast %69 : vector<4x24x4xbf16> to vector<96x4xbf16>
    %c0_47 = arith.constant 0 : index
    %c0_48 = arith.constant 0 : index
    %71 = vector.load %arg6[%c0_47, %c0_48] : memref<4x256xbf16, #tpu.memory_space<vmem>>, vector<4x256xbf16>
    %cst_49 = arith.constant dense<0.000000e+00> : vector<96x256xf32>
    %72 = tpu.matmul %70, %71, %cst_49 {dimension_numbers = #tpu.dot_dimension_numbers<[1], [0], [0], [1], [0, 0, 1, 1], [], []>} : vector<96x4xbf16>, vector<4x256xbf16>, vector<96x256xf32> -> vector<96x256xf32>
    %73 = vector.shape_cast %72 : vector<96x256xf32> to vector<4x24x256xf32>
    %c0_50 = arith.constant 0 : index
    %c0_51 = arith.constant 0 : index
    %74 = vector.load %arg9[%c0_50, %c0_51] : memref<8x256xf32, #tpu.memory_space<vmem>>, vector<8x256xf32>
    %cst_52 = arith.constant 0.000000e+00 : f32
    %75 = vector.broadcast %cst_52 : f32 to vector<4x128xf32>
    %76 = vector.extract_strided_slice %73 {offsets = [0, 0, 0], sizes = [4, 8, 256], strides = [1, 1, 1]} : vector<4x24x256xf32> to vector<4x8x256xf32>
    %77 = vector.shape_cast %74 : vector<8x256xf32> to vector<1x8x256xf32>
    %78 = vector.broadcast %77 : vector<1x8x256xf32> to vector<4x8x256xf32>
    %79 = arith.mulf %76, %78 : vector<4x8x256xf32>
    %cst_53 = arith.constant dense<0.000000e+00> : vector<4x256xf32>
    %80 = vector.multi_reduction <add>, %79, %cst_53 [1] : vector<4x8x256xf32> to vector<4x256xf32>
    %c0_54 = arith.constant 0 : index
    %c0_55 = arith.constant 0 : index
    %c0_56 = arith.constant 0 : index
    %81 = vector.load %arg12[%c0_54, %c0_55, %c0_56] : memref<3x256x128xf32, #tpu.memory_space<vmem>>, vector<1x256x128xf32>
    %82 = vector.shape_cast %81 : vector<1x256x128xf32> to vector<256x128xf32>
    %cst_57 = arith.constant dense<0.000000e+00> : vector<4x128xf32>
    %83 = tpu.matmul %80, %82, %cst_57 {dimension_numbers = #tpu.dot_dimension_numbers<[1], [0], [0], [1], [0, 0, 1, 1], [], []>} : vector<4x256xf32>, vector<256x128xf32>, vector<4x128xf32> -> vector<4x128xf32>
    %84 = arith.addf %75, %83 : vector<4x128xf32>
    %85 = vector.extract_strided_slice %73 {offsets = [0, 8, 0], sizes = [4, 8, 256], strides = [1, 1, 1]} : vector<4x24x256xf32> to vector<4x8x256xf32>
    %86 = vector.shape_cast %74 : vector<8x256xf32> to vector<1x8x256xf32>
    %87 = vector.broadcast %86 : vector<1x8x256xf32> to vector<4x8x256xf32>
    %88 = arith.mulf %85, %87 : vector<4x8x256xf32>
    %cst_58 = arith.constant dense<0.000000e+00> : vector<4x256xf32>
    %89 = vector.multi_reduction <add>, %88, %cst_58 [1] : vector<4x8x256xf32> to vector<4x256xf32>
    %c1_59 = arith.constant 1 : index
    %c0_60 = arith.constant 0 : index
    %c0_61 = arith.constant 0 : index
    %90 = vector.load %arg12[%c1_59, %c0_60, %c0_61] : memref<3x256x128xf32, #tpu.memory_space<vmem>>, vector<1x256x128xf32>
    %91 = vector.shape_cast %90 : vector<1x256x128xf32> to vector<256x128xf32>
    %cst_62 = arith.constant dense<0.000000e+00> : vector<4x128xf32>
    %92 = tpu.matmul %89, %91, %cst_62 {dimension_numbers = #tpu.dot_dimension_numbers<[1], [0], [0], [1], [0, 0, 1, 1], [], []>} : vector<4x256xf32>, vector<256x128xf32>, vector<4x128xf32> -> vector<4x128xf32>
    %93 = arith.addf %84, %92 : vector<4x128xf32>
    %94 = vector.extract_strided_slice %73 {offsets = [0, 16, 0], sizes = [4, 8, 256], strides = [1, 1, 1]} : vector<4x24x256xf32> to vector<4x8x256xf32>
    %95 = vector.shape_cast %74 : vector<8x256xf32> to vector<1x8x256xf32>
    %96 = vector.broadcast %95 : vector<1x8x256xf32> to vector<4x8x256xf32>
    %97 = arith.mulf %94, %96 : vector<4x8x256xf32>
    %cst_63 = arith.constant dense<0.000000e+00> : vector<4x256xf32>
    %98 = vector.multi_reduction <add>, %97, %cst_63 [1] : vector<4x8x256xf32> to vector<4x256xf32>
    %c2_64 = arith.constant 2 : index
    %c0_65 = arith.constant 0 : index
    %c0_66 = arith.constant 0 : index
    %99 = vector.load %arg12[%c2_64, %c0_65, %c0_66] : memref<3x256x128xf32, #tpu.memory_space<vmem>>, vector<1x256x128xf32>
    %100 = vector.shape_cast %99 : vector<1x256x128xf32> to vector<256x128xf32>
    %cst_67 = arith.constant dense<0.000000e+00> : vector<4x128xf32>
    %101 = tpu.matmul %98, %100, %cst_67 {dimension_numbers = #tpu.dot_dimension_numbers<[1], [0], [0], [1], [0, 0, 1, 1], [], []>} : vector<4x256xf32>, vector<256x128xf32>, vector<4x128xf32> -> vector<4x128xf32>
    %102 = arith.addf %93, %101 : vector<4x128xf32>
    %103 = arith.addf %68, %102 : vector<4x128xf32>
    %c0_68 = arith.constant 0 : index
    %c0_69 = arith.constant 0 : index
    %104 = vector.load %arg13[%c0_68, %c0_69] : memref<1x128xf32, #tpu.memory_space<vmem>>, vector<1x128xf32>
    %105 = vector.broadcast %104 : vector<1x128xf32> to vector<4x128xf32>
    %106 = arith.addf %103, %105 : vector<4x128xf32>
    %cst_70 = arith.constant 0.000000e+00 : f32
    %107 = vector.broadcast %cst_70 : f32 to vector<4x128xf32>
    %108 = arith.maximumf %106, %107 : vector<4x128xf32>
    %c0_71 = arith.constant 0 : index
    %c0_72 = arith.constant 0 : index
    %109 = vector.load %arg14[%c0_71, %c0_72] : memref<128x128xf32, #tpu.memory_space<vmem>>, vector<128x128xf32>
    %cst_73 = arith.constant dense<0.000000e+00> : vector<4x128xf32>
    %110 = tpu.matmul %108, %109, %cst_73 {dimension_numbers = #tpu.dot_dimension_numbers<[1], [0], [0], [1], [0, 0, 1, 1], [], []>} : vector<4x128xf32>, vector<128x128xf32>, vector<4x128xf32> -> vector<4x128xf32>
    %c0_74 = arith.constant 0 : index
    %c0_75 = arith.constant 0 : index
    %111 = vector.load %arg15[%c0_74, %c0_75] : memref<1x128xf32, #tpu.memory_space<vmem>>, vector<1x128xf32>
    %112 = vector.broadcast %111 : vector<1x128xf32> to vector<4x128xf32>
    %113 = arith.addf %110, %112 : vector<4x128xf32>
    %cst_76 = arith.constant 0.000000e+00 : f32
    %114 = vector.broadcast %cst_76 : f32 to vector<4x128xf32>
    %115 = arith.maximumf %113, %114 : vector<4x128xf32>
    %c0_77 = arith.constant 0 : index
    %c0_78 = arith.constant 0 : index
    %c0_79 = arith.constant 0 : index
    %116 = vector.load %arg16[%c0_77, %c0_78, %c0_79] : memref<1x4x128xf32, #tpu.memory_space<vmem>>, vector<1x4x128xf32>
    %117 = vector.shape_cast %116 : vector<1x4x128xf32> to vector<4x128xf32>
    %118 = vector.shape_cast %115 : vector<4x128xf32> to vector<1x4x128xf32>
    tpu.vector_store %arg16[%c0_77, %c0_78, %c0_79], %118 {strides = array<i32>} : memref<1x4x128xf32, #tpu.memory_space<vmem>>, vector<1x4x128xf32>,
    return
  }
  func.func @transform_0(%arg0: i32) -> (i32, i32, i32) {
    %c0_i32 = arith.constant 0 : i32
    %c0_i32_0 = arith.constant 0 : i32
    %c0_i32_1 = arith.constant 0 : i32
    return %arg0, %c0_i32, %c0_i32_0 : i32, i32, i32
  }
  func.func @transform_1(%arg0: i32) -> (i32, i32, i32) {
    %c0_i32 = arith.constant 0 : i32
    %c0_i32_0 = arith.constant 0 : i32
    %c0_i32_1 = arith.constant 0 : i32
    return %arg0, %c0_i32, %c0_i32_0 : i32, i32, i32
  }
  func.func @transform_2(%arg0: i32) -> (i32, i32, i32) {
    %c0_i32 = arith.constant 0 : i32
    %c0_i32_0 = arith.constant 0 : i32
    %c0_i32_1 = arith.constant 0 : i32
    return %arg0, %c0_i32, %c0_i32_0 : i32, i32, i32
  }
  func.func @transform_3(%arg0: i32) -> (i32, i32) {
    %c0_i32 = arith.constant 0 : i32
    %c0_i32_0 = arith.constant 0 : i32
    %c0_i32_1 = arith.constant 0 : i32
    return %c0_i32, %c0_i32_0 : i32, i32
  }
  func.func @transform_4(%arg0: i32) -> (i32, i32) {
    %c0_i32 = arith.constant 0 : i32
    %c0_i32_0 = arith.constant 0 : i32
    %c0_i32_1 = arith.constant 0 : i32
    return %c0_i32, %c0_i32_0 : i32, i32
  }
  func.func @transform_5(%arg0: i32) -> (i32, i32) {
    %c0_i32 = arith.constant 0 : i32
    %c0_i32_0 = arith.constant 0 : i32
    %c0_i32_1 = arith.constant 0 : i32
    return %c0_i32, %c0_i32_0 : i32, i32
  }
  func.func @transform_6(%arg0: i32) -> (i32, i32) {
    %c0_i32 = arith.constant 0 : i32
    %c0_i32_0 = arith.constant 0 : i32
    %c0_i32_1 = arith.constant 0 : i32
    return %c0_i32, %c0_i32_0 : i32, i32
  }
  func.func @transform_7(%arg0: i32) -> (i32, i32) {
    %c0_i32 = arith.constant 0 : i32
    %c0_i32_0 = arith.constant 0 : i32
    %c0_i32_1 = arith.constant 0 : i32
    return %c0_i32, %c0_i32_0 : i32, i32
  }
  func.func @transform_8(%arg0: i32) -> (i32, i32) {
    %c0_i32 = arith.constant 0 : i32
    %c0_i32_0 = arith.constant 0 : i32
    %c0_i32_1 = arith.constant 0 : i32
    return %c0_i32, %c0_i32_0 : i32, i32
  }
  func.func @transform_9(%arg0: i32) -> (i32, i32, i32) {
    %c0_i32 = arith.constant 0 : i32
    %c0_i32_0 = arith.constant 0 : i32
    %c0_i32_1 = arith.constant 0 : i32
    %c0_i32_2 = arith.constant 0 : i32
    return %c0_i32, %c0_i32_0, %c0_i32_1 : i32, i32, i32
  }
  func.func @transform_10(%arg0: i32) -> (i32, i32, i32) {
    %c0_i32 = arith.constant 0 : i32
    %c0_i32_0 = arith.constant 0 : i32
    %c0_i32_1 = arith.constant 0 : i32
    %c0_i32_2 = arith.constant 0 : i32
    return %c0_i32, %c0_i32_0, %c0_i32_1 : i32, i32, i32
  }
  func.func @transform_11(%arg0: i32) -> (i32, i32, i32) {
    %c0_i32 = arith.constant 0 : i32
    %c0_i32_0 = arith.constant 0 : i32
    %c0_i32_1 = arith.constant 0 : i32
    %c0_i32_2 = arith.constant 0 : i32
    return %c0_i32, %c0_i32_0, %c0_i32_1 : i32, i32, i32
  }
  func.func @transform_12(%arg0: i32) -> (i32, i32) {
    %c0_i32 = arith.constant 0 : i32
    %c0_i32_0 = arith.constant 0 : i32
    %c0_i32_1 = arith.constant 0 : i32
    return %c0_i32, %c0_i32_0 : i32, i32
  }
  func.func @transform_13(%arg0: i32) -> (i32, i32) {
    %c0_i32 = arith.constant 0 : i32
    %c0_i32_0 = arith.constant 0 : i32
    %c0_i32_1 = arith.constant 0 : i32
    return %c0_i32, %c0_i32_0 : i32, i32
  }
  func.func @transform_14(%arg0: i32) -> (i32, i32) {
    %c0_i32 = arith.constant 0 : i32
    %c0_i32_0 = arith.constant 0 : i32
    %c0_i32_1 = arith.constant 0 : i32
    return %c0_i32, %c0_i32_0 : i32, i32
  }
  func.func @transform_15(%arg0: i32) -> (i32, i32, i32) {
    %c0_i32 = arith.constant 0 : i32
    %c0_i32_0 = arith.constant 0 : i32
    %c0_i32_1 = arith.constant 0 : i32
    return %arg0, %c0_i32, %c0_i32_0 : i32, i32, i32
  }
}

</mosaic_0001>

<llo_original>
// kernel: tpu_custom_call.1
$region0: #{tpu_custom_call.1}
  #allocation0 [shape = 'u32[]', space=smem, size = 0x4, offset = 0x4, fixed_abs, tag = 'smem constant byte address 0x4 - core index']
  #allocation1 [shape = 'u32[144,128]{1,0:T(1,128)}', space=vmem, size = 0x12000, scoped, tag = 'internal scratch']
  %s0 = inlined_call_operand.vmem [shape: bf16[8,48,16], index: 0, kind: input, shape index: {}]
  %s1 = inlined_call_operand.vmem [shape: bf16[8,24,8], index: 1, kind: input, shape index: {}]
  %s2 = inlined_call_operand.vmem [shape: bf16[8,24,4], index: 2, kind: input, shape index: {}]
  %s3 = inlined_call_operand.vmem [shape: bf16[16,256], index: 3, kind: input, shape index: {}]
  %s4 = inlined_call_operand.vmem [shape: bf16[8,256], index: 4, kind: input, shape index: {}]
  %s5 = inlined_call_operand.vmem [shape: bf16[4,256], index: 5, kind: input, shape index: {}]
  %s6 = inlined_call_operand.vmem [shape: f32[16,256], index: 6, kind: input, shape index: {}]
  %s7 = inlined_call_operand.vmem [shape: f32[8,256], index: 7, kind: input, shape index: {}]
  %s8 = inlined_call_operand.vmem [shape: f32[8,256], index: 8, kind: input, shape index: {}]
  %s9 = inlined_call_operand.hbm [shape: f32[3,256,128], index: 9, kind: input, shape index: {}]
  %s10 = inlined_call_operand.hbm [shape: f32[3,256,128], index: 10, kind: input, shape index: {}]
  %s11 = inlined_call_operand.hbm [shape: f32[3,256,128], index: 11, kind: input, shape index: {}]
  %s12 = inlined_call_operand.vmem [shape: f32[1,128], index: 12, kind: input, shape index: {}]
  %s13 = inlined_call_operand.vmem [shape: f32[128,128], index: 13, kind: input, shape index: {}]
  %s14 = inlined_call_operand.vmem [shape: f32[1,128], index: 14, kind: input, shape index: {}]
  %s15 = inlined_call_operand.hbm [shape: f32[2,4,128], index: 15, kind: output, shape index: {}]
  %s16 = sld [smem:[#allocation0]]
  $region105: #{tpu_custom_call.1} parent=0
    _
  %s18 = ssub.s32 1, %s16
  %s19 = scalar_select 0, %s18, %s16
  $region1: #{tpu_custom_call.1} parent=0
    #allocation2 [shape = 'u8[393216]{0}', space=vmem, size = 0x60000, scoped, tag = 'input window, operand 9, single buffered']
    #allocation3 [shape = 's32[2]{0}', space=sflag, size = 0x8, scoped, tag = 'scoped memory for tpu_custom_call.1']
    #allocation4 [shape = 's32[2]{0}', space=sflag, size = 0x8, scoped, tag = 'scoped memory for tpu_custom_call.1']
    #allocation5 [shape = 'u8[393216]{0}', space=vmem, size = 0x60000, scoped, tag = 'input window, operand 10, single buffered']
    #allocation6 [shape = 's32[1]{0}', space=sflag, size = 0x4, scoped, tag = 'scoped memory for tpu_custom_call.1']
    #allocation7 [shape = 'u8[393216]{0}', space=vmem, size = 0x60000, scoped, tag = 'input window, operand 11, single buffered']
    #allocation8 [shape = 'u8[4096]{0}', space=vmem, size = 0x1000, scoped, tag = 'output window, operand 0']
    %20 = vsyncpa [#allocation3], 0
    %21 = vsyncpa [#allocation6], 0
    %22 = vsyncpa [#allocation4], 0
    %s23 = scalar_lea.sflag [#allocation4], 1
    %24 = vsyncpa %s23, 0
    loop: start=0, step=1, limit=4
    $region2: #{tpu_custom_call.1} parent=1 // loop_pre_header
      _
    $region3: #{tpu_custom_call.1} parent=1 // loop_header
      %s26 = sphi 0, %s30
      %p27 = scmp.ge.s32.totalorder %s26, 4
      %s36 = sphi 0, %s38
      %s39 = sphi 0, %s36
      %s40 = sphi 0, %s39
      %s56 = sphi 0, %s40
      %s62 = sphi 0, %s64
      %s65 = sphi 0, %s62
      %s66 = sphi 0, %s65
      %s82 = sphi 0, %s66
      %s88 = sphi 0, %s90
      %s91 = sphi 0, %s88
      %s92 = sphi 0, %s91
      %s108 = sphi 0, %s92
      %s112 = sphi 0, %s112
      %s114 = sphi 0, %s112
      %s115 = sphi 0, %s114
      %s129 = sphi 0, %s115
      %s133 = sphi 0, %s133
      %s135 = sphi 0, %s133
      %s136 = sphi 0, %s135
      %s150 = sphi 0, %s136
      %s154 = sphi 0, %s154
      %s156 = sphi 0, %s154
      %s157 = sphi 0, %s156
      %s171 = sphi 0, %s157
      %s175 = sphi 0, %s175
      %s177 = sphi 0, %s175
      %s178 = sphi 0, %s177
      %s192 = sphi 0, %s178
      %s196 = sphi 0, %s196
      %s198 = sphi 0, %s196
      %s199 = sphi 0, %s198
      %s213 = sphi 0, %s199
      %s217 = sphi 0, %s217
      %s219 = sphi 0, %s217
      %s220 = sphi 0, %s219
      %s234 = sphi 0, %s220
      %s238 = sphi 0, %s238
      %s240 = sphi 0, %s238
      %s241 = sphi 0, %s240
      %s255 = sphi 0, %s241
      %s259 = sphi 0, %s259
      %s261 = sphi 0, %s259
      %s262 = sphi 0, %s261
      %s276 = sphi 0, %s262
      %s280 = sphi 0, %s280
      %s282 = sphi 0, %s280
      %s283 = sphi 0, %s282
      %s297 = sphi 0, %s283
      %s301 = sphi 0, %s301
      %s303 = sphi 0, %s301
      %s304 = sphi 0, %s303
      %s318 = sphi 0, %s304
      %s322 = sphi 0, %s322
      %s324 = sphi 0, %s322
      %s325 = sphi 0, %s324
      %s339 = sphi 0, %s325
      %s343 = sphi 0, %s343
      %s345 = sphi 0, %s343
      %s346 = sphi 0, %s345
      %s360 = sphi 0, %s346
      %s366 = sphi 0, %s368
      %s369 = sphi 0, %s366
      %s370 = sphi 0, %s369
      %s386 = sphi 0, %s370
    $region4: #{tpu_custom_call.1} parent=1 // loop_header_branch
      %29 = sbr.rel (%p27) target = $region8
    $region5: #{tpu_custom_call.1} parent=1 // loop_body
      %s31 = ssub.s32 %s26, 1
      %s32 = ssub.s32 %s26, 2
      %s33 = sadd.s32 %s26, 1
      %s34 = ssub.s32 %s26, %s33
      %p35 = scmp.eq.s32.totalorder %s34, 0
      %s37 = sadd.s32 %s36, 1
      %s38 = scalar_select %p35, %s36, %s37
      %p41 = pneg %p35
      %p42 = scmp.eq.s32.totalorder %s26, 1
      %p43 = por %p41, %p42
      %p44 = scmp.ne.s32.totalorder %s36, %s39
      %p45 = scmp.eq.s32.totalorder %s26, 0
      %p46 = por %p44, %p45
      %p47 = scmp.ne.s32.totalorder %s36, %s39
      %p48 = scmp.eq.s32.totalorder %s31, 1
      %p49 = por %p47, %p48
      %p50 = scmp.ne.s32.totalorder %s39, %s40
      %p51 = scmp.eq.s32.totalorder %s31, 0
      %p52 = por %p50, %p51
      %p53 = scmp.ne.s32.totalorder %s39, %s40
      %p54 = scmp.eq.s32.totalorder %s32, 1
      %p55 = por %p53, %p54
      %p57 = scmp.ne.s32.totalorder %s40, %s56
      %p58 = scmp.eq.s32.totalorder %s32, 0
      %p59 = por %p57, %p58
      %s60 = ssub.s32 %s26, %s33
      %p61 = scmp.eq.s32.totalorder %s60, 0
      %s63 = sadd.s32 %s62, 1
      %s64 = scalar_select %p61, %s62, %s63
      %p67 = pneg %p61
      %p68 = scmp.eq.s32.totalorder %s26, 1
      %p69 = por %p67, %p68
      %p70 = scmp.ne.s32.totalorder %s62, %s65
      %p71 = scmp.eq.s32.totalorder %s26, 0
      %p72 = por %p70, %p71
      %p73 = scmp.ne.s32.totalorder %s62, %s65
      %p74 = scmp.eq.s32.totalorder %s31, 1
      %p75 = por %p73, %p74
      %p76 = scmp.ne.s32.totalorder %s65, %s66
      %p77 = scmp.eq.s32.totalorder %s31, 0
      %p78 = por %p76, %p77
      %p79 = scmp.ne.s32.totalorder %s65, %s66
      %p80 = scmp.eq.s32.totalorder %s32, 1
      %p81 = por %p79, %p80
      %p83 = scmp.ne.s32.totalorder %s66, %s82
      %p84 = scmp.eq.s32.totalorder %s32, 0
      %p85 = por %p83, %p84
      %s86 = ssub.s32 %s26, %s33
      %p87 = scmp.eq.s32.totalorder %s86, 0
      %s89 = sadd.s32 %s88, 1
      %s90 = scalar_select %p87, %s88, %s89
      %p93 = pneg %p87
      %p94 = scmp.eq.s32.totalorder %s26, 1
      %p95 = por %p93, %p94
      %p96 = scmp.ne.s32.totalorder %s88, %s91
      %p97 = scmp.eq.s32.totalorder %s26, 0
      %p98 = por %p96, %p97
      %p99 = scmp.ne.s32.totalorder %s88, %s91
      %p100 = scmp.eq.s32.totalorder %s31, 1
      %p101 = por %p99, %p100
      %p102 = scmp.ne.s32.totalorder %s91, %s92
      %p103 = scmp.eq.s32.totalorder %s31, 0
      %p104 = por %p102, %p103
      %p105 = scmp.ne.s32.totalorder %s91, %s92
      %p106 = scmp.eq.s32.totalorder %s32, 1
      %p107 = por %p105, %p106
      %p109 = scmp.ne.s32.totalorder %s92, %s108
      %p110 = scmp.eq.s32.totalorder %s32, 0
      %p111 = por %p109, %p110
      %s113 = sadd.s32 %s112, 1
      %p116 = scmp.eq.s32.totalorder %s26, 1
      %p117 = scmp.ne.s32.totalorder %s112, %s114
      %p118 = scmp.eq.s32.totalorder %s26, 0
      %p119 = por %p117, %p118
      %p120 = scmp.ne.s32.totalorder %s112, %s114
      %p121 = scmp.eq.s32.totalorder %s31, 1
      %p122 = por %p120, %p121
      %p123 = scmp.ne.s32.totalorder %s114, %s115
      %p124 = scmp.eq.s32.totalorder %s31, 0
      %p125 = por %p123, %p124
      %p126 = scmp.ne.s32.totalorder %s114, %s115
      %p127 = scmp.eq.s32.totalorder %s32, 1
      %p128 = por %p126, %p127
      %p130 = scmp.ne.s32.totalorder %s115, %s129
      %p131 = scmp.eq.s32.totalorder %s32, 0
      %p132 = por %p130, %p131
      %s134 = sadd.s32 %s133, 1
      %p137 = scmp.eq.s32.totalorder %s26, 1
      %p138 = scmp.ne.s32.totalorder %s133, %s135
      %p139 = scmp.eq.s32.totalorder %s26, 0
      %p140 = por %p138, %p139
      %p141 = scmp.ne.s32.totalorder %s133, %s135
      %p142 = scmp.eq.s32.totalorder %s31, 1
      %p143 = por %p141, %p142
      %p144 = scmp.ne.s32.totalorder %s135, %s136
      %p145 = scmp.eq.s32.totalorder %s31, 0
      %p146 = por %p144, %p145
      %p147 = scmp.ne.s32.totalorder %s135, %s136
      %p148 = scmp.eq.s32.totalorder %s32, 1
      %p149 = por %p147, %p148
      %p151 = scmp.ne.s32.totalorder %s136, %s150
      %p152 = scmp.eq.s32.totalorder %s32, 0
      %p153 = por %p151, %p152
      %s155 = sadd.s32 %s154, 1
      %p158 = scmp.eq.s32.totalorder %s26, 1
      %p159 = scmp.ne.s32.totalorder %s154, %s156
      %p160 = scmp.eq.s32.totalorder %s26, 0
      %p161 = por %p159, %p160
      %p162 = scmp.ne.s32.totalorder %s154, %s156
      %p163 = scmp.eq.s32.totalorder %s31, 1
      %p164 = por %p162, %p163
      %p165 = scmp.ne.s32.totalorder %s156, %s157
      %p166 = scmp.eq.s32.totalorder %s31, 0
      %p167 = por %p165, %p166
      %p168 = scmp.ne.s32.totalorder %s156, %s157
      %p169 = scmp.eq.s32.totalorder %s32, 1
      %p170 = por %p168, %p169
      %p172 = scmp.ne.s32.totalorder %s157, %s171
      %p173 = scmp.eq.s32.totalorder %s32, 0
      %p174 = por %p172, %p173
      %s176 = sadd.s32 %s175, 1
      %p179 = scmp.eq.s32.totalorder %s26, 1
      %p180 = scmp.ne.s32.totalorder %s175, %s177
      %p181 = scmp.eq.s32.totalorder %s26, 0
      %p182 = por %p180, %p181
      %p183 = scmp.ne.s32.totalorder %s175, %s177
      %p184 = scmp.eq.s32.totalorder %s31, 1
      %p185 = por %p183, %p184
      %p186 = scmp.ne.s32.totalorder %s177, %s178
      %p187 = scmp.eq.s32.totalorder %s31, 0
      %p188 = por %p186, %p187
      %p189 = scmp.ne.s32.totalorder %s177, %s178
      %p190 = scmp.eq.s32.totalorder %s32, 1
      %p191 = por %p189, %p190
      %p193 = scmp.ne.s32.totalorder %s178, %s192
      %p194 = scmp.eq.s32.totalorder %s32, 0
      %p195 = por %p193, %p194
      %s197 = sadd.s32 %s196, 1
      %p200 = scmp.eq.s32.totalorder %s26, 1
      %p201 = scmp.ne.s32.totalorder %s196, %s198
      %p202 = scmp.eq.s32.totalorder %s26, 0
      %p203 = por %p201, %p202
      %p204 = scmp.ne.s32.totalorder %s196, %s198
      %p205 = scmp.eq.s32.totalorder %s31, 1
      %p206 = por %p204, %p205
      %p207 = scmp.ne.s32.totalorder %s198, %s199
      %p208 = scmp.eq.s32.totalorder %s31, 0
      %p209 = por %p207, %p208
      %p210 = scmp.ne.s32.totalorder %s198, %s199
      %p211 = scmp.eq.s32.totalorder %s32, 1
      %p212 = por %p210, %p211
      %p214 = scmp.ne.s32.totalorder %s199, %s213
      %p215 = scmp.eq.s32.totalorder %s32, 0
      %p216 = por %p214, %p215
      %s218 = sadd.s32 %s217, 1
      %p221 = scmp.eq.s32.totalorder %s26, 1
      %p222 = scmp.ne.s32.totalorder %s217, %s219
      %p223 = scmp.eq.s32.totalorder %s26, 0
      %p224 = por %p222, %p223
      %p225 = scmp.ne.s32.totalorder %s217, %s219
      %p226 = scmp.eq.s32.totalorder %s31, 1
      %p227 = por %p225, %p226
      %p228 = scmp.ne.s32.totalorder %s219, %s220
      %p229 = scmp.eq.s32.totalorder %s31, 0
      %p230 = por %p228, %p229
      %p231 = scmp.ne.s32.totalorder %s219, %s220
      %p232 = scmp.eq.s32.totalorder %s32, 1
      %p233 = por %p231, %p232
      %p235 = scmp.ne.s32.totalorder %s220, %s234
      %p236 = scmp.eq.s32.totalorder %s32, 0
      %p237 = por %p235, %p236
      %s239 = sadd.s32 %s238, 1
      %p242 = scmp.eq.s32.totalorder %s26, 1
      %p243 = scmp.ne.s32.totalorder %s238, %s240
      %p244 = scmp.eq.s32.totalorder %s26, 0
      %p245 = por %p243, %p244
      %p246 = scmp.ne.s32.totalorder %s238, %s240
      %p247 = scmp.eq.s32.totalorder %s31, 1
      %p248 = por %p246, %p247
      %p249 = scmp.ne.s32.totalorder %s240, %s241
      %p250 = scmp.eq.s32.totalorder %s31, 0
      %p251 = por %p249, %p250
      %p252 = scmp.ne.s32.totalorder %s240, %s241
      %p253 = scmp.eq.s32.totalorder %s32, 1
      %p254 = por %p252, %p253
      %p256 = scmp.ne.s32.totalorder %s241, %s255
      %p257 = scmp.eq.s32.totalorder %s32, 0
      %p258 = por %p256, %p257
      %s260 = sadd.s32 %s259, 1
      %p263 = scmp.eq.s32.totalorder %s26, 1
      %p264 = scmp.ne.s32.totalorder %s259, %s261
      %p265 = scmp.eq.s32.totalorder %s26, 0
      %p266 = por %p264, %p265
      %p267 = scmp.ne.s32.totalorder %s259, %s261
      %p268 = scmp.eq.s32.totalorder %s31, 1
      %p269 = por %p267, %p268
      %p270 = scmp.ne.s32.totalorder %s261, %s262
      %p271 = scmp.eq.s32.totalorder %s31, 0
      %p272 = por %p270, %p271
      %p273 = scmp.ne.s32.totalorder %s261, %s262
      %p274 = scmp.eq.s32.totalorder %s32, 1
      %p275 = por %p273, %p274
      %p277 = scmp.ne.s32.totalorder %s262, %s276
      %p278 = scmp.eq.s32.totalorder %s32, 0
      %p279 = por %p277, %p278
      %s281 = sadd.s32 %s280, 1
      %p284 = scmp.eq.s32.totalorder %s26, 1
      %p285 = scmp.ne.s32.totalorder %s280, %s282
      %p286 = scmp.eq.s32.totalorder %s26, 0
      %p287 = por %p285, %p286
      %p288 = scmp.ne.s32.totalorder %s280, %s282
      %p289 = scmp.eq.s32.totalorder %s31, 1
      %p290 = por %p288, %p289
      %p291 = scmp.ne.s32.totalorder %s282, %s283
      %p292 = scmp.eq.s32.totalorder %s31, 0
      %p293 = por %p291, %p292
      %p294 = scmp.ne.s32.totalorder %s282, %s283
      %p295 = scmp.eq.s32.totalorder %s32, 1
      %p296 = por %p294, %p295
      %p298 = scmp.ne.s32.totalorder %s283, %s297
      %p299 = scmp.eq.s32.totalorder %s32, 0
      %p300 = por %p298, %p299
      %s302 = sadd.s32 %s301, 1
      %p305 = scmp.eq.s32.totalorder %s26, 1
      %p306 = scmp.ne.s32.totalorder %s301, %s303
      %p307 = scmp.eq.s32.totalorder %s26, 0
      %p308 = por %p306, %p307
      %p309 = scmp.ne.s32.totalorder %s301, %s303
      %p310 = scmp.eq.s32.totalorder %s31, 1
      %p311 = por %p309, %p310
      %p312 = scmp.ne.s32.totalorder %s303, %s304
      %p313 = scmp.eq.s32.totalorder %s31, 0
      %p314 = por %p312, %p313
      %p315 = scmp.ne.s32.totalorder %s303, %s304
      %p316 = scmp.eq.s32.totalorder %s32, 1
      %p317 = por %p315, %p316
      %p319 = scmp.ne.s32.totalorder %s304, %s318
      %p320 = scmp.eq.s32.totalorder %s32, 0
      %p321 = por %p319, %p320
      %s323 = sadd.s32 %s322, 1
      %p326 = scmp.eq.s32.totalorder %s26, 1
      %p327 = scmp.ne.s32.totalorder %s322, %s324
      %p328 = scmp.eq.s32.totalorder %s26, 0
      %p329 = por %p327, %p328
      %p330 = scmp.ne.s32.totalorder %s322, %s324
      %p331 = scmp.eq.s32.totalorder %s31, 1
      %p332 = por %p330, %p331
      %p333 = scmp.ne.s32.totalorder %s324, %s325
      %p334 = scmp.eq.s32.totalorder %s31, 0
      %p335 = por %p333, %p334
      %p336 = scmp.ne.s32.totalorder %s324, %s325
      %p337 = scmp.eq.s32.totalorder %s32, 1
      %p338 = por %p336, %p337
      %p340 = scmp.ne.s32.totalorder %s325, %s339
      %p341 = scmp.eq.s32.totalorder %s32, 0
      %p342 = por %p340, %p341
      %s344 = sadd.s32 %s343, 1
      %p347 = scmp.eq.s32.totalorder %s26, 1
      %p348 = scmp.ne.s32.totalorder %s343, %s345
      %p349 = scmp.eq.s32.totalorder %s26, 0
      %p350 = por %p348, %p349
      %p351 = scmp.ne.s32.totalorder %s343, %s345
      %p352 = scmp.eq.s32.totalorder %s31, 1
      %p353 = por %p351, %p352
      %p354 = scmp.ne.s32.totalorder %s345, %s346
      %p355 = scmp.eq.s32.totalorder %s31, 0
      %p356 = por %p354, %p355
      %p357 = scmp.ne.s32.totalorder %s345, %s346
      %p358 = scmp.eq.s32.totalorder %s32, 1
      %p359 = por %p357, %p358
      %p361 = scmp.ne.s32.totalorder %s346, %s360
      %p362 = scmp.eq.s32.totalorder %s32, 0
      %p363 = por %p361, %p362
      %s364 = ssub.s32 %s26, %s33
      %p365 = scmp.eq.s32.totalorder %s364, 0
      %s367 = sadd.s32 %s366, 1
      %s368 = scalar_select %p365, %s366, %s367
      %p371 = pneg %p365
      %p372 = scmp.eq.s32.totalorder %s26, 1
      %p373 = por %p371, %p372
      %p374 = scmp.ne.s32.totalorder %s366, %s369
      %p375 = scmp.eq.s32.totalorder %s26, 0
      %p376 = por %p374, %p375
      %p377 = scmp.ne.s32.totalorder %s366, %s369
      %p378 = scmp.eq.s32.totalorder %s31, 1
      %p379 = por %p377, %p378
      %p380 = scmp.ne.s32.totalorder %s369, %s370
      %p381 = scmp.eq.s32.totalorder %s31, 0
      %p382 = por %p380, %p381
      %p383 = scmp.ne.s32.totalorder %s369, %s370
      %p384 = scmp.eq.s32.totalorder %s32, 1
      %p385 = por %p383, %p384
      %p387 = scmp.ne.s32.totalorder %s370, %s386
      %p388 = scmp.eq.s32.totalorder %s32, 0
      %p389 = por %p387, %p388
      %p390 = scmp.le.s32.totalorder 1, %s26
      %p391 = scmp.lt.s32.totalorder %s26, 3
      %p392 = pnand %p390, %p391
      %p393 = pneg %p392
      // Predicated region
      $region9: #{tpu_custom_call.1} parent=5 // pred_check
        _
      $region10: #{tpu_custom_call.1} parent=5 // pred_check_branch
        %395 = sbr.rel (%p392) target = $region12
      $region11: #{tpu_custom_call.1} parent=5 // pred_region
        %s396 = ssub.s32 %s26, 1
        // Predicated region
        $region13: #{tpu_custom_call.1} parent=11 // pred_check
          %p397 = pneg %p125
        $region14: #{tpu_custom_call.1} parent=11 // pred_check_branch
          %399 = sbr.rel (%p397) target = $region16
        $region15: #{tpu_custom_call.1} parent=11 // pred_region
          _
        $region16: #{tpu_custom_call.1} parent=11 // pred_fallthru
          _
        // Predicated region
        $region17: #{tpu_custom_call.1} parent=11 // pred_check
          %p400 = pneg %p146
        $region18: #{tpu_custom_call.1} parent=11 // pred_check_branch
          %402 = sbr.rel (%p400) target = $region20
        $region19: #{tpu_custom_call.1} parent=11 // pred_region
          _
        $region20: #{tpu_custom_call.1} parent=11 // pred_fallthru
          _
        // Predicated region
        $region21: #{tpu_custom_call.1} parent=11 // pred_check
          %p403 = pneg %p167
        $region22: #{tpu_custom_call.1} parent=11 // pred_check_branch
          %405 = sbr.rel (%p403) target = $region24
        $region23: #{tpu_custom_call.1} parent=11 // pred_region
          _
        $region24: #{tpu_custom_call.1} parent=11 // pred_fallthru
          _
        // Predicated region
        $region25: #{tpu_custom_call.1} parent=11 // pred_check
          %p406 = pneg %p188
        $region26: #{tpu_custom_call.1} parent=11 // pred_check_branch
          %408 = sbr.rel (%p406) target = $region28
        $region27: #{tpu_custom_call.1} parent=11 // pred_region
          _
        $region28: #{tpu_custom_call.1} parent=11 // pred_fallthru
          _
        // Predicated region
        $region29: #{tpu_custom_call.1} parent=11 // pred_check
          %p409 = pneg %p209
        $region30: #{tpu_custom_call.1} parent=11 // pred_check_branch
          %411 = sbr.rel (%p409) target = $region32
        $region31: #{tpu_custom_call.1} parent=11 // pred_region
          _
        $region32: #{tpu_custom_call.1} parent=11 // pred_fallthru
          _
        // Predicated region
        $region33: #{tpu_custom_call.1} parent=11 // pred_check
          %p412 = pneg %p230
        $region34: #{tpu_custom_call.1} parent=11 // pred_check_branch
          %414 = sbr.rel (%p412) target = $region36
        $region35: #{tpu_custom_call.1} parent=11 // pred_region
          _
        $region36: #{tpu_custom_call.1} parent=11 // pred_fallthru
          _
        // Predicated region
        $region37: #{tpu_custom_call.1} parent=11 // pred_check
          %p415 = pneg %p251
        $region38: #{tpu_custom_call.1} parent=11 // pred_check_branch
          %417 = sbr.rel (%p415) target = $region40
        $region39: #{tpu_custom_call.1} parent=11 // pred_region
          %s419 = ssub.s32 12288, 12288
          %420 = vsyncadd [#allocation3], %s419
          %s421 = sshll.u32 [#allocation2], 4
          %s422 = int_to_ptr.vmem [resolvable:$true] %s421
          %427 = dma.hbm_to_vmem [thread:$0]  %s9, 12288, %s422, [#allocation3], 128, 128, 8
        $region40: #{tpu_custom_call.1} parent=11 // pred_fallthru
          _
        // Predicated region
        $region41: #{tpu_custom_call.1} parent=11 // pred_check
          %p428 = pneg %p272
        $region42: #{tpu_custom_call.1} parent=11 // pred_check_branch
          %430 = sbr.rel (%p428) target = $region44
        $region43: #{tpu_custom_call.1} parent=11 // pred_region
          %s432 = ssub.s32 12288, 12288
          %433 = vsyncadd [#allocation6], %s432
          %s434 = sshll.u32 [#allocation5], 4
          %s435 = int_to_ptr.vmem [resolvable:$true] %s434
          %440 = dma.hbm_to_vmem [thread:$0]  %s10, 12288, %s435, [#allocation6], 128, 128, 8
        $region44: #{tpu_custom_call.1} parent=11 // pred_fallthru
          _
        // Predicated region
        $region45: #{tpu_custom_call.1} parent=11 // pred_check
          %p441 = pneg %p293
        $region46: #{tpu_custom_call.1} parent=11 // pred_check_branch
          %443 = sbr.rel (%p441) target = $region48
        $region47: #{tpu_custom_call.1} parent=11 // pred_region
          %s445 = ssub.s32 12288, 12288
          %446 = vsyncadd [#allocation6], %s445
          %s447 = sshll.u32 [#allocation7], 4
          %s448 = int_to_ptr.vmem [resolvable:$true] %s447
          %453 = dma.hbm_to_vmem [thread:$0]  %s11, 12288, %s448, [#allocation6], 128, 128, 8
        $region48: #{tpu_custom_call.1} parent=11 // pred_fallthru
          _
        // Predicated region
        $region49: #{tpu_custom_call.1} parent=11 // pred_check
          %p454 = pneg %p314
        $region50: #{tpu_custom_call.1} parent=11 // pred_check_branch
          %456 = sbr.rel (%p454) target = $region52
        $region51: #{tpu_custom_call.1} parent=11 // pred_region
          _
        $region52: #{tpu_custom_call.1} parent=11 // pred_fallthru
          _
        // Predicated region
        $region53: #{tpu_custom_call.1} parent=11 // pred_check
          %p457 = pneg %p335
        $region54: #{tpu_custom_call.1} parent=11 // pred_check_branch
          %459 = sbr.rel (%p457) target = $region56
        $region55: #{tpu_custom_call.1} parent=11 // pred_region
          _
        $region56: #{tpu_custom_call.1} parent=11 // pred_fallthru
          _
        // Predicated region
        $region57: #{tpu_custom_call.1} parent=11 // pred_check
          %p460 = pneg %p356
        $region58: #{tpu_custom_call.1} parent=11 // pred_check_branch
          %462 = sbr.rel (%p460) target = $region60
        $region59: #{tpu_custom_call.1} parent=11 // pred_region
          _
        $region60: #{tpu_custom_call.1} parent=11 // pred_fallthru
          _
      $region12: #{tpu_custom_call.1} parent=5 // pred_fallthru
        _
      %p463 = scmp.lt.s32.totalorder %s26, 2
      // Predicated region
      $region61: #{tpu_custom_call.1} parent=5 // pred_check
        %p464 = pneg %p463
      $region62: #{tpu_custom_call.1} parent=5 // pred_check_branch
        %466 = sbr.rel (%p464) target = $region64
      $region63: #{tpu_custom_call.1} parent=5 // pred_region
        // Predicated region
        $region65: #{tpu_custom_call.1} parent=63 // pred_check
          %p467 = pneg %p46
        $region66: #{tpu_custom_call.1} parent=63 // pred_check_branch
          %469 = sbr.rel (%p467) target = $region68
        $region67: #{tpu_custom_call.1} parent=63 // pred_region
          %s470 = smul.u32 4, %s26
          %p471 = scmp.lt.s32.totalorder %s470, 7
          %s472 = scalar_select %p471, %s470, 7
          %s473 = smul.addr %s472, 6
          %s474 = smul.addr %s473, 4
          %s475 = scalar_lea.vmem %s0, %s474
          %s476 = smul.u32 4, %s26
        $region68: #{tpu_custom_call.1} parent=63 // pred_fallthru
          _
        // Predicated region
        $region69: #{tpu_custom_call.1} parent=63 // pred_check
          %p477 = pneg %p72
        $region70: #{tpu_custom_call.1} parent=63 // pred_check_branch
          %479 = sbr.rel (%p477) target = $region72
        $region71: #{tpu_custom_call.1} parent=63 // pred_region
          %s480 = smul.u32 4, %s26
          %p481 = scmp.lt.s32.totalorder %s480, 7
          %s482 = scalar_select %p481, %s480, 7
          %s483 = smul.addr %s482, 3
          %s484 = smul.addr %s483, 4
          %s485 = scalar_lea.vmem %s1, %s484
          %s486 = smul.u32 4, %s26
        $region72: #{tpu_custom_call.1} parent=63 // pred_fallthru
          _
        // Predicated region
        $region73: #{tpu_custom_call.1} parent=63 // pred_check
          %p487 = pneg %p98
        $region74: #{tpu_custom_call.1} parent=63 // pred_check_branch
          %489 = sbr.rel (%p487) target = $region76
        $region75: #{tpu_custom_call.1} parent=63 // pred_region
          %s490 = smul.u32 4, %s26
          %p491 = scmp.lt.s32.totalorder %s490, 7
          %s492 = scalar_select %p491, %s490, 7
          %s493 = smul.addr %s492, 3
          %s494 = smul.addr %s493, 4
          %s495 = scalar_lea.vmem %s2, %s494
          %s496 = smul.u32 4, %s26
        $region76: #{tpu_custom_call.1} parent=63 // pred_fallthru
          _
      $region64: #{tpu_custom_call.1} parent=5 // pred_fallthru
        _
      %p497 = scmp.le.s32.totalorder 1, %s26
      %p498 = scmp.lt.s32.totalorder %s26, 3
      %p499 = pnand %p497, %p498
      %p500 = pneg %p499
      // Predicated region
      $region77: #{tpu_custom_call.1} parent=5 // pred_check
        _
      $region78: #{tpu_custom_call.1} parent=5 // pred_check_branch
        %502 = sbr.rel (%p499) target = $region80
      $region79: #{tpu_custom_call.1} parent=5 // pred_region
        %s503 = ssub.s32 %s26, 1
        // Predicated region
        $region81: #{tpu_custom_call.1} parent=79 // pred_check
          %p504 = pneg %p251
        $region82: #{tpu_custom_call.1} parent=79 // pred_check_branch
          %506 = sbr.rel (%p504) target = $region84
        $region83: #{tpu_custom_call.1} parent=79 // pred_region
          %507 = dma.done [#allocation3], 12288
        $region84: #{tpu_custom_call.1} parent=79 // pred_fallthru
          _
        // Predicated region
        $region85: #{tpu_custom_call.1} parent=79 // pred_check
          %p508 = pneg %p272
        $region86: #{tpu_custom_call.1} parent=79 // pred_check_branch
          %510 = sbr.rel (%p508) target = $region88
        $region87: #{tpu_custom_call.1} parent=79 // pred_region
          %511 = dma.done [#allocation6], 12288
        $region88: #{tpu_custom_call.1} parent=79 // pred_fallthru
          _
        // Predicated region
        $region89: #{tpu_custom_call.1} parent=79 // pred_check
          %p512 = pneg %p293
        $region90: #{tpu_custom_call.1} parent=79 // pred_check_branch
          %514 = sbr.rel (%p512) target = $region92
        $region91: #{tpu_custom_call.1} parent=79 // pred_region
          %515 = dma.done [#allocation6], 12288
        $region92: #{tpu_custom_call.1} parent=79 // pred_fallthru
          _
        %s516 = smul.u32 4, %s31
        %p517 = scmp.lt.s32.totalorder %s516, 7
        %s518 = scalar_select %p517, %s516, 7
        %s519 = smul.addr %s518, 6
        %s520 = smul.addr %s519, 4
        %s521 = scalar_lea.vmem %s0, %s520
        %p522 = pneg %p52
        %p523 = pneg %p49
        %s524 = smul.u32 4, %s31
        %p525 = scmp.lt.s32.totalorder %s524, 7
        %s526 = scalar_select %p525, %s524, 7
        %s527 = smul.addr %s526, 3
        %s528 = smul.addr %s527, 4
        %s529 = scalar_lea.vmem %s1, %s528
        %p530 = pneg %p78
        %p531 = pneg %p75
        %s532 = smul.u32 4, %s31
        %p533 = scmp.lt.s32.totalorder %s532, 7
        %s534 = scalar_select %p533, %s532, 7
        %s535 = smul.addr %s534, 3
        %s536 = smul.addr %s535, 4
        %s537 = scalar_lea.vmem %s2, %s536
        %p538 = pneg %p104
        %p539 = pneg %p101
        %p540 = pneg %p125
        %p541 = pneg %p122
        %p542 = pneg %p146
        %p543 = pneg %p143
        %p544 = pneg %p167
        %p545 = pneg %p164
        %p546 = pneg %p188
        %p547 = pneg %p185
        %p548 = pneg %p209
        %p549 = pneg %p206
        %p550 = pneg %p230
        %p551 = pneg %p227
        %p552 = pneg %p251
        %p553 = pneg %p248
        %p554 = pneg %p272
        %p555 = pneg %p269
        %p556 = pneg %p293
        %p557 = pneg %p290
        %p558 = pneg %p314
        %p559 = pneg %p311
        %p560 = pneg %p335
        %p561 = pneg %p332
        %p562 = pneg %p356
        %p563 = pneg %p353
        %p564 = pneg %p382
        %p565 = pneg %p379
        %s566 = sand.u32 %s369, 1
        %s567 = scalar_lea.sflag [#allocation4], %s566
        %s568 = sand.u32 %s369, 1
        %s569 = smul.addr %s568, 4
        %s570 = scalar_lea.vmem [#allocation8], %s569
        %s571 = smul.u32 4, %s31
        %p572 = scmp.lt.s32.totalorder %s571, 7
        %s573 = scalar_select %p572, %s571, 7
        %s574 = smul.addr %s573, 6
        %s575 = smul.addr %s574, 4
        %s576 = scalar_lea.vmem %s0, %s575
        %s577 = smul.u32 4, %s31
        %s578 = smul.u32 4, %s31
        %p579 = scmp.lt.s32.totalorder %s578, 7
        %s580 = scalar_select %p579, %s578, 7
        %s581 = smul.addr %s580, 3
        %s582 = smul.addr %s581, 4
        %s583 = scalar_lea.vmem %s1, %s582
        %s584 = smul.u32 4, %s31
        %s585 = smul.u32 4, %s31
        %p586 = scmp.lt.s32.totalorder %s585, 7
        %s587 = scalar_select %p586, %s585, 7
        %s588 = smul.addr %s587, 3
        %s589 = smul.addr %s588, 4
        %s590 = scalar_lea.vmem %s2, %s589
        %s591 = smul.u32 4, %s31
        %v593 = vld [vmem:[%s576] sm:$0xf]
        %v594 = vld [vmem:[%s576 + $0x4] sm:$0xf]
        %v595 = vld [vmem:[%s576 + $0x8] sm:$0xf]
        %v596 = vld [vmem:[%s576 + $0xc] sm:$0xf]
        %v597 = vld [vmem:[%s576 + $0x10] sm:$0xf]
        %v598 = vld [vmem:[%s576 + $0x14] sm:$0xf]
        %v599 = vld [vmem:[%s576 + $0x18] sm:$0xf]
        %v600 = vld [vmem:[%s576 + $0x1c] sm:$0xf]
        %v601 = vld [vmem:[%s576 + $0x20] sm:$0xf]
        %v602 = vld [vmem:[%s576 + $0x24] sm:$0xf]
        %v603 = vld [vmem:[%s576 + $0x28] sm:$0xf]
        %v604 = vld [vmem:[%s576 + $0x2c] sm:$0xf]
        %v605 = vld [vmem:[%s576 + $0x30] sm:$0xf]
        %v606 = vld [vmem:[%s576 + $0x34] sm:$0xf]
        %v607 = vld [vmem:[%s576 + $0x38] sm:$0xf]
        %v608 = vld [vmem:[%s576 + $0x3c] sm:$0xf]
        %v609 = vld [vmem:[%s576 + $0x40] sm:$0xf]
        %v610 = vld [vmem:[%s576 + $0x44] sm:$0xf]
        %v611 = vld [vmem:[%s576 + $0x48] sm:$0xf]
        %v612 = vld [vmem:[%s576 + $0x4c] sm:$0xf]
        %v613 = vld [vmem:[%s576 + $0x50] sm:$0xf]
        %v614 = vld [vmem:[%s576 + $0x54] sm:$0xf]
        %v615 = vld [vmem:[%s576 + $0x58] sm:$0xf]
        %v616 = vld [vmem:[%s576 + $0x5c] sm:$0xf]
        %v617 = vld [vmem:[%s3] sm:$0xff]
        %v618 = vld [vmem:[%s3 + $0x8] sm:$0xff]
        %v643 = vunpack.c.l.b16 %v593
        %v644 = vunpack.c.l.b16 %v594
        %v645 = vunpack.c.l.b16 %v595
        %v646 = vunpack.c.l.b16 %v596
        %v647 = vunpack.c.l.b16 %v597
        %v648 = vunpack.c.l.b16 %v598
        %v649 = vunpack.c.l.b16 %v599
        %v650 = vunpack.c.l.b16 %v600
        %v651 = vunpack.c.l.b16 %v601
        %v652 = vunpack.c.l.b16 %v602
        %v653 = vunpack.c.l.b16 %v603
        %v654 = vunpack.c.l.b16 %v604
        %v655 = vunpack.c.l.b16 %v605
        %v656 = vunpack.c.l.b16 %v606
        %v657 = vunpack.c.l.b16 %v607
        %v658 = vunpack.c.l.b16 %v608
        %v659 = vunpack.c.l.b16 %v609
        %v660 = vunpack.c.l.b16 %v610
        %v661 = vunpack.c.l.b16 %v611
        %v662 = vunpack.c.l.b16 %v612
        %v663 = vunpack.c.l.b16 %v613
        %v664 = vunpack.c.l.b16 %v614
        %v665 = vunpack.c.l.b16 %v615
        %v666 = vunpack.c.l.b16 %v616
        %v667 = vpack.c.b16 %v644, %v643
        %v668 = vpack.c.b16 %v646, %v645
        %v669 = vpack.c.b16 %v648, %v647
        %v670 = vpack.c.b16 %v650, %v649
        %v671 = vpack.c.b16 %v652, %v651
        %v672 = vpack.c.b16 %v654, %v653
        %v673 = vpack.c.b16 %v656, %v655
        %v674 = vpack.c.b16 %v658, %v657
        %v675 = vpack.c.b16 %v660, %v659
        %v676 = vpack.c.b16 %v662, %v661
        %v677 = vpack.c.b16 %v664, %v663
        %v678 = vpack.c.b16 %v666, %v665
        %v681 = vunpack.c.l.b16 %v617
        %v682 = vunpack.c.h.b16 %v617
        %v683 = vunpack.c.l.b16 %v618
        %v684 = vunpack.c.h.b16 %v618
        %v685 = vpack.c.b16 %v683, %v681
        %v686 = vpack.c.b16 %v684, %v682
        %vm689 = vcmask 130048
        %v691 = vsel %vm689, %v667, 0
        %v694 = vsel %vm689, %v668, 0
        %v697 = vsel %vm689, %v669, 0
        %v700 = vsel %vm689, %v670, 0
        %v703 = vsel %vm689, %v671, 0
        %v706 = vsel %vm689, %v672, 0
        %v709 = vsel %vm689, %v673, 0
        %v712 = vsel %vm689, %v674, 0
        %v715 = vsel %vm689, %v675, 0
        %v718 = vsel %vm689, %v676, 0
        %v721 = vsel %vm689, %v677, 0
        %v724 = vsel %vm689, %v678, 0
        %726 = vmatprep.subr.bf16.mxu0 %v686
        %727 = vmatpush1.bf16.msra.mxu0 %v685
        %728 = vmatprep.subr.bf16.mxu0 0
        %729 = vmatpush1.bf16.msra.mxu0 0
        %730 = vmatprep.subr.bf16.mxu0 0
        %731 = vmatpush1.bf16.msra.mxu0 0
        %732 = vmatprep.subr.bf16.mxu0 0
        %733 = vmatpush1.bf16.msra.mxu0 0
        %734 = vmatprep.subr.bf16.mxu0 0
        %735 = vmatpush1.bf16.msra.mxu0 0
        %736 = vmatprep.subr.bf16.mxu0 0
        %737 = vmatpush1.bf16.msra.mxu0 0
        %738 = vmatprep.subr.bf16.mxu0 0
        %739 = vmatpush1.bf16.msra.mxu0 0
        %740 = vmatprep.subr.bf16.mxu0 0
        %741 = vmatpush1.bf16.msra.mxu0 0
        %742 = vmatprep.subr.bf16.mxu0 0
        %743 = vmatpush1.bf16.msra.mxu0 0
        %744 = vmatprep.subr.bf16.mxu0 0
        %745 = vmatpush1.bf16.msra.mxu0 0
        %746 = vmatprep.subr.bf16.mxu0 0
        %747 = vmatpush1.bf16.msra.mxu0 0
        %748 = vmatprep.subr.bf16.mxu0 0
        %749 = vmatpush1.bf16.msra.mxu0 0
        %750 = vmatprep.subr.bf16.mxu0 0
        %751 = vmatpush1.bf16.msra.mxu0 0
        %752 = vmatprep.subr.bf16.mxu0 0
        %753 = vmatpush1.bf16.msra.mxu0 0
        %754 = vmatprep.subr.bf16.mxu0 0
        %755 = vmatpush1.bf16.msra.mxu0 0
        %756 = vmatprep.subr.bf16.mxu0 0
        %757 = vmatpush1.bf16.msra.mxu0 0
        %758 = vmatprep.mubr.bf16.mxu0 0
        %759 = vmatmul.mubr.bf16.gmra.mrb[0].mxu0 %v691
        %v760 = vpop.f32.mrb[0].mxu0
        %v761 = vadd.f32 0.0, %v760
        %v762 = vpop.f32.mrb[0].mxu0
        %v763 = vadd.f32 0.0, %v762
        %v764 = vpop.f32.mrb[0].mxu0
        %v765 = vadd.f32 0.0, %v764
        %v766 = vpop.f32.mrb[0].mxu0
        %v767 = vadd.f32 0.0, %v766
        %768 = vmatprep.mubr.bf16.mxu0 0
        %769 = vmatmul.mubr.bf16.gmra.mrb[0].mxu0 %v694
        %v770 = vpop.f32.mrb[0].mxu0
        %v771 = vadd.f32 0.0, %v770
        %v772 = vpop.f32.mrb[0].mxu0
        %v773 = vadd.f32 0.0, %v772
        %v774 = vpop.f32.mrb[0].mxu0
        %v775 = vadd.f32 0.0, %v774
        %v776 = vpop.f32.mrb[0].mxu0
        %v777 = vadd.f32 0.0, %v776
        %778 = vmatprep.mubr.bf16.mxu0 0
        %779 = vmatmul.mubr.bf16.gmra.mrb[0].mxu0 %v697
        %v780 = vpop.f32.mrb[0].mxu0
        %v781 = vadd.f32 0.0, %v780
        %v782 = vpop.f32.mrb[0].mxu0
        %v783 = vadd.f32 0.0, %v782
        %v784 = vpop.f32.mrb[0].mxu0
        %v785 = vadd.f32 0.0, %v784
        %v786 = vpop.f32.mrb[0].mxu0
        %v787 = vadd.f32 0.0, %v786
        %788 = vmatprep.mubr.bf16.mxu0 0
        %789 = vmatmul.mubr.bf16.gmra.mrb[0].mxu0 %v700
        %v790 = vpop.f32.mrb[0].mxu0
        %v791 = vadd.f32 0.0, %v790
        %v792 = vpop.f32.mrb[0].mxu0
        %v793 = vadd.f32 0.0, %v792
        %v794 = vpop.f32.mrb[0].mxu0
        %v795 = vadd.f32 0.0, %v794
        %v796 = vpop.f32.mrb[0].mxu0
        %v797 = vadd.f32 0.0, %v796
        %798 = vmatprep.mubr.bf16.mxu0 0
        %799 = vmatmul.mubr.bf16.gmra.mrb[0].mxu0 %v703
        %v800 = vpop.f32.mrb[0].mxu0
        %v801 = vadd.f32 0.0, %v800
        %v802 = vpop.f32.mrb[0].mxu0
        %v803 = vadd.f32 0.0, %v802
        %v804 = vpop.f32.mrb[0].mxu0
        %v805 = vadd.f32 0.0, %v804
        %v806 = vpop.f32.mrb[0].mxu0
        %v807 = vadd.f32 0.0, %v806
        %808 = vmatprep.mubr.bf16.mxu0 0
        %809 = vmatmul.mubr.bf16.gmra.mrb[0].mxu0 %v706
        %v810 = vpop.f32.mrb[0].mxu0
        %v811 = vadd.f32 0.0, %v810
        %v812 = vpop.f32.mrb[0].mxu0
        %v813 = vadd.f32 0.0, %v812
        %v814 = vpop.f32.mrb[0].mxu0
        %v815 = vadd.f32 0.0, %v814
        %v816 = vpop.f32.mrb[0].mxu0
        %v817 = vadd.f32 0.0, %v816
        %818 = vmatprep.mubr.bf16.mxu0 0
        %819 = vmatmul.mubr.bf16.gmra.mrb[0].mxu0 %v709
        %v820 = vpop.f32.mrb[0].mxu0
        %v821 = vadd.f32 0.0, %v820
        %v822 = vpop.f32.mrb[0].mxu0
        %v823 = vadd.f32 0.0, %v822
        %v824 = vpop.f32.mrb[0].mxu0
        %v825 = vadd.f32 0.0, %v824
        %v826 = vpop.f32.mrb[0].mxu0
        %v827 = vadd.f32 0.0, %v826
        %828 = vmatprep.mubr.bf16.mxu0 0
        %829 = vmatmul.mubr.bf16.gmra.mrb[0].mxu0 %v712
        %v830 = vpop.f32.mrb[0].mxu0
        %v831 = vadd.f32 0.0, %v830
        %v832 = vpop.f32.mrb[0].mxu0
        %v833 = vadd.f32 0.0, %v832
        %v834 = vpop.f32.mrb[0].mxu0
        %v835 = vadd.f32 0.0, %v834
        %v836 = vpop.f32.mrb[0].mxu0
        %v837 = vadd.f32 0.0, %v836
        %838 = vmatprep.mubr.bf16.mxu0 0
        %839 = vmatmul.mubr.bf16.gmra.mrb[0].mxu0 %v715
        %v840 = vpop.f32.mrb[0].mxu0
        %v841 = vadd.f32 0.0, %v840
        %v842 = vpop.f32.mrb[0].mxu0
        %v843 = vadd.f32 0.0, %v842
        %v844 = vpop.f32.mrb[0].mxu0
        %v845 = vadd.f32 0.0, %v844
        %v846 = vpop.f32.mrb[0].mxu0
        %v847 = vadd.f32 0.0, %v846
        %848 = vmatprep.mubr.bf16.mxu0 0
        %849 = vmatmul.mubr.bf16.gmra.mrb[0].mxu0 %v718
        %v850 = vpop.f32.mrb[0].mxu0
        %v851 = vadd.f32 0.0, %v850
        %v852 = vpop.f32.mrb[0].mxu0
        %v853 = vadd.f32 0.0, %v852
        %v854 = vpop.f32.mrb[0].mxu0
        %v855 = vadd.f32 0.0, %v854
        %v856 = vpop.f32.mrb[0].mxu0
        %v857 = vadd.f32 0.0, %v856
        %858 = vmatprep.mubr.bf16.mxu0 0
        %859 = vmatmul.mubr.bf16.gmra.mrb[0].mxu0 %v721
        %v860 = vpop.f32.mrb[0].mxu0
        %v861 = vadd.f32 0.0, %v860
        %v862 = vpop.f32.mrb[0].mxu0
        %v863 = vadd.f32 0.0, %v862
        %v864 = vpop.f32.mrb[0].mxu0
        %v865 = vadd.f32 0.0, %v864
        %v866 = vpop.f32.mrb[0].mxu0
        %v867 = vadd.f32 0.0, %v866
        %868 = vmatprep.mubr.bf16.mxu0 0
        %869 = vmatmul.mubr.bf16.gmra.mrb[0].mxu0 %v724
        %v870 = vpop.f32.mrb[0].mxu0
        %v871 = vadd.f32 0.0, %v870
        %v872 = vpop.f32.mrb[0].mxu0
        %v873 = vadd.f32 0.0, %v872
        %v874 = vpop.f32.mrb[0].mxu0
        %v875 = vadd.f32 0.0, %v874
        %v876 = vpop.f32.mrb[0].mxu0
        %v877 = vadd.f32 0.0, %v876
        %878 = vdwg.mxu0
        %v879 = vld [vmem:[%s6] sm:$0xff]
        %v880 = vld [vmem:[%s6 + $0x8] sm:$0xff]
        %v881 = vld [vmem:[%s6 + $0x10] sm:$0xff]
        %v882 = vld [vmem:[%s6 + $0x18] sm:$0xff]
        %v883 = vmul.f32 %v761, %v879
        %v884 = vmul.f32 %v763, %v880
        %v885 = vmul.f32 %v765, %v881
        %v886 = vmul.f32 %v767, %v882
        %v887 = vmul.f32 %v791, %v879
        %v888 = vmul.f32 %v793, %v880
        %v889 = vmul.f32 %v795, %v881
        %v890 = vmul.f32 %v797, %v882
        %v891 = vmul.f32 %v821, %v879
        %v892 = vmul.f32 %v823, %v880
        %v893 = vmul.f32 %v825, %v881
        %v894 = vmul.f32 %v827, %v882
        %v895 = vmul.f32 %v851, %v879
        %v896 = vmul.f32 %v853, %v880
        %v897 = vmul.f32 %v855, %v881
        %v898 = vmul.f32 %v857, %v882
        %v899 = vadd.f32 %v883, %v885
        %v900 = vrot.slane %v899, 4
        %v901 = vadd.f32 %v899, %v900
        %v902 = vrot.slane %v901, 2
        %v903 = vadd.f32 %v901, %v902
        %v904 = vrot.slane %v903, 1
        %v905 = vadd.f32 %v903, %v904
        %v906 = vadd.f32 %v884, %v886
        %v907 = vrot.slane %v906, 4
        %v908 = vadd.f32 %v906, %v907
        %v909 = vrot.slane %v908, 2
        %v910 = vadd.f32 %v908, %v909
        %v911 = vrot.slane %v910, 1
        %v912 = vadd.f32 %v910, %v911
        %v913 = vadd.f32 %v887, %v889
        %v914 = vrot.slane %v913, 4
        %v915 = vadd.f32 %v913, %v914
        %v916 = vrot.slane %v915, 2
        %v917 = vadd.f32 %v915, %v916
        %v918 = vrot.slane %v917, 1
        %v919 = vadd.f32 %v917, %v918
        %v920 = vadd.f32 %v888, %v890
        %v921 = vrot.slane %v920, 4
        %v922 = vadd.f32 %v920, %v921
        %v923 = vrot.slane %v922, 2
        %v924 = vadd.f32 %v922, %v923
        %v925 = vrot.slane %v924, 1
        %v926 = vadd.f32 %v924, %v925
        %v927 = vadd.f32 %v891, %v893
        %v928 = vrot.slane %v927, 4
        %v929 = vadd.f32 %v927, %v928
        %v930 = vrot.slane %v929, 2
        %v931 = vadd.f32 %v929, %v930
        %v932 = vrot.slane %v931, 1
        %v933 = vadd.f32 %v931, %v932
        %v934 = vadd.f32 %v892, %v894
        %v935 = vrot.slane %v934, 4
        %v936 = vadd.f32 %v934, %v935
        %v937 = vrot.slane %v936, 2
        %v938 = vadd.f32 %v936, %v937
        %v939 = vrot.slane %v938, 1
        %v940 = vadd.f32 %v938, %v939
        %v941 = vadd.f32 %v895, %v897
        %v942 = vrot.slane %v941, 4
        %v943 = vadd.f32 %v941, %v942
        %v944 = vrot.slane %v943, 2
        %v945 = vadd.f32 %v943, %v944
        %v946 = vrot.slane %v945, 1
        %v947 = vadd.f32 %v945, %v946
        %v948 = vadd.f32 %v896, %v898
        %v949 = vrot.slane %v948, 4
        %v950 = vadd.f32 %v948, %v949
        %v951 = vrot.slane %v950, 2
        %v952 = vadd.f32 %v950, %v951
        %v953 = vrot.slane %v952, 1
        %v954 = vadd.f32 %v952, %v953
        %v955 = vld [vmem:[#allocation2] sm:$0xff]
        %v956 = vld [vmem:[#allocation2 + $0x8] sm:$0xff]
        %v957 = vld [vmem:[#allocation2 + $0x10] sm:$0xff]
        %v958 = vld [vmem:[#allocation2 + $0x18] sm:$0xff]
        %v959 = vld [vmem:[#allocation2 + $0x20] sm:$0xff]
        %v960 = vld [vmem:[#allocation2 + $0x28] sm:$0xff]
        %v961 = vld [vmem:[#allocation2 + $0x30] sm:$0xff]
        %v962 = vld [vmem:[#allocation2 + $0x38] sm:$0xff]
        %v963 = vld [vmem:[#allocation2 + $0x40] sm:$0xff]
        %v964 = vld [vmem:[#allocation2 + $0x48] sm:$0xff]
        %v965 = vld [vmem:[#allocation2 + $0x50] sm:$0xff]
        %v966 = vld [vmem:[#allocation2 + $0x58] sm:$0xff]
        %v967 = vld [vmem:[#allocation2 + $0x60] sm:$0xff]
        %v968 = vld [vmem:[#allocation2 + $0x68] sm:$0xff]
        %v969 = vld [vmem:[#allocation2 + $0x70] sm:$0xff]
        %v970 = vld [vmem:[#allocation2 + $0x78] sm:$0xff]
        %v971 = vld [vmem:[#allocation2 + $0x80] sm:$0xff]
        %v972 = vld [vmem:[#allocation2 + $0x88] sm:$0xff]
        %v973 = vld [vmem:[#allocation2 + $0x90] sm:$0xff]
        %v974 = vld [vmem:[#allocation2 + $0x98] sm:$0xff]
        %v975 = vld [vmem:[#allocation2 + $0xa0] sm:$0xff]
        %v976 = vld [vmem:[#allocation2 + $0xa8] sm:$0xff]
        %v977 = vld [vmem:[#allocation2 + $0xb0] sm:$0xff]
        %v978 = vld [vmem:[#allocation2 + $0xb8] sm:$0xff]
        %v979 = vld [vmem:[#allocation2 + $0xc0] sm:$0xff]
        %v980 = vld [vmem:[#allocation2 + $0xc8] sm:$0xff]
        %v981 = vld [vmem:[#allocation2 + $0xd0] sm:$0xff]
        %v982 = vld [vmem:[#allocation2 + $0xd8] sm:$0xff]
        %v983 = vld [vmem:[#allocation2 + $0xe0] sm:$0xff]
        %v984 = vld [vmem:[#allocation2 + $0xe8] sm:$0xff]
        %v985 = vld [vmem:[#allocation2 + $0xf0] sm:$0xff]
        %v986 = vld [vmem:[#allocation2 + $0xf8] sm:$0xff]
        %v987 = vmul.f32 %v771, %v879
        %v988 = vmul.f32 %v773, %v880
        %v989 = vmul.f32 %v775, %v881
        %v990 = vmul.f32 %v777, %v882
        %v991 = vmul.f32 %v801, %v879
        %v992 = vmul.f32 %v803, %v880
        %v993 = vmul.f32 %v805, %v881
        %v994 = vmul.f32 %v807, %v882
        %v995 = vmul.f32 %v831, %v879
        %v996 = vmul.f32 %v833, %v880
        %v997 = vmul.f32 %v835, %v881
        %v998 = vmul.f32 %v837, %v882
        %v999 = vmul.f32 %v861, %v879
        %v1000 = vmul.f32 %v863, %v880
        %v1001 = vmul.f32 %v865, %v881
        %v1002 = vmul.f32 %v867, %v882
        %v1003 = vadd.f32 %v987, %v989
        %v1004 = vrot.slane %v1003, 4
        %v1005 = vadd.f32 %v1003, %v1004
        %v1006 = vrot.slane %v1005, 2
        %v1007 = vadd.f32 %v1005, %v1006
        %v1008 = vrot.slane %v1007, 1
        %v1009 = vadd.f32 %v1007, %v1008
        %v1010 = vadd.f32 %v988, %v990
        %v1011 = vrot.slane %v1010, 4
        %v1012 = vadd.f32 %v1010, %v1011
        %v1013 = vrot.slane %v1012, 2
        %v1014 = vadd.f32 %v1012, %v1013
        %v1015 = vrot.slane %v1014, 1
        %v1016 = vadd.f32 %v1014, %v1015
        %v1017 = vadd.f32 %v991, %v993
        %v1018 = vrot.slane %v1017, 4
        %v1019 = vadd.f32 %v1017, %v1018
        %v1020 = vrot.slane %v1019, 2
        %v1021 = vadd.f32 %v1019, %v1020
        %v1022 = vrot.slane %v1021, 1
        %v1023 = vadd.f32 %v1021, %v1022
        %v1024 = vadd.f32 %v992, %v994
        %v1025 = vrot.slane %v1024, 4
        %v1026 = vadd.f32 %v1024, %v1025
        %v1027 = vrot.slane %v1026, 2
        %v1028 = vadd.f32 %v1026, %v1027
        %v1029 = vrot.slane %v1028, 1
        %v1030 = vadd.f32 %v1028, %v1029
        %v1031 = vadd.f32 %v995, %v997
        %v1032 = vrot.slane %v1031, 4
        %v1033 = vadd.f32 %v1031, %v1032
        %v1034 = vrot.slane %v1033, 2
        %v1035 = vadd.f32 %v1033, %v1034
        %v1036 = vrot.slane %v1035, 1
        %v1037 = vadd.f32 %v1035, %v1036
        %v1038 = vadd.f32 %v996, %v998
        %v1039 = vrot.slane %v1038, 4
        %v1040 = vadd.f32 %v1038, %v1039
        %v1041 = vrot.slane %v1040, 2
        %v1042 = vadd.f32 %v1040, %v1041
        %v1043 = vrot.slane %v1042, 1
        %v1044 = vadd.f32 %v1042, %v1043
        %v1045 = vadd.f32 %v999, %v1001
        %v1046 = vrot.slane %v1045, 4
        %v1047 = vadd.f32 %v1045, %v1046
        %v1048 = vrot.slane %v1047, 2
        %v1049 = vadd.f32 %v1047, %v1048
        %v1050 = vrot.slane %v1049, 1
        %v1051 = vadd.f32 %v1049, %v1050
        %v1052 = vadd.f32 %v1000, %v1002
        %v1053 = vrot.slane %v1052, 4
        %v1054 = vadd.f32 %v1052, %v1053
        %v1055 = vrot.slane %v1054, 2
        %v1056 = vadd.f32 %v1054, %v1055
        %v1057 = vrot.slane %v1056, 1
        %v1058 = vadd.f32 %v1056, %v1057
        %s1059 = scalar_lea.vmem [#allocation2], 256
        %v1060 = vld [vmem:[%s1059] sm:$0xff]
        %v1061 = vld [vmem:[%s1059 + $0x8] sm:$0xff]
        %v1062 = vld [vmem:[%s1059 + $0x10] sm:$0xff]
        %v1063 = vld [vmem:[%s1059 + $0x18] sm:$0xff]
        %v1064 = vld [vmem:[%s1059 + $0x20] sm:$0xff]
        %v1065 = vld [vmem:[%s1059 + $0x28] sm:$0xff]
        %v1066 = vld [vmem:[%s1059 + $0x30] sm:$0xff]
        %v1067 = vld [vmem:[%s1059 + $0x38] sm:$0xff]
        %v1068 = vld [vmem:[%s1059 + $0x40] sm:$0xff]
        %v1069 = vld [vmem:[%s1059 + $0x48] sm:$0xff]
        %v1070 = vld [vmem:[%s1059 + $0x50] sm:$0xff]
        %v1071 = vld [vmem:[%s1059 + $0x58] sm:$0xff]
        %v1072 = vld [vmem:[%s1059 + $0x60] sm:$0xff]
        %v1073 = vld [vmem:[%s1059 + $0x68] sm:$0xff]
        %v1074 = vld [vmem:[%s1059 + $0x70] sm:$0xff]
        %v1075 = vld [vmem:[%s1059 + $0x78] sm:$0xff]
        %v1076 = vld [vmem:[%s1059 + $0x80] sm:$0xff]
        %v1077 = vld [vmem:[%s1059 + $0x88] sm:$0xff]
        %v1078 = vld [vmem:[%s1059 + $0x90] sm:$0xff]
        %v1079 = vld [vmem:[%s1059 + $0x98] sm:$0xff]
        %v1080 = vld [vmem:[%s1059 + $0xa0] sm:$0xff]
        %v1081 = vld [vmem:[%s1059 + $0xa8] sm:$0xff]
        %v1082 = vld [vmem:[%s1059 + $0xb0] sm:$0xff]
        %v1083 = vld [vmem:[%s1059 + $0xb8] sm:$0xff]
        %v1084 = vld [vmem:[%s1059 + $0xc0] sm:$0xff]
        %v1085 = vld [vmem:[%s1059 + $0xc8] sm:$0xff]
        %v1086 = vld [vmem:[%s1059 + $0xd0] sm:$0xff]
        %v1087 = vld [vmem:[%s1059 + $0xd8] sm:$0xff]
        %v1088 = vld [vmem:[%s1059 + $0xe0] sm:$0xff]
        %v1089 = vld [vmem:[%s1059 + $0xe8] sm:$0xff]
        %v1090 = vld [vmem:[%s1059 + $0xf0] sm:$0xff]
        %v1091 = vld [vmem:[%s1059 + $0xf8] sm:$0xff]
        %vm1100 = vcmask 1041409
        %v1101 = vsel %vm1100, %v1023, %v1009
        %vm1102 = vcmask 1042434
        %v1103 = vsel %vm1102, %v1037, %v1101
        %vm1104 = vcmask 1043459
        %v1105 = vsel %vm1104, %v1051, %v1103
        %v1106 = vsel %vm1100, %v1030, %v1016
        %v1107 = vsel %vm1102, %v1044, %v1106
        %v1108 = vsel %vm1104, %v1058, %v1107
        %1111 = vmatprep.subr.mxu0 0.0
        %1112 = vmatpush1.msra.mxu0 %v1060
        %1113 = vmatprep.subr.mxu0 0.0
        %1114 = vmatpush1.msra.mxu0 %v1061
        %1115 = vmatprep.subr.mxu0 0.0
        %1116 = vmatpush1.msra.mxu0 %v1062
        %1117 = vmatprep.subr.mxu0 0.0
        %1118 = vmatpush1.msra.mxu0 %v1063
        %1119 = vmatprep.subr.mxu0 0.0
        %1120 = vmatpush1.msra.mxu0 %v1064
        %1121 = vmatprep.subr.mxu0 0.0
        %1122 = vmatpush1.msra.mxu0 %v1065
        %1123 = vmatprep.subr.mxu0 0.0
        %1124 = vmatpush1.msra.mxu0 %v1066
        %1125 = vmatprep.subr.mxu0 0.0
        %1126 = vmatpush1.msra.mxu0 %v1067
        %1127 = vmatprep.subr.mxu0 0.0
        %1128 = vmatpush1.msra.mxu0 %v1068
        %1129 = vmatprep.subr.mxu0 0.0
        %1130 = vmatpush1.msra.mxu0 %v1069
        %1131 = vmatprep.subr.mxu0 0.0
        %1132 = vmatpush1.msra.mxu0 %v1070
        %1133 = vmatprep.subr.mxu0 0.0
        %1134 = vmatpush1.msra.mxu0 %v1071
        %1135 = vmatprep.subr.mxu0 0.0
        %1136 = vmatpush1.msra.mxu0 %v1072
        %1137 = vmatprep.subr.mxu0 0.0
        %1138 = vmatpush1.msra.mxu0 %v1073
        %1139 = vmatprep.subr.mxu0 0.0
        %1140 = vmatpush1.msra.mxu0 %v1074
        %1141 = vmatprep.subr.mxu0 0.0
        %1142 = vmatpush1.msra.mxu0 %v1075
        %1143 = vmatprep.subr.mxu0 0.0
        %1144 = vmatpush1.msra.mxu0 %v1076
        %1145 = vmatprep.subr.mxu0 0.0
        %1146 = vmatpush1.msra.mxu0 %v1077
        %1147 = vmatprep.subr.mxu0 0.0
        %1148 = vmatpush1.msra.mxu0 %v1078
        %1149 = vmatprep.subr.mxu0 0.0
        %1150 = vmatpush1.msra.mxu0 %v1079
        %1151 = vmatprep.subr.mxu0 0.0
        %1152 = vmatpush1.msra.mxu0 %v1080
        %1153 = vmatprep.subr.mxu0 0.0
        %1154 = vmatpush1.msra.mxu0 %v1081
        %1155 = vmatprep.subr.mxu0 0.0
        %1156 = vmatpush1.msra.mxu0 %v1082
        %1157 = vmatprep.subr.mxu0 0.0
        %1158 = vmatpush1.msra.mxu0 %v1083
        %1159 = vmatprep.subr.mxu0 0.0
        %1160 = vmatpush1.msra.mxu0 %v1084
        %1161 = vmatprep.subr.mxu0 0.0
        %1162 = vmatpush1.msra.mxu0 %v1085
        %1163 = vmatprep.subr.mxu0 0.0
        %1164 = vmatpush1.msra.mxu0 %v1086
        %1165 = vmatprep.subr.mxu0 0.0
        %1166 = vmatpush1.msra.mxu0 %v1087
        %1167 = vmatprep.subr.mxu0 0.0
        %1168 = vmatpush1.msra.mxu0 %v1088
        %1169 = vmatprep.subr.mxu0 0.0
        %1170 = vmatpush1.msra.mxu0 %v1089
        %1171 = vmatprep.subr.mxu0 0.0
        %1172 = vmatpush1.msra.mxu0 %v1090
        %1173 = vmatprep.subr.mxu0 0.0
        %1174 = vmatpush1.msra.mxu0 %v1091
        %1175 = vmatprep.mubr.f32.mxu0 %v1108
        %1176 = vmatmul.mubr.f32.gmra.mrb[0].mxu0 %v1105
        %v1177 = vpop.f32.mrb[0].mxu0
        %v1178 = vadd.f32 0.0, %v1177
        %v1179 = vpop.f32.mrb[0].mxu0
        %1180 = vdwg.mxu0
        %v1189 = vsel %vm1100, %v919, %v905
        %v1190 = vsel %vm1102, %v933, %v1189
        %v1191 = vsel %vm1104, %v947, %v1190
        %v1192 = vsel %vm1100, %v926, %v912
        %v1193 = vsel %vm1102, %v940, %v1192
        %v1194 = vsel %vm1104, %v954, %v1193
        %1197 = vmatprep.subr.mxu0 0.0
        %1198 = vmatpush1.msra.mxu0 %v955
        %1199 = vmatprep.subr.mxu0 0.0
        %1200 = vmatpush1.msra.mxu0 %v956
        %1201 = vmatprep.subr.mxu0 0.0
        %1202 = vmatpush1.msra.mxu0 %v957
        %1203 = vmatprep.subr.mxu0 0.0
        %1204 = vmatpush1.msra.mxu0 %v958
        %1205 = vmatprep.subr.mxu0 0.0
        %1206 = vmatpush1.msra.mxu0 %v959
        %1207 = vmatprep.subr.mxu0 0.0
        %1208 = vmatpush1.msra.mxu0 %v960
        %1209 = vmatprep.subr.mxu0 0.0
        %1210 = vmatpush1.msra.mxu0 %v961
        %1211 = vmatprep.subr.mxu0 0.0
        %1212 = vmatpush1.msra.mxu0 %v962
        %1213 = vmatprep.subr.mxu0 0.0
        %1214 = vmatpush1.msra.mxu0 %v963
        %1215 = vmatprep.subr.mxu0 0.0
        %1216 = vmatpush1.msra.mxu0 %v964
        %1217 = vmatprep.subr.mxu0 0.0
        %1218 = vmatpush1.msra.mxu0 %v965
        %1219 = vmatprep.subr.mxu0 0.0
        %1220 = vmatpush1.msra.mxu0 %v966
        %1221 = vmatprep.subr.mxu0 0.0
        %1222 = vmatpush1.msra.mxu0 %v967
        %1223 = vmatprep.subr.mxu0 0.0
        %1224 = vmatpush1.msra.mxu0 %v968
        %1225 = vmatprep.subr.mxu0 0.0
        %1226 = vmatpush1.msra.mxu0 %v969
        %1227 = vmatprep.subr.mxu0 0.0
        %1228 = vmatpush1.msra.mxu0 %v970
        %1229 = vmatprep.subr.mxu0 0.0
        %1230 = vmatpush1.msra.mxu0 %v971
        %1231 = vmatprep.subr.mxu0 0.0
        %1232 = vmatpush1.msra.mxu0 %v972
        %1233 = vmatprep.subr.mxu0 0.0
        %1234 = vmatpush1.msra.mxu0 %v973
        %1235 = vmatprep.subr.mxu0 0.0
        %1236 = vmatpush1.msra.mxu0 %v974
        %1237 = vmatprep.subr.mxu0 0.0
        %1238 = vmatpush1.msra.mxu0 %v975
        %1239 = vmatprep.subr.mxu0 0.0
        %1240 = vmatpush1.msra.mxu0 %v976
        %1241 = vmatprep.subr.mxu0 0.0
        %1242 = vmatpush1.msra.mxu0 %v977
        %1243 = vmatprep.subr.mxu0 0.0
        %1244 = vmatpush1.msra.mxu0 %v978
        %1245 = vmatprep.subr.mxu0 0.0
        %1246 = vmatpush1.msra.mxu0 %v979
        %1247 = vmatprep.subr.mxu0 0.0
        %1248 = vmatpush1.msra.mxu0 %v980
        %1249 = vmatprep.subr.mxu0 0.0
        %1250 = vmatpush1.msra.mxu0 %v981
        %1251 = vmatprep.subr.mxu0 0.0
        %1252 = vmatpush1.msra.mxu0 %v982
        %1253 = vmatprep.subr.mxu0 0.0
        %1254 = vmatpush1.msra.mxu0 %v983
        %1255 = vmatprep.subr.mxu0 0.0
        %1256 = vmatpush1.msra.mxu0 %v984
        %1257 = vmatprep.subr.mxu0 0.0
        %1258 = vmatpush1.msra.mxu0 %v985
        %1259 = vmatprep.subr.mxu0 0.0
        %1260 = vmatpush1.msra.mxu0 %v986
        %1261 = vmatprep.mubr.f32.mxu0 %v1194
        %1262 = vmatmul.mubr.f32.gmra.mrb[0].mxu0 %v1191
        %v1263 = vpop.f32.mrb[0].mxu0
        %v1264 = vadd.f32 %v1178, %v1263
        %v1265 = vpop.f32.mrb[0].mxu0
        %1266 = vdwg.mxu0
        %v1267 = vmul.f32 %v781, %v879
        %v1268 = vmul.f32 %v783, %v880
        %v1269 = vmul.f32 %v785, %v881
        %v1270 = vmul.f32 %v787, %v882
        %v1271 = vmul.f32 %v811, %v879
        %v1272 = vmul.f32 %v813, %v880
        %v1273 = vmul.f32 %v815, %v881
        %v1274 = vmul.f32 %v817, %v882
        %v1275 = vmul.f32 %v841, %v879
        %v1276 = vmul.f32 %v843, %v880
        %v1277 = vmul.f32 %v845, %v881
        %v1278 = vmul.f32 %v847, %v882
        %v1279 = vmul.f32 %v871, %v879
        %v1280 = vmul.f32 %v873, %v880
        %v1281 = vmul.f32 %v875, %v881
        %v1282 = vmul.f32 %v877, %v882
        %v1283 = vadd.f32 %v1267, %v1269
        %v1284 = vrot.slane %v1283, 4
        %v1285 = vadd.f32 %v1283, %v1284
        %v1286 = vrot.slane %v1285, 2
        %v1287 = vadd.f32 %v1285, %v1286
        %v1288 = vrot.slane %v1287, 1
        %v1289 = vadd.f32 %v1287, %v1288
        %v1290 = vadd.f32 %v1268, %v1270
        %v1291 = vrot.slane %v1290, 4
        %v1292 = vadd.f32 %v1290, %v1291
        %v1293 = vrot.slane %v1292, 2
        %v1294 = vadd.f32 %v1292, %v1293
        %v1295 = vrot.slane %v1294, 1
        %v1296 = vadd.f32 %v1294, %v1295
        %v1297 = vadd.f32 %v1271, %v1273
        %v1298 = vrot.slane %v1297, 4
        %v1299 = vadd.f32 %v1297, %v1298
        %v1300 = vrot.slane %v1299, 2
        %v1301 = vadd.f32 %v1299, %v1300
        %v1302 = vrot.slane %v1301, 1
        %v1303 = vadd.f32 %v1301, %v1302
        %v1304 = vadd.f32 %v1272, %v1274
        %v1305 = vrot.slane %v1304, 4
        %v1306 = vadd.f32 %v1304, %v1305
        %v1307 = vrot.slane %v1306, 2
        %v1308 = vadd.f32 %v1306, %v1307
        %v1309 = vrot.slane %v1308, 1
        %v1310 = vadd.f32 %v1308, %v1309
        %v1311 = vadd.f32 %v1275, %v1277
        %v1312 = vrot.slane %v1311, 4
        %v1313 = vadd.f32 %v1311, %v1312
        %v1314 = vrot.slane %v1313, 2
        %v1315 = vadd.f32 %v1313, %v1314
        %v1316 = vrot.slane %v1315, 1
        %v1317 = vadd.f32 %v1315, %v1316
        %v1318 = vadd.f32 %v1276, %v1278
        %v1319 = vrot.slane %v1318, 4
        %v1320 = vadd.f32 %v1318, %v1319
        %v1321 = vrot.slane %v1320, 2
        %v1322 = vadd.f32 %v1320, %v1321
        %v1323 = vrot.slane %v1322, 1
        %v1324 = vadd.f32 %v1322, %v1323
        %v1325 = vadd.f32 %v1279, %v1281
        %v1326 = vrot.slane %v1325, 4
        %v1327 = vadd.f32 %v1325, %v1326
        %v1328 = vrot.slane %v1327, 2
        %v1329 = vadd.f32 %v1327, %v1328
        %v1330 = vrot.slane %v1329, 1
        %v1331 = vadd.f32 %v1329, %v1330
        %v1332 = vadd.f32 %v1280, %v1282
        %v1333 = vrot.slane %v1332, 4
        %v1334 = vadd.f32 %v1332, %v1333
        %v1335 = vrot.slane %v1334, 2
        %v1336 = vadd.f32 %v1334, %v1335
        %v1337 = vrot.slane %v1336, 1
        %v1338 = vadd.f32 %v1336, %v1337
        %s1339 = scalar_lea.vmem [#allocation2], 512
        %v1340 = vld [vmem:[%s1339] sm:$0xff]
        %v1341 = vld [vmem:[%s1339 + $0x8] sm:$0xff]
        %v1342 = vld [vmem:[%s1339 + $0x10] sm:$0xff]
        %v1343 = vld [vmem:[%s1339 + $0x18] sm:$0xff]
        %v1344 = vld [vmem:[%s1339 + $0x20] sm:$0xff]
        %v1345 = vld [vmem:[%s1339 + $0x28] sm:$0xff]
        %v1346 = vld [vmem:[%s1339 + $0x30] sm:$0xff]
        %v1347 = vld [vmem:[%s1339 + $0x38] sm:$0xff]
        %v1348 = vld [vmem:[%s1339 + $0x40] sm:$0xff]
        %v1349 = vld [vmem:[%s1339 + $0x48] sm:$0xff]
        %v1350 = vld [vmem:[%s1339 + $0x50] sm:$0xff]
        %v1351 = vld [vmem:[%s1339 + $0x58] sm:$0xff]
        %v1352 = vld [vmem:[%s1339 + $0x60] sm:$0xff]
        %v1353 = vld [vmem:[%s1339 + $0x68] sm:$0xff]
        %v1354 = vld [vmem:[%s1339 + $0x70] sm:$0xff]
        %v1355 = vld [vmem:[%s1339 + $0x78] sm:$0xff]
        %v1356 = vld [vmem:[%s1339 + $0x80] sm:$0xff]
        %v1357 = vld [vmem:[%s1339 + $0x88] sm:$0xff]
        %v1358 = vld [vmem:[%s1339 + $0x90] sm:$0xff]
        %v1359 = vld [vmem:[%s1339 + $0x98] sm:$0xff]
        %v1360 = vld [vmem:[%s1339 + $0xa0] sm:$0xff]
        %v1361 = vld [vmem:[%s1339 + $0xa8] sm:$0xff]
        %v1362 = vld [vmem:[%s1339 + $0xb0] sm:$0xff]
        %v1363 = vld [vmem:[%s1339 + $0xb8] sm:$0xff]
        %v1364 = vld [vmem:[%s1339 + $0xc0] sm:$0xff]
        %v1365 = vld [vmem:[%s1339 + $0xc8] sm:$0xff]
        %v1366 = vld [vmem:[%s1339 + $0xd0] sm:$0xff]
        %v1367 = vld [vmem:[%s1339 + $0xd8] sm:$0xff]
        %v1368 = vld [vmem:[%s1339 + $0xe0] sm:$0xff]
        %v1369 = vld [vmem:[%s1339 + $0xe8] sm:$0xff]
        %v1370 = vld [vmem:[%s1339 + $0xf0] sm:$0xff]
        %v1371 = vld [vmem:[%s1339 + $0xf8] sm:$0xff]
        %v1380 = vsel %vm1100, %v1303, %v1289
        %v1381 = vsel %vm1102, %v1317, %v1380
        %v1382 = vsel %vm1104, %v1331, %v1381
        %v1383 = vsel %vm1100, %v1310, %v1296
        %v1384 = vsel %vm1102, %v1324, %v1383
        %v1385 = vsel %vm1104, %v1338, %v1384
        %1388 = vmatprep.subr.mxu0 0.0
        %1389 = vmatpush1.msra.mxu0 %v1340
        %1390 = vmatprep.subr.mxu0 0.0
        %1391 = vmatpush1.msra.mxu0 %v1341
        %1392 = vmatprep.subr.mxu0 0.0
        %1393 = vmatpush1.msra.mxu0 %v1342
        %1394 = vmatprep.subr.mxu0 0.0
        %1395 = vmatpush1.msra.mxu0 %v1343
        %1396 = vmatprep.subr.mxu0 0.0
        %1397 = vmatpush1.msra.mxu0 %v1344
        %1398 = vmatprep.subr.mxu0 0.0
        %1399 = vmatpush1.msra.mxu0 %v1345
        %1400 = vmatprep.subr.mxu0 0.0
        %1401 = vmatpush1.msra.mxu0 %v1346
        %1402 = vmatprep.subr.mxu0 0.0
        %1403 = vmatpush1.msra.mxu0 %v1347
        %1404 = vmatprep.subr.mxu0 0.0
        %1405 = vmatpush1.msra.mxu0 %v1348
        %1406 = vmatprep.subr.mxu0 0.0
        %1407 = vmatpush1.msra.mxu0 %v1349
        %1408 = vmatprep.subr.mxu0 0.0
        %1409 = vmatpush1.msra.mxu0 %v1350
        %1410 = vmatprep.subr.mxu0 0.0
        %1411 = vmatpush1.msra.mxu0 %v1351
        %1412 = vmatprep.subr.mxu0 0.0
        %1413 = vmatpush1.msra.mxu0 %v1352
        %1414 = vmatprep.subr.mxu0 0.0
        %1415 = vmatpush1.msra.mxu0 %v1353
        %1416 = vmatprep.subr.mxu0 0.0
        %1417 = vmatpush1.msra.mxu0 %v1354
        %1418 = vmatprep.subr.mxu0 0.0
        %1419 = vmatpush1.msra.mxu0 %v1355
        %1420 = vmatprep.subr.mxu0 0.0
        %1421 = vmatpush1.msra.mxu0 %v1356
        %1422 = vmatprep.subr.mxu0 0.0
        %1423 = vmatpush1.msra.mxu0 %v1357
        %1424 = vmatprep.subr.mxu0 0.0
        %1425 = vmatpush1.msra.mxu0 %v1358
        %1426 = vmatprep.subr.mxu0 0.0
        %1427 = vmatpush1.msra.mxu0 %v1359
        %1428 = vmatprep.subr.mxu0 0.0
        %1429 = vmatpush1.msra.mxu0 %v1360
        %1430 = vmatprep.subr.mxu0 0.0
        %1431 = vmatpush1.msra.mxu0 %v1361
        %1432 = vmatprep.subr.mxu0 0.0
        %1433 = vmatpush1.msra.mxu0 %v1362
        %1434 = vmatprep.subr.mxu0 0.0
        %1435 = vmatpush1.msra.mxu0 %v1363
        %1436 = vmatprep.subr.mxu0 0.0
        %1437 = vmatpush1.msra.mxu0 %v1364
        %1438 = vmatprep.subr.mxu0 0.0
        %1439 = vmatpush1.msra.mxu0 %v1365
        %1440 = vmatprep.subr.mxu0 0.0
        %1441 = vmatpush1.msra.mxu0 %v1366
        %1442 = vmatprep.subr.mxu0 0.0
        %1443 = vmatpush1.msra.mxu0 %v1367
        %1444 = vmatprep.subr.mxu0 0.0
        %1445 = vmatpush1.msra.mxu0 %v1368
        %1446 = vmatprep.subr.mxu0 0.0
        %1447 = vmatpush1.msra.mxu0 %v1369
        %1448 = vmatprep.subr.mxu0 0.0
        %1449 = vmatpush1.msra.mxu0 %v1370
        %1450 = vmatprep.subr.mxu0 0.0
        %1451 = vmatpush1.msra.mxu0 %v1371
        %1452 = vmatprep.mubr.f32.mxu0 %v1385
        %1453 = vmatmul.mubr.f32.gmra.mrb[0].mxu0 %v1382
        %v1454 = vpop.f32.mrb[0].mxu0
        %v1455 = vadd.f32 0.0, %v1454
        %v1456 = vpop.f32.mrb[0].mxu0
        %1457 = vdwg.mxu0
        %v1458 = vadd.f32 %v1264, %v1455
        %v1459 = vld [vmem:[%s583] sm:$0xf]
        %v1460 = vld [vmem:[%s583 + $0x4] sm:$0xf]
        %v1461 = vld [vmem:[%s583 + $0x8] sm:$0xf]
        %v1462 = vld [vmem:[%s583 + $0xc] sm:$0xf]
        %v1463 = vld [vmem:[%s583 + $0x10] sm:$0xf]
        %v1464 = vld [vmem:[%s583 + $0x14] sm:$0xf]
        %v1465 = vld [vmem:[%s583 + $0x18] sm:$0xf]
        %v1466 = vld [vmem:[%s583 + $0x1c] sm:$0xf]
        %v1467 = vld [vmem:[%s583 + $0x20] sm:$0xf]
        %v1468 = vld [vmem:[%s583 + $0x24] sm:$0xf]
        %v1469 = vld [vmem:[%s583 + $0x28] sm:$0xf]
        %v1470 = vld [vmem:[%s583 + $0x2c] sm:$0xf]
        %v1471 = vld [vmem:[%s4] sm:$0xff]
        %v1484 = vunpack.c.l.b16 %v1459
        %v1485 = vunpack.c.l.b16 %v1460
        %v1486 = vunpack.c.l.b16 %v1461
        %v1487 = vunpack.c.l.b16 %v1462
        %v1488 = vunpack.c.l.b16 %v1463
        %v1489 = vunpack.c.l.b16 %v1464
        %v1490 = vunpack.c.l.b16 %v1465
        %v1491 = vunpack.c.l.b16 %v1466
        %v1492 = vunpack.c.l.b16 %v1467
        %v1493 = vunpack.c.l.b16 %v1468
        %v1494 = vunpack.c.l.b16 %v1469
        %v1495 = vunpack.c.l.b16 %v1470
        %v1496 = vpack.c.b16 %v1485, %v1484
        %v1497 = vpack.c.b16 %v1487, %v1486
        %v1498 = vpack.c.b16 %v1489, %v1488
        %v1499 = vpack.c.b16 %v1491, %v1490
        %v1500 = vpack.c.b16 %v1493, %v1492
        %v1501 = vpack.c.b16 %v1495, %v1494
        %v1503 = vunpack.c.l.b16 %v1471
        %v1504 = vunpack.c.h.b16 %v1471
        %v1505 = vpack.c.b16 %v1503, %v1503
        %v1506 = vpack.c.b16 %v1504, %v1504
        %vm1507 = vcmask 64512
        %v1509 = vsel %vm1507, %v1496, 0
        %v1512 = vsel %vm1507, %v1497, 0
        %v1515 = vsel %vm1507, %v1498, 0
        %v1518 = vsel %vm1507, %v1499, 0
        %v1521 = vsel %vm1507, %v1500, 0
        %v1524 = vsel %vm1507, %v1501, 0
        %vm1526 = vcmask 1043456
        %v1528 = vsel %vm1526, %v1505, 0
        %v1531 = vsel %vm1526, %v1506, 0
        %1533 = vmatprep.subr.bf16.mxu0 %v1531
        %1534 = vmatpush1.bf16.msra.mxu0 %v1528
        %1535 = vmatprep.subr.bf16.mxu0 0
        %1536 = vmatpush1.bf16.msra.mxu0 0
        %1537 = vmatprep.subr.bf16.mxu0 0
        %1538 = vmatpush1.bf16.msra.mxu0 0
        %1539 = vmatprep.subr.bf16.mxu0 0
        %1540 = vmatpush1.bf16.msra.mxu0 0
        %1541 = vmatprep.subr.bf16.mxu0 0
        %1542 = vmatpush1.bf16.msra.mxu0 0
        %1543 = vmatprep.subr.bf16.mxu0 0
        %1544 = vmatpush1.bf16.msra.mxu0 0
        %1545 = vmatprep.subr.bf16.mxu0 0
        %1546 = vmatpush1.bf16.msra.mxu0 0
        %1547 = vmatprep.subr.bf16.mxu0 0
        %1548 = vmatpush1.bf16.msra.mxu0 0
        %1549 = vmatprep.subr.bf16.mxu0 0
        %1550 = vmatpush1.bf16.msra.mxu0 0
        %1551 = vmatprep.subr.bf16.mxu0 0
        %1552 = vmatpush1.bf16.msra.mxu0 0
        %1553 = vmatprep.subr.bf16.mxu0 0
        %1554 = vmatpush1.bf16.msra.mxu0 0
        %1555 = vmatprep.subr.bf16.mxu0 0
        %1556 = vmatpush1.bf16.msra.mxu0 0
        %1557 = vmatprep.subr.bf16.mxu0 0
        %1558 = vmatpush1.bf16.msra.mxu0 0
        %1559 = vmatprep.subr.bf16.mxu0 0
        %1560 = vmatpush1.bf16.msra.mxu0 0
        %1561 = vmatprep.subr.bf16.mxu0 0
        %1562 = vmatpush1.bf16.msra.mxu0 0
        %1563 = vmatprep.subr.bf16.mxu0 0
        %1564 = vmatpush1.bf16.msra.mxu0 0
        %1565 = vmatprep.mubr.bf16.mxu0 0
        %1566 = vmatmul.mubr.bf16.gmra.mrb[0].mxu0 %v1509
        %v1567 = vpop.f32.mrb[0].mxu0
        %v1568 = vadd.f32 0.0, %v1567
        %v1569 = vpop.f32.mrb[0].mxu0
        %v1570 = vadd.f32 0.0, %v1569
        %v1571 = vpop.f32.mrb[0].mxu0
        %v1572 = vadd.f32 0.0, %v1571
        %v1573 = vpop.f32.mrb[0].mxu0
        %v1574 = vadd.f32 0.0, %v1573
        %1575 = vmatprep.mubr.bf16.mxu0 0
        %1576 = vmatmul.mubr.bf16.gmra.mrb[0].mxu0 %v1512
        %v1577 = vpop.f32.mrb[0].mxu0
        %v1578 = vadd.f32 0.0, %v1577
        %v1579 = vpop.f32.mrb[0].mxu0
        %v1580 = vadd.f32 0.0, %v1579
        %v1581 = vpop.f32.mrb[0].mxu0
        %v1582 = vadd.f32 0.0, %v1581
        %v1583 = vpop.f32.mrb[0].mxu0
        %v1584 = vadd.f32 0.0, %v1583
        %1585 = vmatprep.mubr.bf16.mxu0 0
        %1586 = vmatmul.mubr.bf16.gmra.mrb[0].mxu0 %v1515
        %v1587 = vpop.f32.mrb[0].mxu0
        %v1588 = vadd.f32 0.0, %v1587
        %v1589 = vpop.f32.mrb[0].mxu0
        %v1590 = vadd.f32 0.0, %v1589
        %v1591 = vpop.f32.mrb[0].mxu0
        %v1592 = vadd.f32 0.0, %v1591
        %v1593 = vpop.f32.mrb[0].mxu0
        %v1594 = vadd.f32 0.0, %v1593
        %1595 = vmatprep.mubr.bf16.mxu0 0
        %1596 = vmatmul.mubr.bf16.gmra.mrb[0].mxu0 %v1518
        %v1597 = vpop.f32.mrb[0].mxu0
        %v1598 = vadd.f32 0.0, %v1597
        %v1599 = vpop.f32.mrb[0].mxu0
        %v1600 = vadd.f32 0.0, %v1599
        %v1601 = vpop.f32.mrb[0].mxu0
        %v1602 = vadd.f32 0.0, %v1601
        %v1603 = vpop.f32.mrb[0].mxu0
        %v1604 = vadd.f32 0.0, %v1603
        %1605 = vmatprep.mubr.bf16.mxu0 0
        %1606 = vmatmul.mubr.bf16.gmra.mrb[0].mxu0 %v1521
        %v1607 = vpop.f32.mrb[0].mxu0
        %v1608 = vadd.f32 0.0, %v1607
        %v1609 = vpop.f32.mrb[0].mxu0
        %v1610 = vadd.f32 0.0, %v1609
        %v1611 = vpop.f32.mrb[0].mxu0
        %v1612 = vadd.f32 0.0, %v1611
        %v1613 = vpop.f32.mrb[0].mxu0
        %v1614 = vadd.f32 0.0, %v1613
        %1615 = vmatprep.mubr.bf16.mxu0 0
        %1616 = vmatmul.mubr.bf16.gmra.mrb[0].mxu0 %v1524
        %v1617 = vpop.f32.mrb[0].mxu0
        %v1618 = vadd.f32 0.0, %v1617
        %v1619 = vpop.f32.mrb[0].mxu0
        %v1620 = vadd.f32 0.0, %v1619
        %v1621 = vpop.f32.mrb[0].mxu0
        %v1622 = vadd.f32 0.0, %v1621
        %v1623 = vpop.f32.mrb[0].mxu0
        %v1624 = vadd.f32 0.0, %v1623
        %1625 = vdwg.mxu0
        %v1626 = vld [vmem:[%s7] sm:$0xff]
        %v1627 = vld [vmem:[%s7 + $0x8] sm:$0xff]
        %v1628 = vmul.f32 %v1568, %v1626
        %v1629 = vmul.f32 %v1570, %v1627
        %v1630 = vmul.f32 %v1582, %v1626
        %v1631 = vmul.f32 %v1584, %v1627
        %v1632 = vmul.f32 %v1598, %v1626
        %v1633 = vmul.f32 %v1600, %v1627
        %v1634 = vmul.f32 %v1612, %v1626
        %v1635 = vmul.f32 %v1614, %v1627
        %v1636 = vrot.slane %v1628, 4
        %v1637 = vadd.f32 %v1628, %v1636
        %v1638 = vrot.slane %v1637, 2
        %v1639 = vadd.f32 %v1637, %v1638
        %v1640 = vrot.slane %v1639, 1
        %v1641 = vadd.f32 %v1639, %v1640
        %v1642 = vrot.slane %v1629, 4
        %v1643 = vadd.f32 %v1629, %v1642
        %v1644 = vrot.slane %v1643, 2
        %v1645 = vadd.f32 %v1643, %v1644
        %v1646 = vrot.slane %v1645, 1
        %v1647 = vadd.f32 %v1645, %v1646
        %v1648 = vrot.slane %v1630, 4
        %v1649 = vadd.f32 %v1630, %v1648
        %v1650 = vrot.slane %v1649, 2
        %v1651 = vadd.f32 %v1649, %v1650
        %v1652 = vrot.slane %v1651, 1
        %v1653 = vadd.f32 %v1651, %v1652
        %v1654 = vrot.slane %v1631, 4
        %v1655 = vadd.f32 %v1631, %v1654
        %v1656 = vrot.slane %v1655, 2
        %v1657 = vadd.f32 %v1655, %v1656
        %v1658 = vrot.slane %v1657, 1
        %v1659 = vadd.f32 %v1657, %v1658
        %v1660 = vrot.slane %v1632, 4
        %v1661 = vadd.f32 %v1632, %v1660
        %v1662 = vrot.slane %v1661, 2
        %v1663 = vadd.f32 %v1661, %v1662
        %v1664 = vrot.slane %v1663, 1
        %v1665 = vadd.f32 %v1663, %v1664
        %v1666 = vrot.slane %v1633, 4
        %v1667 = vadd.f32 %v1633, %v1666
        %v1668 = vrot.slane %v1667, 2
        %v1669 = vadd.f32 %v1667, %v1668
        %v1670 = vrot.slane %v1669, 1
        %v1671 = vadd.f32 %v1669, %v1670
        %v1672 = vrot.slane %v1634, 4
        %v1673 = vadd.f32 %v1634, %v1672
        %v1674 = vrot.slane %v1673, 2
        %v1675 = vadd.f32 %v1673, %v1674
        %v1676 = vrot.slane %v1675, 1
        %v1677 = vadd.f32 %v1675, %v1676
        %v1678 = vrot.slane %v1635, 4
        %v1679 = vadd.f32 %v1635, %v1678
        %v1680 = vrot.slane %v1679, 2
        %v1681 = vadd.f32 %v1679, %v1680
        %v1682 = vrot.slane %v1681, 1
        %v1683 = vadd.f32 %v1681, %v1682
        %v1684 = vld [vmem:[#allocation5] sm:$0xff]
        %v1685 = vld [vmem:[#allocation5 + $0x8] sm:$0xff]
        %v1686 = vld [vmem:[#allocation5 + $0x10] sm:$0xff]
        %v1687 = vld [vmem:[#allocation5 + $0x18] sm:$0xff]
        %v1688 = vld [vmem:[#allocation5 + $0x20] sm:$0xff]
        %v1689 = vld [vmem:[#allocation5 + $0x28] sm:$0xff]
        %v1690 = vld [vmem:[#allocation5 + $0x30] sm:$0xff]
        %v1691 = vld [vmem:[#allocation5 + $0x38] sm:$0xff]
        %v1692 = vld [vmem:[#allocation5 + $0x40] sm:$0xff]
        %v1693 = vld [vmem:[#allocation5 + $0x48] sm:$0xff]
        %v1694 = vld [vmem:[#allocation5 + $0x50] sm:$0xff]
        %v1695 = vld [vmem:[#allocation5 + $0x58] sm:$0xff]
        %v1696 = vld [vmem:[#allocation5 + $0x60] sm:$0xff]
        %v1697 = vld [vmem:[#allocation5 + $0x68] sm:$0xff]
        %v1698 = vld [vmem:[#allocation5 + $0x70] sm:$0xff]
        %v1699 = vld [vmem:[#allocation5 + $0x78] sm:$0xff]
        %v1700 = vld [vmem:[#allocation5 + $0x80] sm:$0xff]
        %v1701 = vld [vmem:[#allocation5 + $0x88] sm:$0xff]
        %v1702 = vld [vmem:[#allocation5 + $0x90] sm:$0xff]
        %v1703 = vld [vmem:[#allocation5 + $0x98] sm:$0xff]
        %v1704 = vld [vmem:[#allocation5 + $0xa0] sm:$0xff]
        %v1705 = vld [vmem:[#allocation5 + $0xa8] sm:$0xff]
        %v1706 = vld [vmem:[#allocation5 + $0xb0] sm:$0xff]
        %v1707 = vld [vmem:[#allocation5 + $0xb8] sm:$0xff]
        %v1708 = vld [vmem:[#allocation5 + $0xc0] sm:$0xff]
        %v1709 = vld [vmem:[#allocation5 + $0xc8] sm:$0xff]
        %v1710 = vld [vmem:[#allocation5 + $0xd0] sm:$0xff]
        %v1711 = vld [vmem:[#allocation5 + $0xd8] sm:$0xff]
        %v1712 = vld [vmem:[#allocation5 + $0xe0] sm:$0xff]
        %v1713 = vld [vmem:[#allocation5 + $0xe8] sm:$0xff]
        %v1714 = vld [vmem:[#allocation5 + $0xf0] sm:$0xff]
        %v1715 = vld [vmem:[#allocation5 + $0xf8] sm:$0xff]
        %v1716 = vmul.f32 %v1572, %v1626
        %v1717 = vmul.f32 %v1574, %v1627
        %v1718 = vmul.f32 %v1588, %v1626
        %v1719 = vmul.f32 %v1590, %v1627
        %v1720 = vmul.f32 %v1602, %v1626
        %v1721 = vmul.f32 %v1604, %v1627
        %v1722 = vmul.f32 %v1618, %v1626
        %v1723 = vmul.f32 %v1620, %v1627
        %v1724 = vrot.slane %v1716, 4
        %v1725 = vadd.f32 %v1716, %v1724
        %v1726 = vrot.slane %v1725, 2
        %v1727 = vadd.f32 %v1725, %v1726
        %v1728 = vrot.slane %v1727, 1
        %v1729 = vadd.f32 %v1727, %v1728
        %v1730 = vrot.slane %v1717, 4
        %v1731 = vadd.f32 %v1717, %v1730
        %v1732 = vrot.slane %v1731, 2
        %v1733 = vadd.f32 %v1731, %v1732
        %v1734 = vrot.slane %v1733, 1
        %v1735 = vadd.f32 %v1733, %v1734
        %v1736 = vrot.slane %v1718, 4
        %v1737 = vadd.f32 %v1718, %v1736
        %v1738 = vrot.slane %v1737, 2
        %v1739 = vadd.f32 %v1737, %v1738
        %v1740 = vrot.slane %v1739, 1
        %v1741 = vadd.f32 %v1739, %v1740
        %v1742 = vrot.slane %v1719, 4
        %v1743 = vadd.f32 %v1719, %v1742
        %v1744 = vrot.slane %v1743, 2
        %v1745 = vadd.f32 %v1743, %v1744
        %v1746 = vrot.slane %v1745, 1
        %v1747 = vadd.f32 %v1745, %v1746
        %v1748 = vrot.slane %v1720, 4
        %v1749 = vadd.f32 %v1720, %v1748
        %v1750 = vrot.slane %v1749, 2
        %v1751 = vadd.f32 %v1749, %v1750
        %v1752 = vrot.slane %v1751, 1
        %v1753 = vadd.f32 %v1751, %v1752
        %v1754 = vrot.slane %v1721, 4
        %v1755 = vadd.f32 %v1721, %v1754
        %v1756 = vrot.slane %v1755, 2
        %v1757 = vadd.f32 %v1755, %v1756
        %v1758 = vrot.slane %v1757, 1
        %v1759 = vadd.f32 %v1757, %v1758
        %v1760 = vrot.slane %v1722, 4
        %v1761 = vadd.f32 %v1722, %v1760
        %v1762 = vrot.slane %v1761, 2
        %v1763 = vadd.f32 %v1761, %v1762
        %v1764 = vrot.slane %v1763, 1
        %v1765 = vadd.f32 %v1763, %v1764
        %v1766 = vrot.slane %v1723, 4
        %v1767 = vadd.f32 %v1723, %v1766
        %v1768 = vrot.slane %v1767, 2
        %v1769 = vadd.f32 %v1767, %v1768
        %v1770 = vrot.slane %v1769, 1
        %v1771 = vadd.f32 %v1769, %v1770
        %s1772 = scalar_lea.vmem [#allocation5], 256
        %v1773 = vld [vmem:[%s1772] sm:$0xff]
        %v1774 = vld [vmem:[%s1772 + $0x8] sm:$0xff]
        %v1775 = vld [vmem:[%s1772 + $0x10] sm:$0xff]
        %v1776 = vld [vmem:[%s1772 + $0x18] sm:$0xff]
        %v1777 = vld [vmem:[%s1772 + $0x20] sm:$0xff]
        %v1778 = vld [vmem:[%s1772 + $0x28] sm:$0xff]
        %v1779 = vld [vmem:[%s1772 + $0x30] sm:$0xff]
        %v1780 = vld [vmem:[%s1772 + $0x38] sm:$0xff]
        %v1781 = vld [vmem:[%s1772 + $0x40] sm:$0xff]
        %v1782 = vld [vmem:[%s1772 + $0x48] sm:$0xff]
        %v1783 = vld [vmem:[%s1772 + $0x50] sm:$0xff]
        %v1784 = vld [vmem:[%s1772 + $0x58] sm:$0xff]
        %v1785 = vld [vmem:[%s1772 + $0x60] sm:$0xff]
        %v1786 = vld [vmem:[%s1772 + $0x68] sm:$0xff]
        %v1787 = vld [vmem:[%s1772 + $0x70] sm:$0xff]
        %v1788 = vld [vmem:[%s1772 + $0x78] sm:$0xff]
        %v1789 = vld [vmem:[%s1772 + $0x80] sm:$0xff]
        %v1790 = vld [vmem:[%s1772 + $0x88] sm:$0xff]
        %v1791 = vld [vmem:[%s1772 + $0x90] sm:$0xff]
        %v1792 = vld [vmem:[%s1772 + $0x98] sm:$0xff]
        %v1793 = vld [vmem:[%s1772 + $0xa0] sm:$0xff]
        %v1794 = vld [vmem:[%s1772 + $0xa8] sm:$0xff]
        %v1795 = vld [vmem:[%s1772 + $0xb0] sm:$0xff]
        %v1796 = vld [vmem:[%s1772 + $0xb8] sm:$0xff]
        %v1797 = vld [vmem:[%s1772 + $0xc0] sm:$0xff]
        %v1798 = vld [vmem:[%s1772 + $0xc8] sm:$0xff]
        %v1799 = vld [vmem:[%s1772 + $0xd0] sm:$0xff]
        %v1800 = vld [vmem:[%s1772 + $0xd8] sm:$0xff]
        %v1801 = vld [vmem:[%s1772 + $0xe0] sm:$0xff]
        %v1802 = vld [vmem:[%s1772 + $0xe8] sm:$0xff]
        %v1803 = vld [vmem:[%s1772 + $0xf0] sm:$0xff]
        %v1804 = vld [vmem:[%s1772 + $0xf8] sm:$0xff]
        %v1813 = vsel %vm1100, %v1741, %v1729
        %v1814 = vsel %vm1102, %v1753, %v1813
        %v1815 = vsel %vm1104, %v1765, %v1814
        %v1816 = vsel %vm1100, %v1747, %v1735
        %v1817 = vsel %vm1102, %v1759, %v1816
        %v1818 = vsel %vm1104, %v1771, %v1817
        %1821 = vmatprep.subr.mxu0 0.0
        %1822 = vmatpush1.msra.mxu0 %v1773
        %1823 = vmatprep.subr.mxu0 0.0
        %1824 = vmatpush1.msra.mxu0 %v1774
        %1825 = vmatprep.subr.mxu0 0.0
        %1826 = vmatpush1.msra.mxu0 %v1775
        %1827 = vmatprep.subr.mxu0 0.0
        %1828 = vmatpush1.msra.mxu0 %v1776
        %1829 = vmatprep.subr.mxu0 0.0
        %1830 = vmatpush1.msra.mxu0 %v1777
        %1831 = vmatprep.subr.mxu0 0.0
        %1832 = vmatpush1.msra.mxu0 %v1778
        %1833 = vmatprep.subr.mxu0 0.0
        %1834 = vmatpush1.msra.mxu0 %v1779
        %1835 = vmatprep.subr.mxu0 0.0
        %1836 = vmatpush1.msra.mxu0 %v1780
        %1837 = vmatprep.subr.mxu0 0.0
        %1838 = vmatpush1.msra.mxu0 %v1781
        %1839 = vmatprep.subr.mxu0 0.0
        %1840 = vmatpush1.msra.mxu0 %v1782
        %1841 = vmatprep.subr.mxu0 0.0
        %1842 = vmatpush1.msra.mxu0 %v1783
        %1843 = vmatprep.subr.mxu0 0.0
        %1844 = vmatpush1.msra.mxu0 %v1784
        %1845 = vmatprep.subr.mxu0 0.0
        %1846 = vmatpush1.msra.mxu0 %v1785
        %1847 = vmatprep.subr.mxu0 0.0
        %1848 = vmatpush1.msra.mxu0 %v1786
        %1849 = vmatprep.subr.mxu0 0.0
        %1850 = vmatpush1.msra.mxu0 %v1787
        %1851 = vmatprep.subr.mxu0 0.0
        %1852 = vmatpush1.msra.mxu0 %v1788
        %1853 = vmatprep.subr.mxu0 0.0
        %1854 = vmatpush1.msra.mxu0 %v1789
        %1855 = vmatprep.subr.mxu0 0.0
        %1856 = vmatpush1.msra.mxu0 %v1790
        %1857 = vmatprep.subr.mxu0 0.0
        %1858 = vmatpush1.msra.mxu0 %v1791
        %1859 = vmatprep.subr.mxu0 0.0
        %1860 = vmatpush1.msra.mxu0 %v1792
        %1861 = vmatprep.subr.mxu0 0.0
        %1862 = vmatpush1.msra.mxu0 %v1793
        %1863 = vmatprep.subr.mxu0 0.0
        %1864 = vmatpush1.msra.mxu0 %v1794
        %1865 = vmatprep.subr.mxu0 0.0
        %1866 = vmatpush1.msra.mxu0 %v1795
        %1867 = vmatprep.subr.mxu0 0.0
        %1868 = vmatpush1.msra.mxu0 %v1796
        %1869 = vmatprep.subr.mxu0 0.0
        %1870 = vmatpush1.msra.mxu0 %v1797
        %1871 = vmatprep.subr.mxu0 0.0
        %1872 = vmatpush1.msra.mxu0 %v1798
        %1873 = vmatprep.subr.mxu0 0.0
        %1874 = vmatpush1.msra.mxu0 %v1799
        %1875 = vmatprep.subr.mxu0 0.0
        %1876 = vmatpush1.msra.mxu0 %v1800
        %1877 = vmatprep.subr.mxu0 0.0
        %1878 = vmatpush1.msra.mxu0 %v1801
        %1879 = vmatprep.subr.mxu0 0.0
        %1880 = vmatpush1.msra.mxu0 %v1802
        %1881 = vmatprep.subr.mxu0 0.0
        %1882 = vmatpush1.msra.mxu0 %v1803
        %1883 = vmatprep.subr.mxu0 0.0
        %1884 = vmatpush1.msra.mxu0 %v1804
        %1885 = vmatprep.mubr.f32.mxu0 %v1818
        %1886 = vmatmul.mubr.f32.gmra.mrb[0].mxu0 %v1815
        %v1887 = vpop.f32.mrb[0].mxu0
        %v1888 = vadd.f32 0.0, %v1887
        %v1889 = vpop.f32.mrb[0].mxu0
        %1890 = vdwg.mxu0
        %v1899 = vsel %vm1100, %v1653, %v1641
        %v1900 = vsel %vm1102, %v1665, %v1899
        %v1901 = vsel %vm1104, %v1677, %v1900
        %v1902 = vsel %vm1100, %v1659, %v1647
        %v1903 = vsel %vm1102, %v1671, %v1902
        %v1904 = vsel %vm1104, %v1683, %v1903
        %1907 = vmatprep.subr.mxu0 0.0
        %1908 = vmatpush1.msra.mxu0 %v1684
        %1909 = vmatprep.subr.mxu0 0.0
        %1910 = vmatpush1.msra.mxu0 %v1685
        %1911 = vmatprep.subr.mxu0 0.0
        %1912 = vmatpush1.msra.mxu0 %v1686
        %1913 = vmatprep.subr.mxu0 0.0
        %1914 = vmatpush1.msra.mxu0 %v1687
        %1915 = vmatprep.subr.mxu0 0.0
        %1916 = vmatpush1.msra.mxu0 %v1688
        %1917 = vmatprep.subr.mxu0 0.0
        %1918 = vmatpush1.msra.mxu0 %v1689
        %1919 = vmatprep.subr.mxu0 0.0
        %1920 = vmatpush1.msra.mxu0 %v1690
        %1921 = vmatprep.subr.mxu0 0.0
        %1922 = vmatpush1.msra.mxu0 %v1691
        %1923 = vmatprep.subr.mxu0 0.0
        %1924 = vmatpush1.msra.mxu0 %v1692
        %1925 = vmatprep.subr.mxu0 0.0
        %1926 = vmatpush1.msra.mxu0 %v1693
        %1927 = vmatprep.subr.mxu0 0.0
        %1928 = vmatpush1.msra.mxu0 %v1694
        %1929 = vmatprep.subr.mxu0 0.0
        %1930 = vmatpush1.msra.mxu0 %v1695
        %1931 = vmatprep.subr.mxu0 0.0
        %1932 = vmatpush1.msra.mxu0 %v1696
        %1933 = vmatprep.subr.mxu0 0.0
        %1934 = vmatpush1.msra.mxu0 %v1697
        %1935 = vmatprep.subr.mxu0 0.0
        %1936 = vmatpush1.msra.mxu0 %v1698
        %1937 = vmatprep.subr.mxu0 0.0
        %1938 = vmatpush1.msra.mxu0 %v1699
        %1939 = vmatprep.subr.mxu0 0.0
        %1940 = vmatpush1.msra.mxu0 %v1700
        %1941 = vmatprep.subr.mxu0 0.0
        %1942 = vmatpush1.msra.mxu0 %v1701
        %1943 = vmatprep.subr.mxu0 0.0
        %1944 = vmatpush1.msra.mxu0 %v1702
        %1945 = vmatprep.subr.mxu0 0.0
        %1946 = vmatpush1.msra.mxu0 %v1703
        %1947 = vmatprep.subr.mxu0 0.0
        %1948 = vmatpush1.msra.mxu0 %v1704
        %1949 = vmatprep.subr.mxu0 0.0
        %1950 = vmatpush1.msra.mxu0 %v1705
        %1951 = vmatprep.subr.mxu0 0.0
        %1952 = vmatpush1.msra.mxu0 %v1706
        %1953 = vmatprep.subr.mxu0 0.0
        %1954 = vmatpush1.msra.mxu0 %v1707
        %1955 = vmatprep.subr.mxu0 0.0
        %1956 = vmatpush1.msra.mxu0 %v1708
        %1957 = vmatprep.subr.mxu0 0.0
        %1958 = vmatpush1.msra.mxu0 %v1709
        %1959 = vmatprep.subr.mxu0 0.0
        %1960 = vmatpush1.msra.mxu0 %v1710
        %1961 = vmatprep.subr.mxu0 0.0
        %1962 = vmatpush1.msra.mxu0 %v1711
        %1963 = vmatprep.subr.mxu0 0.0
        %1964 = vmatpush1.msra.mxu0 %v1712
        %1965 = vmatprep.subr.mxu0 0.0
        %1966 = vmatpush1.msra.mxu0 %v1713
        %1967 = vmatprep.subr.mxu0 0.0
        %1968 = vmatpush1.msra.mxu0 %v1714
        %1969 = vmatprep.subr.mxu0 0.0
        %1970 = vmatpush1.msra.mxu0 %v1715
        %1971 = vmatprep.mubr.f32.mxu0 %v1904
        %1972 = vmatmul.mubr.f32.gmra.mrb[0].mxu0 %v1901
        %v1973 = vpop.f32.mrb[0].mxu0
        %v1974 = vadd.f32 %v1888, %v1973
        %v1975 = vpop.f32.mrb[0].mxu0
        %1976 = vdwg.mxu0
        %v1977 = vmul.f32 %v1578, %v1626
        %v1978 = vmul.f32 %v1580, %v1627
        %v1979 = vmul.f32 %v1592, %v1626
        %v1980 = vmul.f32 %v1594, %v1627
        %v1981 = vmul.f32 %v1608, %v1626
        %v1982 = vmul.f32 %v1610, %v1627
        %v1983 = vmul.f32 %v1622, %v1626
        %v1984 = vmul.f32 %v1624, %v1627
        %v1985 = vrot.slane %v1977, 4
        %v1986 = vadd.f32 %v1977, %v1985
        %v1987 = vrot.slane %v1986, 2
        %v1988 = vadd.f32 %v1986, %v1987
        %v1989 = vrot.slane %v1988, 1
        %v1990 = vadd.f32 %v1988, %v1989
        %v1991 = vrot.slane %v1978, 4
        %v1992 = vadd.f32 %v1978, %v1991
        %v1993 = vrot.slane %v1992, 2
        %v1994 = vadd.f32 %v1992, %v1993
        %v1995 = vrot.slane %v1994, 1
        %v1996 = vadd.f32 %v1994, %v1995
        %v1997 = vrot.slane %v1979, 4
        %v1998 = vadd.f32 %v1979, %v1997
        %v1999 = vrot.slane %v1998, 2
        %v2000 = vadd.f32 %v1998, %v1999
        %v2001 = vrot.slane %v2000, 1
        %v2002 = vadd.f32 %v2000, %v2001
        %v2003 = vrot.slane %v1980, 4
        %v2004 = vadd.f32 %v1980, %v2003
        %v2005 = vrot.slane %v2004, 2
        %v2006 = vadd.f32 %v2004, %v2005
        %v2007 = vrot.slane %v2006, 1
        %v2008 = vadd.f32 %v2006, %v2007
        %v2009 = vrot.slane %v1981, 4
        %v2010 = vadd.f32 %v1981, %v2009
        %v2011 = vrot.slane %v2010, 2
        %v2012 = vadd.f32 %v2010, %v2011
        %v2013 = vrot.slane %v2012, 1
        %v2014 = vadd.f32 %v2012, %v2013
        %v2015 = vrot.slane %v1982, 4
        %v2016 = vadd.f32 %v1982, %v2015
        %v2017 = vrot.slane %v2016, 2
        %v2018 = vadd.f32 %v2016, %v2017
        %v2019 = vrot.slane %v2018, 1
        %v2020 = vadd.f32 %v2018, %v2019
        %v2021 = vrot.slane %v1983, 4
        %v2022 = vadd.f32 %v1983, %v2021
        %v2023 = vrot.slane %v2022, 2
        %v2024 = vadd.f32 %v2022, %v2023
        %v2025 = vrot.slane %v2024, 1
        %v2026 = vadd.f32 %v2024, %v2025
        %v2027 = vrot.slane %v1984, 4
        %v2028 = vadd.f32 %v1984, %v2027
        %v2029 = vrot.slane %v2028, 2
        %v2030 = vadd.f32 %v2028, %v2029
        %v2031 = vrot.slane %v2030, 1
        %v2032 = vadd.f32 %v2030, %v2031
        %s2033 = scalar_lea.vmem [#allocation5], 512
        %v2034 = vld [vmem:[%s2033] sm:$0xff]
        %v2035 = vld [vmem:[%s2033 + $0x8] sm:$0xff]
        %v2036 = vld [vmem:[%s2033 + $0x10] sm:$0xff]
        %v2037 = vld [vmem:[%s2033 + $0x18] sm:$0xff]
        %v2038 = vld [vmem:[%s2033 + $0x20] sm:$0xff]
        %v2039 = vld [vmem:[%s2033 + $0x28] sm:$0xff]
        %v2040 = vld [vmem:[%s2033 + $0x30] sm:$0xff]
        %v2041 = vld [vmem:[%s2033 + $0x38] sm:$0xff]
        %v2042 = vld [vmem:[%s2033 + $0x40] sm:$0xff]
        %v2043 = vld [vmem:[%s2033 + $0x48] sm:$0xff]
        %v2044 = vld [vmem:[%s2033 + $0x50] sm:$0xff]
        %v2045 = vld [vmem:[%s2033 + $0x58] sm:$0xff]
        %v2046 = vld [vmem:[%s2033 + $0x60] sm:$0xff]
        %v2047 = vld [vmem:[%s2033 + $0x68] sm:$0xff]
        %v2048 = vld [vmem:[%s2033 + $0x70] sm:$0xff]
        %v2049 = vld [vmem:[%s2033 + $0x78] sm:$0xff]
        %v2050 = vld [vmem:[%s2033 + $0x80] sm:$0xff]
        %v2051 = vld [vmem:[%s2033 + $0x88] sm:$0xff]
        %v2052 = vld [vmem:[%s2033 + $0x90] sm:$0xff]
        %v2053 = vld [vmem:[%s2033 + $0x98] sm:$0xff]
        %v2054 = vld [vmem:[%s2033 + $0xa0] sm:$0xff]
        %v2055 = vld [vmem:[%s2033 + $0xa8] sm:$0xff]
        %v2056 = vld [vmem:[%s2033 + $0xb0] sm:$0xff]
        %v2057 = vld [vmem:[%s2033 + $0xb8] sm:$0xff]
        %v2058 = vld [vmem:[%s2033 + $0xc0] sm:$0xff]
        %v2059 = vld [vmem:[%s2033 + $0xc8] sm:$0xff]
        %v2060 = vld [vmem:[%s2033 + $0xd0] sm:$0xff]
        %v2061 = vld [vmem:[%s2033 + $0xd8] sm:$0xff]
        %v2062 = vld [vmem:[%s2033 + $0xe0] sm:$0xff]
        %v2063 = vld [vmem:[%s2033 + $0xe8] sm:$0xff]
        %v2064 = vld [vmem:[%s2033 + $0xf0] sm:$0xff]
        %v2065 = vld [vmem:[%s2033 + $0xf8] sm:$0xff]
        %v2074 = vsel %vm1100, %v2002, %v1990
        %v2075 = vsel %vm1102, %v2014, %v2074
        %v2076 = vsel %vm1104, %v2026, %v2075
        %v2077 = vsel %vm1100, %v2008, %v1996
        %v2078 = vsel %vm1102, %v2020, %v2077
        %v2079 = vsel %vm1104, %v2032, %v2078
        %2082 = vmatprep.subr.mxu0 0.0
        %2083 = vmatpush1.msra.mxu0 %v2034
        %2084 = vmatprep.subr.mxu0 0.0
        %2085 = vmatpush1.msra.mxu0 %v2035
        %2086 = vmatprep.subr.mxu0 0.0
        %2087 = vmatpush1.msra.mxu0 %v2036
        %2088 = vmatprep.subr.mxu0 0.0
        %2089 = vmatpush1.msra.mxu0 %v2037
        %2090 = vmatprep.subr.mxu0 0.0
        %2091 = vmatpush1.msra.mxu0 %v2038
        %2092 = vmatprep.subr.mxu0 0.0
        %2093 = vmatpush1.msra.mxu0 %v2039
        %2094 = vmatprep.subr.mxu0 0.0
        %2095 = vmatpush1.msra.mxu0 %v2040
        %2096 = vmatprep.subr.mxu0 0.0
        %2097 = vmatpush1.msra.mxu0 %v2041
        %2098 = vmatprep.subr.mxu0 0.0
        %2099 = vmatpush1.msra.mxu0 %v2042
        %2100 = vmatprep.subr.mxu0 0.0
        %2101 = vmatpush1.msra.mxu0 %v2043
        %2102 = vmatprep.subr.mxu0 0.0
        %2103 = vmatpush1.msra.mxu0 %v2044
        %2104 = vmatprep.subr.mxu0 0.0
        %2105 = vmatpush1.msra.mxu0 %v2045
        %2106 = vmatprep.subr.mxu0 0.0
        %2107 = vmatpush1.msra.mxu0 %v2046
        %2108 = vmatprep.subr.mxu0 0.0
        %2109 = vmatpush1.msra.mxu0 %v2047
        %2110 = vmatprep.subr.mxu0 0.0
        %2111 = vmatpush1.msra.mxu0 %v2048
        %2112 = vmatprep.subr.mxu0 0.0
        %2113 = vmatpush1.msra.mxu0 %v2049
        %2114 = vmatprep.subr.mxu0 0.0
        %2115 = vmatpush1.msra.mxu0 %v2050
        %2116 = vmatprep.subr.mxu0 0.0
        %2117 = vmatpush1.msra.mxu0 %v2051
        %2118 = vmatprep.subr.mxu0 0.0
        %2119 = vmatpush1.msra.mxu0 %v2052
        %2120 = vmatprep.subr.mxu0 0.0
        %2121 = vmatpush1.msra.mxu0 %v2053
        %2122 = vmatprep.subr.mxu0 0.0
        %2123 = vmatpush1.msra.mxu0 %v2054
        %2124 = vmatprep.subr.mxu0 0.0
        %2125 = vmatpush1.msra.mxu0 %v2055
        %2126 = vmatprep.subr.mxu0 0.0
        %2127 = vmatpush1.msra.mxu0 %v2056
        %2128 = vmatprep.subr.mxu0 0.0
        %2129 = vmatpush1.msra.mxu0 %v2057
        %2130 = vmatprep.subr.mxu0 0.0
        %2131 = vmatpush1.msra.mxu0 %v2058
        %2132 = vmatprep.subr.mxu0 0.0
        %2133 = vmatpush1.msra.mxu0 %v2059
        %2134 = vmatprep.subr.mxu0 0.0
        %2135 = vmatpush1.msra.mxu0 %v2060
        %2136 = vmatprep.subr.mxu0 0.0
        %2137 = vmatpush1.msra.mxu0 %v2061
        %2138 = vmatprep.subr.mxu0 0.0
        %2139 = vmatpush1.msra.mxu0 %v2062
        %2140 = vmatprep.subr.mxu0 0.0
        %2141 = vmatpush1.msra.mxu0 %v2063
        %2142 = vmatprep.subr.mxu0 0.0
        %2143 = vmatpush1.msra.mxu0 %v2064
        %2144 = vmatprep.subr.mxu0 0.0
        %2145 = vmatpush1.msra.mxu0 %v2065
        %2146 = vmatprep.mubr.f32.mxu0 %v2079
        %2147 = vmatmul.mubr.f32.gmra.mrb[0].mxu0 %v2076
        %v2148 = vpop.f32.mrb[0].mxu0
        %v2149 = vadd.f32 0.0, %v2148
        %v2150 = vpop.f32.mrb[0].mxu0
        %2151 = vdwg.mxu0
        %v2152 = vadd.f32 %v1974, %v2149
        %v2153 = vadd.f32 %v1458, %v2152
        %v2154 = vld [vmem:[%s590] sm:$0xf]
        %v2155 = vld [vmem:[%s590 + $0x4] sm:$0xf]
        %v2156 = vld [vmem:[%s590 + $0x8] sm:$0xf]
        %v2157 = vld [vmem:[%s590 + $0xc] sm:$0xf]
        %v2158 = vld [vmem:[%s590 + $0x10] sm:$0xf]
        %v2159 = vld [vmem:[%s590 + $0x14] sm:$0xf]
        %v2160 = vld [vmem:[%s590 + $0x18] sm:$0xf]
        %v2161 = vld [vmem:[%s590 + $0x1c] sm:$0xf]
        %v2162 = vld [vmem:[%s590 + $0x20] sm:$0xf]
        %v2163 = vld [vmem:[%s590 + $0x24] sm:$0xf]
        %v2164 = vld [vmem:[%s590 + $0x28] sm:$0xf]
        %v2165 = vld [vmem:[%s590 + $0x2c] sm:$0xf]
        %v2166 = vld [vmem:[%s5] sm:$0xf]
        %v2179 = vunpack.c.l.b16 %v2154
        %v2180 = vunpack.c.l.b16 %v2155
        %v2181 = vunpack.c.l.b16 %v2156
        %v2182 = vunpack.c.l.b16 %v2157
        %v2183 = vunpack.c.l.b16 %v2158
        %v2184 = vunpack.c.l.b16 %v2159
        %v2185 = vunpack.c.l.b16 %v2160
        %v2186 = vunpack.c.l.b16 %v2161
        %v2187 = vunpack.c.l.b16 %v2162
        %v2188 = vunpack.c.l.b16 %v2163
        %v2189 = vunpack.c.l.b16 %v2164
        %v2190 = vunpack.c.l.b16 %v2165
        %v2191 = vpack.c.b16 %v2180, %v2179
        %v2192 = vpack.c.b16 %v2182, %v2181
        %v2193 = vpack.c.b16 %v2184, %v2183
        %v2194 = vpack.c.b16 %v2186, %v2185
        %v2195 = vpack.c.b16 %v2188, %v2187
        %v2196 = vpack.c.b16 %v2190, %v2189
        %v2199 = vunpack.c.l.s4 1983009808
        %v2200 = vunpack.c.0.s8 %v2199
        %v2201 = vlaneseq
        %v2202 = vshrl.u32 %v2201, 7
        %v2203 = vsub.s32 %v2200, %v2202
        %v2204 = vrot.slane %v2166, %v2203
        %v2205 = vcombine.high %v2204, %v2204
        %vm2206 = vcmask 31744
        %v2208 = vsel %vm2206, %v2191, 0
        %v2211 = vsel %vm2206, %v2192, 0
        %v2214 = vsel %vm2206, %v2193, 0
        %v2217 = vsel %vm2206, %v2194, 0
        %v2220 = vsel %vm2206, %v2195, 0
        %v2223 = vsel %vm2206, %v2196, 0
        %vm2225 = vcmask 1041408
        %v2227 = vsel %vm2225, %v2204, 0
        %v2230 = vsel %vm2225, %v2205, 0
        %2232 = vmatprep.subr.bf16.mxu0 %v2230
        %2233 = vmatpush1.bf16.msra.mxu0 %v2227
        %2234 = vmatprep.subr.bf16.mxu0 0
        %2235 = vmatpush1.bf16.msra.mxu0 0
        %2236 = vmatprep.subr.bf16.mxu0 0
        %2237 = vmatpush1.bf16.msra.mxu0 0
        %2238 = vmatprep.subr.bf16.mxu0 0
        %2239 = vmatpush1.bf16.msra.mxu0 0
        %2240 = vmatprep.subr.bf16.mxu0 0
        %2241 = vmatpush1.bf16.msra.mxu0 0
        %2242 = vmatprep.subr.bf16.mxu0 0
        %2243 = vmatpush1.bf16.msra.mxu0 0
        %2244 = vmatprep.subr.bf16.mxu0 0
        %2245 = vmatpush1.bf16.msra.mxu0 0
        %2246 = vmatprep.subr.bf16.mxu0 0
        %2247 = vmatpush1.bf16.msra.mxu0 0
        %2248 = vmatprep.subr.bf16.mxu0 0
        %2249 = vmatpush1.bf16.msra.mxu0 0
        %2250 = vmatprep.subr.bf16.mxu0 0
        %2251 = vmatpush1.bf16.msra.mxu0 0
        %2252 = vmatprep.subr.bf16.mxu0 0
        %2253 = vmatpush1.bf16.msra.mxu0 0
        %2254 = vmatprep.subr.bf16.mxu0 0
        %2255 = vmatpush1.bf16.msra.mxu0 0
        %2256 = vmatprep.subr.bf16.mxu0 0
        %2257 = vmatpush1.bf16.msra.mxu0 0
        %2258 = vmatprep.subr.bf16.mxu0 0
        %2259 = vmatpush1.bf16.msra.mxu0 0
        %2260 = vmatprep.subr.bf16.mxu0 0
        %2261 = vmatpush1.bf16.msra.mxu0 0
        %2262 = vmatprep.subr.bf16.mxu0 0
        %2263 = vmatpush1.bf16.msra.mxu0 0
        %2264 = vmatprep.mubr.bf16.mxu0 0
        %2265 = vmatmul.mubr.bf16.gmra.mrb[0].mxu0 %v2208
        %v2266 = vpop.f32.mrb[0].mxu0
        %v2267 = vadd.f32 0.0, %v2266
        %v2268 = vpop.f32.mrb[0].mxu0
        %v2269 = vadd.f32 0.0, %v2268
        %v2270 = vpop.f32.mrb[0].mxu0
        %v2271 = vadd.f32 0.0, %v2270
        %v2272 = vpop.f32.mrb[0].mxu0
        %v2273 = vadd.f32 0.0, %v2272
        %2274 = vmatprep.mubr.bf16.mxu0 0
        %2275 = vmatmul.mubr.bf16.gmra.mrb[0].mxu0 %v2211
        %v2276 = vpop.f32.mrb[0].mxu0
        %v2277 = vadd.f32 0.0, %v2276
        %v2278 = vpop.f32.mrb[0].mxu0
        %v2279 = vadd.f32 0.0, %v2278
        %v2280 = vpop.f32.mrb[0].mxu0
        %v2281 = vadd.f32 0.0, %v2280
        %v2282 = vpop.f32.mrb[0].mxu0
        %v2283 = vadd.f32 0.0, %v2282
        %2284 = vmatprep.mubr.bf16.mxu0 0
        %2285 = vmatmul.mubr.bf16.gmra.mrb[0].mxu0 %v2214
        %v2286 = vpop.f32.mrb[0].mxu0
        %v2287 = vadd.f32 0.0, %v2286
        %v2288 = vpop.f32.mrb[0].mxu0
        %v2289 = vadd.f32 0.0, %v2288
        %v2290 = vpop.f32.mrb[0].mxu0
        %v2291 = vadd.f32 0.0, %v2290
        %v2292 = vpop.f32.mrb[0].mxu0
        %v2293 = vadd.f32 0.0, %v2292
        %2294 = vmatprep.mubr.bf16.mxu0 0
        %2295 = vmatmul.mubr.bf16.gmra.mrb[0].mxu0 %v2217
        %v2296 = vpop.f32.mrb[0].mxu0
        %v2297 = vadd.f32 0.0, %v2296
        %v2298 = vpop.f32.mrb[0].mxu0
        %v2299 = vadd.f32 0.0, %v2298
        %v2300 = vpop.f32.mrb[0].mxu0
        %v2301 = vadd.f32 0.0, %v2300
        %v2302 = vpop.f32.mrb[0].mxu0
        %v2303 = vadd.f32 0.0, %v2302
        %2304 = vmatprep.mubr.bf16.mxu0 0
        %2305 = vmatmul.mubr.bf16.gmra.mrb[0].mxu0 %v2220
        %v2306 = vpop.f32.mrb[0].mxu0
        %v2307 = vadd.f32 0.0, %v2306
        %v2308 = vpop.f32.mrb[0].mxu0
        %v2309 = vadd.f32 0.0, %v2308
        %v2310 = vpop.f32.mrb[0].mxu0
        %v2311 = vadd.f32 0.0, %v2310
        %v2312 = vpop.f32.mrb[0].mxu0
        %v2313 = vadd.f32 0.0, %v2312
        %2314 = vmatprep.mubr.bf16.mxu0 0
        %2315 = vmatmul.mubr.bf16.gmra.mrb[0].mxu0 %v2223
        %v2316 = vpop.f32.mrb[0].mxu0
        %v2317 = vadd.f32 0.0, %v2316
        %v2318 = vpop.f32.mrb[0].mxu0
        %v2319 = vadd.f32 0.0, %v2318
        %v2320 = vpop.f32.mrb[0].mxu0
        %v2321 = vadd.f32 0.0, %v2320
        %v2322 = vpop.f32.mrb[0].mxu0
        %v2323 = vadd.f32 0.0, %v2322
        %2324 = vdwg.mxu0
        %v2325 = vld [vmem:[%s8] sm:$0xff]
        %v2326 = vld [vmem:[%s8 + $0x8] sm:$0xff]
        %v2327 = vmul.f32 %v2267, %v2325
        %v2328 = vmul.f32 %v2269, %v2326
        %v2329 = vmul.f32 %v2281, %v2325
        %v2330 = vmul.f32 %v2283, %v2326
        %v2331 = vmul.f32 %v2297, %v2325
        %v2332 = vmul.f32 %v2299, %v2326
        %v2333 = vmul.f32 %v2311, %v2325
        %v2334 = vmul.f32 %v2313, %v2326
        %v2335 = vrot.slane %v2327, 4
        %v2336 = vadd.f32 %v2327, %v2335
        %v2337 = vrot.slane %v2336, 2
        %v2338 = vadd.f32 %v2336, %v2337
        %v2339 = vrot.slane %v2338, 1
        %v2340 = vadd.f32 %v2338, %v2339
        %v2341 = vrot.slane %v2328, 4
        %v2342 = vadd.f32 %v2328, %v2341
        %v2343 = vrot.slane %v2342, 2
        %v2344 = vadd.f32 %v2342, %v2343
        %v2345 = vrot.slane %v2344, 1
        %v2346 = vadd.f32 %v2344, %v2345
        %v2347 = vrot.slane %v2329, 4
        %v2348 = vadd.f32 %v2329, %v2347
        %v2349 = vrot.slane %v2348, 2
        %v2350 = vadd.f32 %v2348, %v2349
        %v2351 = vrot.slane %v2350, 1
        %v2352 = vadd.f32 %v2350, %v2351
        %v2353 = vrot.slane %v2330, 4
        %v2354 = vadd.f32 %v2330, %v2353
        %v2355 = vrot.slane %v2354, 2
        %v2356 = vadd.f32 %v2354, %v2355
        %v2357 = vrot.slane %v2356, 1
        %v2358 = vadd.f32 %v2356, %v2357
        %v2359 = vrot.slane %v2331, 4
        %v2360 = vadd.f32 %v2331, %v2359
        %v2361 = vrot.slane %v2360, 2
        %v2362 = vadd.f32 %v2360, %v2361
        %v2363 = vrot.slane %v2362, 1
        %v2364 = vadd.f32 %v2362, %v2363
        %v2365 = vrot.slane %v2332, 4
        %v2366 = vadd.f32 %v2332, %v2365
        %v2367 = vrot.slane %v2366, 2
        %v2368 = vadd.f32 %v2366, %v2367
        %v2369 = vrot.slane %v2368, 1
        %v2370 = vadd.f32 %v2368, %v2369
        %v2371 = vrot.slane %v2333, 4
        %v2372 = vadd.f32 %v2333, %v2371
        %v2373 = vrot.slane %v2372, 2
        %v2374 = vadd.f32 %v2372, %v2373
        %v2375 = vrot.slane %v2374, 1
        %v2376 = vadd.f32 %v2374, %v2375
        %v2377 = vrot.slane %v2334, 4
        %v2378 = vadd.f32 %v2334, %v2377
        %v2379 = vrot.slane %v2378, 2
        %v2380 = vadd.f32 %v2378, %v2379
        %v2381 = vrot.slane %v2380, 1
        %v2382 = vadd.f32 %v2380, %v2381
        %v2383 = vld [vmem:[#allocation7] sm:$0xff]
        %v2384 = vld [vmem:[#allocation7 + $0x8] sm:$0xff]
        %v2385 = vld [vmem:[#allocation7 + $0x10] sm:$0xff]
        %v2386 = vld [vmem:[#allocation7 + $0x18] sm:$0xff]
        %v2387 = vld [vmem:[#allocation7 + $0x20] sm:$0xff]
        %v2388 = vld [vmem:[#allocation7 + $0x28] sm:$0xff]
        %v2389 = vld [vmem:[#allocation7 + $0x30] sm:$0xff]
        %v2390 = vld [vmem:[#allocation7 + $0x38] sm:$0xff]
        %v2391 = vld [vmem:[#allocation7 + $0x40] sm:$0xff]
        %v2392 = vld [vmem:[#allocation7 + $0x48] sm:$0xff]
        %v2393 = vld [vmem:[#allocation7 + $0x50] sm:$0xff]
        %v2394 = vld [vmem:[#allocation7 + $0x58] sm:$0xff]
        %v2395 = vld [vmem:[#allocation7 + $0x60] sm:$0xff]
        %v2396 = vld [vmem:[#allocation7 + $0x68] sm:$0xff]
        %v2397 = vld [vmem:[#allocation7 + $0x70] sm:$0xff]
        %v2398 = vld [vmem:[#allocation7 + $0x78] sm:$0xff]
        %v2399 = vld [vmem:[#allocation7 + $0x80] sm:$0xff]
        %v2400 = vld [vmem:[#allocation7 + $0x88] sm:$0xff]
        %v2401 = vld [vmem:[#allocation7 + $0x90] sm:$0xff]
        %v2402 = vld [vmem:[#allocation7 + $0x98] sm:$0xff]
        %v2403 = vld [vmem:[#allocation7 + $0xa0] sm:$0xff]
        %v2404 = vld [vmem:[#allocation7 + $0xa8] sm:$0xff]
        %v2405 = vld [vmem:[#allocation7 + $0xb0] sm:$0xff]
        %v2406 = vld [vmem:[#allocation7 + $0xb8] sm:$0xff]
        %v2407 = vld [vmem:[#allocation7 + $0xc0] sm:$0xff]
        %v2408 = vld [vmem:[#allocation7 + $0xc8] sm:$0xff]
        %v2409 = vld [vmem:[#allocation7 + $0xd0] sm:$0xff]
        %v2410 = vld [vmem:[#allocation7 + $0xd8] sm:$0xff]
        %v2411 = vld [vmem:[#allocation7 + $0xe0] sm:$0xff]
        %v2412 = vld [vmem:[#allocation7 + $0xe8] sm:$0xff]
        %v2413 = vld [vmem:[#allocation7 + $0xf0] sm:$0xff]
        %v2414 = vld [vmem:[#allocation7 + $0xf8] sm:$0xff]
        %v2415 = vmul.f32 %v2271, %v2325
        %v2416 = vmul.f32 %v2273, %v2326
        %v2417 = vmul.f32 %v2287, %v2325
        %v2418 = vmul.f32 %v2289, %v2326
        %v2419 = vmul.f32 %v2301, %v2325
        %v2420 = vmul.f32 %v2303, %v2326
        %v2421 = vmul.f32 %v2317, %v2325
        %v2422 = vmul.f32 %v2319, %v2326
        %v2423 = vrot.slane %v2415, 4
        %v2424 = vadd.f32 %v2415, %v2423
        %v2425 = vrot.slane %v2424, 2
        %v2426 = vadd.f32 %v2424, %v2425
        %v2427 = vrot.slane %v2426, 1
        %v2428 = vadd.f32 %v2426, %v2427
        %v2429 = vrot.slane %v2416, 4
        %v2430 = vadd.f32 %v2416, %v2429
        %v2431 = vrot.slane %v2430, 2
        %v2432 = vadd.f32 %v2430, %v2431
        %v2433 = vrot.slane %v2432, 1
        %v2434 = vadd.f32 %v2432, %v2433
        %v2435 = vrot.slane %v2417, 4
        %v2436 = vadd.f32 %v2417, %v2435
        %v2437 = vrot.slane %v2436, 2
        %v2438 = vadd.f32 %v2436, %v2437
        %v2439 = vrot.slane %v2438, 1
        %v2440 = vadd.f32 %v2438, %v2439
        %v2441 = vrot.slane %v2418, 4
        %v2442 = vadd.f32 %v2418, %v2441
        %v2443 = vrot.slane %v2442, 2
        %v2444 = vadd.f32 %v2442, %v2443
        %v2445 = vrot.slane %v2444, 1
        %v2446 = vadd.f32 %v2444, %v2445
        %v2447 = vrot.slane %v2419, 4
        %v2448 = vadd.f32 %v2419, %v2447
        %v2449 = vrot.slane %v2448, 2
        %v2450 = vadd.f32 %v2448, %v2449
        %v2451 = vrot.slane %v2450, 1
        %v2452 = vadd.f32 %v2450, %v2451
        %v2453 = vrot.slane %v2420, 4
        %v2454 = vadd.f32 %v2420, %v2453
        %v2455 = vrot.slane %v2454, 2
        %v2456 = vadd.f32 %v2454, %v2455
        %v2457 = vrot.slane %v2456, 1
        %v2458 = vadd.f32 %v2456, %v2457
        %v2459 = vrot.slane %v2421, 4
        %v2460 = vadd.f32 %v2421, %v2459
        %v2461 = vrot.slane %v2460, 2
        %v2462 = vadd.f32 %v2460, %v2461
        %v2463 = vrot.slane %v2462, 1
        %v2464 = vadd.f32 %v2462, %v2463
        %v2465 = vrot.slane %v2422, 4
        %v2466 = vadd.f32 %v2422, %v2465
        %v2467 = vrot.slane %v2466, 2
        %v2468 = vadd.f32 %v2466, %v2467
        %v2469 = vrot.slane %v2468, 1
        %v2470 = vadd.f32 %v2468, %v2469
        %s2471 = scalar_lea.vmem [#allocation7], 256
        %v2472 = vld [vmem:[%s2471] sm:$0xff]
        %v2473 = vld [vmem:[%s2471 + $0x8] sm:$0xff]
        %v2474 = vld [vmem:[%s2471 + $0x10] sm:$0xff]
        %v2475 = vld [vmem:[%s2471 + $0x18] sm:$0xff]
        %v2476 = vld [vmem:[%s2471 + $0x20] sm:$0xff]
        %v2477 = vld [vmem:[%s2471 + $0x28] sm:$0xff]
        %v2478 = vld [vmem:[%s2471 + $0x30] sm:$0xff]
        %v2479 = vld [vmem:[%s2471 + $0x38] sm:$0xff]
        %v2480 = vld [vmem:[%s2471 + $0x40] sm:$0xff]
        %v2481 = vld [vmem:[%s2471 + $0x48] sm:$0xff]
        %v2482 = vld [vmem:[%s2471 + $0x50] sm:$0xff]
        %v2483 = vld [vmem:[%s2471 + $0x58] sm:$0xff]
        %v2484 = vld [vmem:[%s2471 + $0x60] sm:$0xff]
        %v2485 = vld [vmem:[%s2471 + $0x68] sm:$0xff]
        %v2486 = vld [vmem:[%s2471 + $0x70] sm:$0xff]
        %v2487 = vld [vmem:[%s2471 + $0x78] sm:$0xff]
        %v2488 = vld [vmem:[%s2471 + $0x80] sm:$0xff]
        %v2489 = vld [vmem:[%s2471 + $0x88] sm:$0xff]
        %v2490 = vld [vmem:[%s2471 + $0x90] sm:$0xff]
        %v2491 = vld [vmem:[%s2471 + $0x98] sm:$0xff]
        %v2492 = vld [vmem:[%s2471 + $0xa0] sm:$0xff]
        %v2493 = vld [vmem:[%s2471 + $0xa8] sm:$0xff]
        %v2494 = vld [vmem:[%s2471 + $0xb0] sm:$0xff]
        %v2495 = vld [vmem:[%s2471 + $0xb8] sm:$0xff]
        %v2496 = vld [vmem:[%s2471 + $0xc0] sm:$0xff]
        %v2497 = vld [vmem:[%s2471 + $0xc8] sm:$0xff]
        %v2498 = vld [vmem:[%s2471 + $0xd0] sm:$0xff]
        %v2499 = vld [vmem:[%s2471 + $0xd8] sm:$0xff]
        %v2500 = vld [vmem:[%s2471 + $0xe0] sm:$0xff]
        %v2501 = vld [vmem:[%s2471 + $0xe8] sm:$0xff]
        %v2502 = vld [vmem:[%s2471 + $0xf0] sm:$0xff]
        %v2503 = vld [vmem:[%s2471 + $0xf8] sm:$0xff]
        %v2512 = vsel %vm1100, %v2440, %v2428
        %v2513 = vsel %vm1102, %v2452, %v2512
        %v2514 = vsel %vm1104, %v2464, %v2513
        %v2515 = vsel %vm1100, %v2446, %v2434
        %v2516 = vsel %vm1102, %v2458, %v2515
        %v2517 = vsel %vm1104, %v2470, %v2516
        %2520 = vmatprep.subr.mxu0 0.0
        %2521 = vmatpush1.msra.mxu0 %v2472
        %2522 = vmatprep.subr.mxu0 0.0
        %2523 = vmatpush1.msra.mxu0 %v2473
        %2524 = vmatprep.subr.mxu0 0.0
        %2525 = vmatpush1.msra.mxu0 %v2474
        %2526 = vmatprep.subr.mxu0 0.0
        %2527 = vmatpush1.msra.mxu0 %v2475
        %2528 = vmatprep.subr.mxu0 0.0
        %2529 = vmatpush1.msra.mxu0 %v2476
        %2530 = vmatprep.subr.mxu0 0.0
        %2531 = vmatpush1.msra.mxu0 %v2477
        %2532 = vmatprep.subr.mxu0 0.0
        %2533 = vmatpush1.msra.mxu0 %v2478
        %2534 = vmatprep.subr.mxu0 0.0
        %2535 = vmatpush1.msra.mxu0 %v2479
        %2536 = vmatprep.subr.mxu0 0.0
        %2537 = vmatpush1.msra.mxu0 %v2480
        %2538 = vmatprep.subr.mxu0 0.0
        %2539 = vmatpush1.msra.mxu0 %v2481
        %2540 = vmatprep.subr.mxu0 0.0
        %2541 = vmatpush1.msra.mxu0 %v2482
        %2542 = vmatprep.subr.mxu0 0.0
        %2543 = vmatpush1.msra.mxu0 %v2483
        %2544 = vmatprep.subr.mxu0 0.0
        %2545 = vmatpush1.msra.mxu0 %v2484
        %2546 = vmatprep.subr.mxu0 0.0
        %2547 = vmatpush1.msra.mxu0 %v2485
        %2548 = vmatprep.subr.mxu0 0.0
        %2549 = vmatpush1.msra.mxu0 %v2486
        %2550 = vmatprep.subr.mxu0 0.0
        %2551 = vmatpush1.msra.mxu0 %v2487
        %2552 = vmatprep.subr.mxu0 0.0
        %2553 = vmatpush1.msra.mxu0 %v2488
        %2554 = vmatprep.subr.mxu0 0.0
        %2555 = vmatpush1.msra.mxu0 %v2489
        %2556 = vmatprep.subr.mxu0 0.0
        %2557 = vmatpush1.msra.mxu0 %v2490
        %2558 = vmatprep.subr.mxu0 0.0
        %2559 = vmatpush1.msra.mxu0 %v2491
        %2560 = vmatprep.subr.mxu0 0.0
        %2561 = vmatpush1.msra.mxu0 %v2492
        %2562 = vmatprep.subr.mxu0 0.0
        %2563 = vmatpush1.msra.mxu0 %v2493
        %2564 = vmatprep.subr.mxu0 0.0
        %2565 = vmatpush1.msra.mxu0 %v2494
        %2566 = vmatprep.subr.mxu0 0.0
        %2567 = vmatpush1.msra.mxu0 %v2495
        %2568 = vmatprep.subr.mxu0 0.0
        %2569 = vmatpush1.msra.mxu0 %v2496
        %2570 = vmatprep.subr.mxu0 0.0
        %2571 = vmatpush1.msra.mxu0 %v2497
        %2572 = vmatprep.subr.mxu0 0.0
        %2573 = vmatpush1.msra.mxu0 %v2498
        %2574 = vmatprep.subr.mxu0 0.0
        %2575 = vmatpush1.msra.mxu0 %v2499
        %2576 = vmatprep.subr.mxu0 0.0
        %2577 = vmatpush1.msra.mxu0 %v2500
        %2578 = vmatprep.subr.mxu0 0.0
        %2579 = vmatpush1.msra.mxu0 %v2501
        %2580 = vmatprep.subr.mxu0 0.0
        %2581 = vmatpush1.msra.mxu0 %v2502
        %2582 = vmatprep.subr.mxu0 0.0
        %2583 = vmatpush1.msra.mxu0 %v2503
        %2584 = vmatprep.mubr.f32.mxu0 %v2517
        %2585 = vmatmul.mubr.f32.gmra.mrb[0].mxu0 %v2514
        %v2586 = vpop.f32.mrb[0].mxu0
        %v2587 = vadd.f32 0.0, %v2586
        %v2588 = vpop.f32.mrb[0].mxu0
        %2589 = vdwg.mxu0
        %v2598 = vsel %vm1100, %v2352, %v2340
        %v2599 = vsel %vm1102, %v2364, %v2598
        %v2600 = vsel %vm1104, %v2376, %v2599
        %v2601 = vsel %vm1100, %v2358, %v2346
        %v2602 = vsel %vm1102, %v2370, %v2601
        %v2603 = vsel %vm1104, %v2382, %v2602
        %2606 = vmatprep.subr.mxu0 0.0
        %2607 = vmatpush1.msra.mxu0 %v2383
        %2608 = vmatprep.subr.mxu0 0.0
        %2609 = vmatpush1.msra.mxu0 %v2384
        %2610 = vmatprep.subr.mxu0 0.0
        %2611 = vmatpush1.msra.mxu0 %v2385
        %2612 = vmatprep.subr.mxu0 0.0
        %2613 = vmatpush1.msra.mxu0 %v2386
        %2614 = vmatprep.subr.mxu0 0.0
        %2615 = vmatpush1.msra.mxu0 %v2387
        %2616 = vmatprep.subr.mxu0 0.0
        %2617 = vmatpush1.msra.mxu0 %v2388
        %2618 = vmatprep.subr.mxu0 0.0
        %2619 = vmatpush1.msra.mxu0 %v2389
        %2620 = vmatprep.subr.mxu0 0.0
        %2621 = vmatpush1.msra.mxu0 %v2390
        %2622 = vmatprep.subr.mxu0 0.0
        %2623 = vmatpush1.msra.mxu0 %v2391
        %2624 = vmatprep.subr.mxu0 0.0
        %2625 = vmatpush1.msra.mxu0 %v2392
        %2626 = vmatprep.subr.mxu0 0.0
        %2627 = vmatpush1.msra.mxu0 %v2393
        %2628 = vmatprep.subr.mxu0 0.0
        %2629 = vmatpush1.msra.mxu0 %v2394
        %2630 = vmatprep.subr.mxu0 0.0
        %2631 = vmatpush1.msra.mxu0 %v2395
        %2632 = vmatprep.subr.mxu0 0.0
        %2633 = vmatpush1.msra.mxu0 %v2396
        %2634 = vmatprep.subr.mxu0 0.0
        %2635 = vmatpush1.msra.mxu0 %v2397
        %2636 = vmatprep.subr.mxu0 0.0
        %2637 = vmatpush1.msra.mxu0 %v2398
        %2638 = vmatprep.subr.mxu0 0.0
        %2639 = vmatpush1.msra.mxu0 %v2399
        %2640 = vmatprep.subr.mxu0 0.0
        %2641 = vmatpush1.msra.mxu0 %v2400
        %2642 = vmatprep.subr.mxu0 0.0
        %2643 = vmatpush1.msra.mxu0 %v2401
        %2644 = vmatprep.subr.mxu0 0.0
        %2645 = vmatpush1.msra.mxu0 %v2402
        %2646 = vmatprep.subr.mxu0 0.0
        %2647 = vmatpush1.msra.mxu0 %v2403
        %2648 = vmatprep.subr.mxu0 0.0
        %2649 = vmatpush1.msra.mxu0 %v2404
        %2650 = vmatprep.subr.mxu0 0.0
        %2651 = vmatpush1.msra.mxu0 %v2405
        %2652 = vmatprep.subr.mxu0 0.0
        %2653 = vmatpush1.msra.mxu0 %v2406
        %2654 = vmatprep.subr.mxu0 0.0
        %2655 = vmatpush1.msra.mxu0 %v2407
        %2656 = vmatprep.subr.mxu0 0.0
        %2657 = vmatpush1.msra.mxu0 %v2408
        %2658 = vmatprep.subr.mxu0 0.0
        %2659 = vmatpush1.msra.mxu0 %v2409
        %2660 = vmatprep.subr.mxu0 0.0
        %2661 = vmatpush1.msra.mxu0 %v2410
        %2662 = vmatprep.subr.mxu0 0.0
        %2663 = vmatpush1.msra.mxu0 %v2411
        %2664 = vmatprep.subr.mxu0 0.0
        %2665 = vmatpush1.msra.mxu0 %v2412
        %2666 = vmatprep.subr.mxu0 0.0
        %2667 = vmatpush1.msra.mxu0 %v2413
        %2668 = vmatprep.subr.mxu0 0.0
        %2669 = vmatpush1.msra.mxu0 %v2414
        %2670 = vmatprep.mubr.f32.mxu0 %v2603
        %2671 = vmatmul.mubr.f32.gmra.mrb[0].mxu0 %v2600
        %v2672 = vpop.f32.mrb[0].mxu0
        %v2673 = vadd.f32 %v2587, %v2672
        %v2674 = vpop.f32.mrb[0].mxu0
        %2675 = vdwg.mxu0
        %v2676 = vmul.f32 %v2277, %v2325
        %v2677 = vmul.f32 %v2279, %v2326
        %v2678 = vmul.f32 %v2291, %v2325
        %v2679 = vmul.f32 %v2293, %v2326
        %v2680 = vmul.f32 %v2307, %v2325
        %v2681 = vmul.f32 %v2309, %v2326
        %v2682 = vmul.f32 %v2321, %v2325
        %v2683 = vmul.f32 %v2323, %v2326
        %v2684 = vrot.slane %v2676, 4
        %v2685 = vadd.f32 %v2676, %v2684
        %v2686 = vrot.slane %v2685, 2
        %v2687 = vadd.f32 %v2685, %v2686
        %v2688 = vrot.slane %v2687, 1
        %v2689 = vadd.f32 %v2687, %v2688
        %v2690 = vrot.slane %v2677, 4
        %v2691 = vadd.f32 %v2677, %v2690
        %v2692 = vrot.slane %v2691, 2
        %v2693 = vadd.f32 %v2691, %v2692
        %v2694 = vrot.slane %v2693, 1
        %v2695 = vadd.f32 %v2693, %v2694
        %v2696 = vrot.slane %v2678, 4
        %v2697 = vadd.f32 %v2678, %v2696
        %v2698 = vrot.slane %v2697, 2
        %v2699 = vadd.f32 %v2697, %v2698
        %v2700 = vrot.slane %v2699, 1
        %v2701 = vadd.f32 %v2699, %v2700
        %v2702 = vrot.slane %v2679, 4
        %v2703 = vadd.f32 %v2679, %v2702
        %v2704 = vrot.slane %v2703, 2
        %v2705 = vadd.f32 %v2703, %v2704
        %v2706 = vrot.slane %v2705, 1
        %v2707 = vadd.f32 %v2705, %v2706
        %v2708 = vrot.slane %v2680, 4
        %v2709 = vadd.f32 %v2680, %v2708
        %v2710 = vrot.slane %v2709, 2
        %v2711 = vadd.f32 %v2709, %v2710
        %v2712 = vrot.slane %v2711, 1
        %v2713 = vadd.f32 %v2711, %v2712
        %v2714 = vrot.slane %v2681, 4
        %v2715 = vadd.f32 %v2681, %v2714
        %v2716 = vrot.slane %v2715, 2
        %v2717 = vadd.f32 %v2715, %v2716
        %v2718 = vrot.slane %v2717, 1
        %v2719 = vadd.f32 %v2717, %v2718
        %v2720 = vrot.slane %v2682, 4
        %v2721 = vadd.f32 %v2682, %v2720
        %v2722 = vrot.slane %v2721, 2
        %v2723 = vadd.f32 %v2721, %v2722
        %v2724 = vrot.slane %v2723, 1
        %v2725 = vadd.f32 %v2723, %v2724
        %v2726 = vrot.slane %v2683, 4
        %v2727 = vadd.f32 %v2683, %v2726
        %v2728 = vrot.slane %v2727, 2
        %v2729 = vadd.f32 %v2727, %v2728
        %v2730 = vrot.slane %v2729, 1
        %v2731 = vadd.f32 %v2729, %v2730
        %s2732 = scalar_lea.vmem [#allocation7], 512
        %v2733 = vld [vmem:[%s2732] sm:$0xff]
        %v2734 = vld [vmem:[%s2732 + $0x8] sm:$0xff]
        %v2735 = vld [vmem:[%s2732 + $0x10] sm:$0xff]
        %v2736 = vld [vmem:[%s2732 + $0x18] sm:$0xff]
        %v2737 = vld [vmem:[%s2732 + $0x20] sm:$0xff]
        %v2738 = vld [vmem:[%s2732 + $0x28] sm:$0xff]
        %v2739 = vld [vmem:[%s2732 + $0x30] sm:$0xff]
        %v2740 = vld [vmem:[%s2732 + $0x38] sm:$0xff]
        %v2741 = vld [vmem:[%s2732 + $0x40] sm:$0xff]
        %v2742 = vld [vmem:[%s2732 + $0x48] sm:$0xff]
        %v2743 = vld [vmem:[%s2732 + $0x50] sm:$0xff]
        %v2744 = vld [vmem:[%s2732 + $0x58] sm:$0xff]
        %v2745 = vld [vmem:[%s2732 + $0x60] sm:$0xff]
        %v2746 = vld [vmem:[%s2732 + $0x68] sm:$0xff]
        %v2747 = vld [vmem:[%s2732 + $0x70] sm:$0xff]
        %v2748 = vld [vmem:[%s2732 + $0x78] sm:$0xff]
        %v2749 = vld [vmem:[%s2732 + $0x80] sm:$0xff]
        %v2750 = vld [vmem:[%s2732 + $0x88] sm:$0xff]
        %v2751 = vld [vmem:[%s2732 + $0x90] sm:$0xff]
        %v2752 = vld [vmem:[%s2732 + $0x98] sm:$0xff]
        %v2753 = vld [vmem:[%s2732 + $0xa0] sm:$0xff]
        %v2754 = vld [vmem:[%s2732 + $0xa8] sm:$0xff]
        %v2755 = vld [vmem:[%s2732 + $0xb0] sm:$0xff]
        %v2756 = vld [vmem:[%s2732 + $0xb8] sm:$0xff]
        %v2757 = vld [vmem:[%s2732 + $0xc0] sm:$0xff]
        %v2758 = vld [vmem:[%s2732 + $0xc8] sm:$0xff]
        %v2759 = vld [vmem:[%s2732 + $0xd0] sm:$0xff]
        %v2760 = vld [vmem:[%s2732 + $0xd8] sm:$0xff]
        %v2761 = vld [vmem:[%s2732 + $0xe0] sm:$0xff]
        %v2762 = vld [vmem:[%s2732 + $0xe8] sm:$0xff]
        %v2763 = vld [vmem:[%s2732 + $0xf0] sm:$0xff]
        %v2764 = vld [vmem:[%s2732 + $0xf8] sm:$0xff]
        %v2773 = vsel %vm1100, %v2701, %v2689
        %v2774 = vsel %vm1102, %v2713, %v2773
        %v2775 = vsel %vm1104, %v2725, %v2774
        %v2776 = vsel %vm1100, %v2707, %v2695
        %v2777 = vsel %vm1102, %v2719, %v2776
        %v2778 = vsel %vm1104, %v2731, %v2777
        %2781 = vmatprep.subr.mxu0 0.0
        %2782 = vmatpush1.msra.mxu0 %v2733
        %2783 = vmatprep.subr.mxu0 0.0
        %2784 = vmatpush1.msra.mxu0 %v2734
        %2785 = vmatprep.subr.mxu0 0.0
        %2786 = vmatpush1.msra.mxu0 %v2735
        %2787 = vmatprep.subr.mxu0 0.0
        %2788 = vmatpush1.msra.mxu0 %v2736
        %2789 = vmatprep.subr.mxu0 0.0
        %2790 = vmatpush1.msra.mxu0 %v2737
        %2791 = vmatprep.subr.mxu0 0.0
        %2792 = vmatpush1.msra.mxu0 %v2738
        %2793 = vmatprep.subr.mxu0 0.0
        %2794 = vmatpush1.msra.mxu0 %v2739
        %2795 = vmatprep.subr.mxu0 0.0
        %2796 = vmatpush1.msra.mxu0 %v2740
        %2797 = vmatprep.subr.mxu0 0.0
        %2798 = vmatpush1.msra.mxu0 %v2741
        %2799 = vmatprep.subr.mxu0 0.0
        %2800 = vmatpush1.msra.mxu0 %v2742
        %2801 = vmatprep.subr.mxu0 0.0
        %2802 = vmatpush1.msra.mxu0 %v2743
        %2803 = vmatprep.subr.mxu0 0.0
        %2804 = vmatpush1.msra.mxu0 %v2744
        %2805 = vmatprep.subr.mxu0 0.0
        %2806 = vmatpush1.msra.mxu0 %v2745
        %2807 = vmatprep.subr.mxu0 0.0
        %2808 = vmatpush1.msra.mxu0 %v2746
        %2809 = vmatprep.subr.mxu0 0.0
        %2810 = vmatpush1.msra.mxu0 %v2747
        %2811 = vmatprep.subr.mxu0 0.0
        %2812 = vmatpush1.msra.mxu0 %v2748
        %2813 = vmatprep.subr.mxu0 0.0
        %2814 = vmatpush1.msra.mxu0 %v2749
        %2815 = vmatprep.subr.mxu0 0.0
        %2816 = vmatpush1.msra.mxu0 %v2750
        %2817 = vmatprep.subr.mxu0 0.0
        %2818 = vmatpush1.msra.mxu0 %v2751
        %2819 = vmatprep.subr.mxu0 0.0
        %2820 = vmatpush1.msra.mxu0 %v2752
        %2821 = vmatprep.subr.mxu0 0.0
        %2822 = vmatpush1.msra.mxu0 %v2753
        %2823 = vmatprep.subr.mxu0 0.0
        %2824 = vmatpush1.msra.mxu0 %v2754
        %2825 = vmatprep.subr.mxu0 0.0
        %2826 = vmatpush1.msra.mxu0 %v2755
        %2827 = vmatprep.subr.mxu0 0.0
        %2828 = vmatpush1.msra.mxu0 %v2756
        %2829 = vmatprep.subr.mxu0 0.0
        %2830 = vmatpush1.msra.mxu0 %v2757
        %2831 = vmatprep.subr.mxu0 0.0
        %2832 = vmatpush1.msra.mxu0 %v2758
        %2833 = vmatprep.subr.mxu0 0.0
        %2834 = vmatpush1.msra.mxu0 %v2759
        %2835 = vmatprep.subr.mxu0 0.0
        %2836 = vmatpush1.msra.mxu0 %v2760
        %2837 = vmatprep.subr.mxu0 0.0
        %2838 = vmatpush1.msra.mxu0 %v2761
        %2839 = vmatprep.subr.mxu0 0.0
        %2840 = vmatpush1.msra.mxu0 %v2762
        %2841 = vmatprep.subr.mxu0 0.0
        %2842 = vmatpush1.msra.mxu0 %v2763
        %2843 = vmatprep.subr.mxu0 0.0
        %2844 = vmatpush1.msra.mxu0 %v2764
        %2845 = vmatprep.mubr.f32.mxu0 %v2778
        %2846 = vmatmul.mubr.f32.gmra.mrb[0].mxu0 %v2775
        %v2847 = vpop.f32.mrb[0].mxu0
        %v2848 = vadd.f32 0.0, %v2847
        %v2849 = vpop.f32.mrb[0].mxu0
        %2850 = vdwg.mxu0
        %v2851 = vadd.f32 %v2673, %v2848
        %v2852 = vadd.f32 %v2153, %v2851
        %v2853 = vld [vmem:[%s12] sm:$0x1]
        %v2855 = vlaneseq
        %v2856 = vshrl.u32 %v2855, 7
        %v2857 = vsub.s32 0, %v2856
        %v2858 = vrot.slane %v2853, %v2857
        %v2860 = vadd.f32 %v2852, %v2858
        %v2861 = vmax.f32 %v2860, 0.0
        %v2862 = vld [vmem:[%s13] sm:$0xff]
        %v2863 = vld [vmem:[%s13 + $0x8] sm:$0xff]
        %v2864 = vld [vmem:[%s13 + $0x10] sm:$0xff]
        %v2865 = vld [vmem:[%s13 + $0x18] sm:$0xff]
        %v2866 = vld [vmem:[%s13 + $0x20] sm:$0xff]
        %v2867 = vld [vmem:[%s13 + $0x28] sm:$0xff]
        %v2868 = vld [vmem:[%s13 + $0x30] sm:$0xff]
        %v2869 = vld [vmem:[%s13 + $0x38] sm:$0xff]
        %v2870 = vld [vmem:[%s13 + $0x40] sm:$0xff]
        %v2871 = vld [vmem:[%s13 + $0x48] sm:$0xff]
        %v2872 = vld [vmem:[%s13 + $0x50] sm:$0xff]
        %v2873 = vld [vmem:[%s13 + $0x58] sm:$0xff]
        %v2874 = vld [vmem:[%s13 + $0x60] sm:$0xff]
        %v2875 = vld [vmem:[%s13 + $0x68] sm:$0xff]
        %v2876 = vld [vmem:[%s13 + $0x70] sm:$0xff]
        %v2877 = vld [vmem:[%s13 + $0x78] sm:$0xff]
        %v2878 = vld [vmem:[%s14] sm:$0x1]
        %v2880 = vlaneseq
        %v2881 = vshrl.u32 %v2880, 7
        %v2882 = vsub.s32 0, %v2881
        %v2883 = vrot.slane %v2878, %v2882
        %2885 = vmatprep.subr.mxu0 0.0
        %2886 = vmatpush1.msra.mxu0 %v2862
        %2887 = vmatprep.subr.mxu0 0.0
        %2888 = vmatpush1.msra.mxu0 %v2863
        %2889 = vmatprep.subr.mxu0 0.0
        %2890 = vmatpush1.msra.mxu0 %v2864
        %2891 = vmatprep.subr.mxu0 0.0
        %2892 = vmatpush1.msra.mxu0 %v2865
        %2893 = vmatprep.subr.mxu0 0.0
        %2894 = vmatpush1.msra.mxu0 %v2866
        %2895 = vmatprep.subr.mxu0 0.0
        %2896 = vmatpush1.msra.mxu0 %v2867
        %2897 = vmatprep.subr.mxu0 0.0
        %2898 = vmatpush1.msra.mxu0 %v2868
        %2899 = vmatprep.subr.mxu0 0.0
        %2900 = vmatpush1.msra.mxu0 %v2869
        %2901 = vmatprep.subr.mxu0 0.0
        %2902 = vmatpush1.msra.mxu0 %v2870
        %2903 = vmatprep.subr.mxu0 0.0
        %2904 = vmatpush1.msra.mxu0 %v2871
        %2905 = vmatprep.subr.mxu0 0.0
        %2906 = vmatpush1.msra.mxu0 %v2872
        %2907 = vmatprep.subr.mxu0 0.0
        %2908 = vmatpush1.msra.mxu0 %v2873
        %2909 = vmatprep.subr.mxu0 0.0
        %2910 = vmatpush1.msra.mxu0 %v2874
        %2911 = vmatprep.subr.mxu0 0.0
        %2912 = vmatpush1.msra.mxu0 %v2875
        %2913 = vmatprep.subr.mxu0 0.0
        %2914 = vmatpush1.msra.mxu0 %v2876
        %2915 = vmatprep.subr.mxu0 0.0
        %2916 = vmatpush1.msra.mxu0 %v2877
        %2917 = vmatprep.subr.mxu0 0.0
        %2918 = vmatpush1.msra.mxu0 0.0
        %2919 = vmatprep.subr.mxu0 0.0
        %2920 = vmatpush1.msra.mxu0 0.0
        %2921 = vmatprep.subr.mxu0 0.0
        %2922 = vmatpush1.msra.mxu0 0.0
        %2923 = vmatprep.subr.mxu0 0.0
        %2924 = vmatpush1.msra.mxu0 0.0
        %2925 = vmatprep.subr.mxu0 0.0
        %2926 = vmatpush1.msra.mxu0 0.0
        %2927 = vmatprep.subr.mxu0 0.0
        %2928 = vmatpush1.msra.mxu0 0.0
        %2929 = vmatprep.subr.mxu0 0.0
        %2930 = vmatpush1.msra.mxu0 0.0
        %2931 = vmatprep.subr.mxu0 0.0
        %2932 = vmatpush1.msra.mxu0 0.0
        %2933 = vmatprep.subr.mxu0 0.0
        %2934 = vmatpush1.msra.mxu0 0.0
        %2935 = vmatprep.subr.mxu0 0.0
        %2936 = vmatpush1.msra.mxu0 0.0
        %2937 = vmatprep.subr.mxu0 0.0
        %2938 = vmatpush1.msra.mxu0 0.0
        %2939 = vmatprep.subr.mxu0 0.0
        %2940 = vmatpush1.msra.mxu0 0.0
        %2941 = vmatprep.subr.mxu0 0.0
        %2942 = vmatpush1.msra.mxu0 0.0
        %2943 = vmatprep.subr.mxu0 0.0
        %2944 = vmatpush1.msra.mxu0 0.0
        %2945 = vmatprep.subr.mxu0 0.0
        %2946 = vmatpush1.msra.mxu0 0.0
        %2947 = vmatprep.subr.mxu0 0.0
        %2948 = vmatpush1.msra.mxu0 0.0
        %2949 = vmatprep.mubr.f32.mxu0 0.0
        %2950 = vmatmul.mubr.f32.gmra.mrb[0].mxu0 %v2861
        %v2951 = vpop.f32.mrb[0].mxu0
        %v2952 = vadd.f32 %v2883, %v2951
        %v2953 = vpop.f32.mrb[0].mxu0
        %2954 = vdwg.mxu0
        %v2955 = vmax.f32 %v2952, 0.0
        %2956 = vst [vmem:[%s570] sm:$0xf] %v2955
        %s2957 = sand.u32 %s369, 1
        %s2958 = scalar_lea.sflag [#allocation4], %s2957
        %s2959 = sand.u32 %s369, 1
        %s2960 = smul.addr %s2959, 4
        %s2961 = scalar_lea.vmem [#allocation8], %s2960
        // Predicated region
        $region93: #{tpu_custom_call.1} parent=79 // pred_check
          %p2962 = pneg %p379
        $region94: #{tpu_custom_call.1} parent=79 // pred_check_branch
          %2964 = sbr.rel (%p2962) target = $region96
        $region95: #{tpu_custom_call.1} parent=79 // pred_region
          %s2966 = ssub.s32 64, 64
          %2967 = vsyncadd %s2958, %s2966
          %s2968 = smul.addr %s31, 64
          %s2969 = scalar_lea.hbm %s15, %s2968
          %s2971 = sshll.u32 %s2961, 4
          %s2972 = int_to_ptr.vmem [resolvable:$true] %s2971
          %2974 = dma.vmem_to_hbm [thread:$0]  %s2972, 64, %s2969, %s2958
        $region96: #{tpu_custom_call.1} parent=79 // pred_fallthru
          _
      $region80: #{tpu_custom_call.1} parent=5 // pred_fallthru
        _
      %p2975 = scmp.le.s32.totalorder 2, %s26
      // Predicated region
      $region97: #{tpu_custom_call.1} parent=5 // pred_check
        %p2976 = pneg %p2975
      $region98: #{tpu_custom_call.1} parent=5 // pred_check_branch
        %2978 = sbr.rel (%p2976) target = $region100
      $region99: #{tpu_custom_call.1} parent=5 // pred_region
        %s2979 = ssub.s32 %s26, 2
        // Predicated region
        $region101: #{tpu_custom_call.1} parent=99 // pred_check
          %p2980 = pneg %p385
        $region102: #{tpu_custom_call.1} parent=99 // pred_check_branch
          %2982 = sbr.rel (%p2980) target = $region104
        $region103: #{tpu_custom_call.1} parent=99 // pred_region
          %s2983 = sand.u32 %s370, 1
          %s2984 = scalar_lea.sflag [#allocation4], %s2983
          %s2985 = sand.u32 %s370, 1
          %s2986 = smul.addr %s2985, 4
          %s2987 = scalar_lea.vmem [#allocation8], %s2986
          %2988 = dma.done %s2984, 64
        $region104: #{tpu_custom_call.1} parent=99 // pred_fallthru
          _
      $region100: #{tpu_custom_call.1} parent=5 // pred_fallthru
        _
    $region6: #{tpu_custom_call.1} parent=1 // loop_footer
      %s30 = sadd.s32 1, %s26
    $region7: #{tpu_custom_call.1} parent=1 // loop_footer_branch
      %25 = sbr.rel target = $region3
    $region8: #{tpu_custom_call.1} parent=1 // loop_exit
      _
    %2989 = vsyncpa [#allocation3], 1
    %s2990 = scalar_lea.sflag [#allocation3], 1
    %2991 = vsyncpa %s2990, 1
    %2992 = vsyncpa [#allocation6], 1
    %2993 = vsyncpa [#allocation4], 1
    %s2994 = scalar_lea.sflag [#allocation4], 1
    %2995 = vsyncpa %s2994, 1

</llo_original>
